<compile_context>
chip_gen: v7x
topology: tpu7x:2x2x1
jax: 0.10.0
libtpu: 0.0.40
codegen_flags: <defaults>
</compile_context>

<pallas_src>
import functools

import jax
import jax.numpy as jnp
from jax.experimental import pallas as pl
from jax.experimental.pallas import tpu as pltpu

OUTPUT_SIZES = (1, 4, 8, 12)


def _adaptive_bounds(i, in_size, out_size):
    """PyTorch AdaptiveMaxPool window: [floor(i*in/out), ceil((i+1)*in/out))."""
    start = (i * in_size) // out_size
    end = -((-(i + 1) * in_size) // out_size)  # ceil division
    return start, end


def _cdiv(a, b):
    return -(-a // b)


def _round_up(a, m):
    return _cdiv(a, m) * m


def _pick_bc_tile(BC, max_tile=512):
    """Lane-dense tile (multiple of 128); prefer an even grid for megacore."""
    if BC <= 128:
        return 128
    k = 2
    while _round_up(_cdiv(BC, k), 128) > max_tile:
        k += 2
    return _round_up(_cdiv(BC, k), 128)


def _spp_kernel(x_ref, o_ref, *, H, W, output_sizes):
    # x_ref: (bc_tile, H*W)  -- HBM-native layout of the tile.
    # o_ref: (L, bc_tile)    -- pyramid cells on sublanes, B*C on lanes.
    x = x_ref[...]
    if x.dtype != jnp.float32:
        x = x.astype(jnp.float32)  # v5e has no bf16 VPU path; upcast once per tile
    bc = x.shape[0]

    # In-kernel transpose (XLU) so B*C occupies the 128-wide lane dimension.
    xt = jnp.transpose(x, (1, 0))          # (H*W, bc)
    x3 = xt.reshape(H, W, bc)              # H -> leading, W -> sublanes, bc -> lanes

    level_slabs = []
    for S in output_sizes:
        # ---- row (H) pooling: pure full-lane-width VPU maxima ----------------
        row_maxes = []
        for i in range(S):
            r0, r1 = _adaptive_bounds(i, H, S)
            rm = x3[r0]
            for r in range(r0 + 1, r1):
                rm = jnp.maximum(rm, x3[r])                    # (W, bc)
            row_maxes.append(rm)

        # ---- column (W) pooling: explicit window slices (NaN-safe, no mask) --
        cells = []
        for rm in row_maxes:
            for j in range(S):
                c0, c1 = _adaptive_bounds(j, W, S)
                if c1 - c0 == 1:
                    cells.append(rm[c0:c1, :])                 # (1, bc)
                else:
                    cells.append(jnp.max(rm[c0:c1, :], axis=0, keepdims=True))
        level_slabs.append(jnp.concatenate(cells, axis=0))     # (S*S, bc)

    # Single lane-dense store of all levels (offsets 0 / 1 / 17 / 81 on sublanes).
    o_ref[...] = jnp.concatenate(level_slabs, axis=0).astype(o_ref.dtype)


def spatial_pyramid_pooling(x, output_sizes=OUTPUT_SIZES, bc_tile=None):
    """x: (B, C, H, W) float -> (B, C, sum(S*S for S in output_sizes))."""
    B, C, H, W = x.shape
    BC = B * C
    L = sum(s * s for s in output_sizes)

    if bc_tile is None:
        bc_tile = _pick_bc_tile(BC)
    else:
        bc_tile = max(128, _round_up(bc_tile, 128))

    BC_pad = _round_up(BC, bc_tile)
    x2 = x.reshape(BC, H * W)              # keep HBM layout; transpose happens in-kernel
    if BC_pad != BC:
        x2 = jnp.pad(x2, ((0, BC_pad - BC), (0, 0)))

    kernel = functools.partial(
        _spp_kernel, H=H, W=W, output_sizes=tuple(output_sizes)
    )
    out = pl.pallas_call(
        kernel,
        out_shape=jax.ShapeDtypeStruct((L, BC_pad), x.dtype),
        grid=(BC_pad // bc_tile,),
        in_specs=[pl.BlockSpec((bc_tile, H * W), lambda i: (i, 0))],
        out_specs=pl.BlockSpec((L, bc_tile), lambda i: (0, i)),
        compiler_params=pltpu.CompilerParams(
            dimension_semantics=("parallel",),
            vmem_limit_bytes=32 * 1024 * 1024,
        ),
    )(x2)
    return out[:, :BC].T.reshape(B, C, L)


def _reference_spp(x, output_sizes=OUTPUT_SIZES):
    """Plain-JAX reference (same adaptive-window formula as PyTorch)."""
    B, C, H, W = x.shape
    outs = []
    for S in output_sizes:
        cells = []
        for i in range(S):
            r0, r1 = _adaptive_bounds(i, H, S)
            for j in range(S):
                c0, c1 = _adaptive_bounds(j, W, S)
                cells.append(jnp.max(x[:, :, r0:r1, c0:c1], axis=(2, 3)))
        outs.append(jnp.stack(cells, axis=2))  # (B, C, S*S)
    return jnp.concatenate(outs, axis=2)


if __name__ == "__main__":
    key = jax.random.PRNGKey(0)

    # Small case (matches the module's implied shapes).
    x = jax.random.normal(key, (2, 4, 16, 16), dtype=jnp.float32)
    out = jax.block_until_ready(spatial_pyramid_pooling(x))
    assert out.shape == (2, 4, 225), out.shape
    ref = _reference_spp(x)
    assert jnp.allclose(out, ref), "Pallas SPP output mismatch vs reference"

    # Larger case exercising the padded, multi-step (megacore-split) grid path.
    x2 = jax.random.normal(jax.random.PRNGKey(1), (3, 100, 16, 16), dtype=jnp.float32)
    out2 = jax.block_until_ready(spatial_pyramid_pooling(x2))
    assert out2.shape == (3, 100, 225), out2.shape
    assert jnp.allclose(out2, _reference_spp(x2)), "Pallas SPP mismatch (padded path)"

    print("KERNEL_OK")
</pallas_src>

<mosaic_0001>
module attributes {stable_mosaic.version = 11 : i64} {
  func.func @_spp_kernel(%arg0: i32, %arg1: memref<128x256xf32, #tpu.memory_space<vmem>>, %arg2: memref<225x128xf32, #tpu.memory_space<vmem>>) attributes {dimension_semantics = [#tpu.dimension_semantics<parallel>], iteration_bounds = array<i64: 1>, scalar_prefetch = 0 : i64, scratch_operands = 0 : i64, tpu.core_type = #tpu.core_type<tc>, window_params = [{transform_indices = @transform_0, window_bounds = array<i64: 128, 256>}, {transform_indices = @transform_1, window_bounds = array<i64: 225, 128>}]} {
    %c0 = arith.constant 0 : index
    %c0_0 = arith.constant 0 : index
    %0 = vector.load %arg1[%c0, %c0_0] : memref<128x256xf32, #tpu.memory_space<vmem>>, vector<128x256xf32>
    %1 = tpu.transpose %0, [1, 0] : vector<128x256xf32> -> vector<256x128xf32>
    %2 = vector.shape_cast %1 : vector<256x128xf32> to vector<16x16x128xf32>
    %3 = vector.extract_strided_slice %2 {offsets = [0, 0, 0], sizes = [1, 16, 128], strides = [1, 1, 1]} : vector<16x16x128xf32> to vector<1x16x128xf32>
    %4 = vector.shape_cast %3 : vector<1x16x128xf32> to vector<16x128xf32>
    %5 = vector.extract_strided_slice %2 {offsets = [1, 0, 0], sizes = [1, 16, 128], strides = [1, 1, 1]} : vector<16x16x128xf32> to vector<1x16x128xf32>
    %6 = vector.shape_cast %5 : vector<1x16x128xf32> to vector<16x128xf32>
    %7 = arith.maximumf %4, %6 : vector<16x128xf32>
    %8 = vector.extract_strided_slice %2 {offsets = [2, 0, 0], sizes = [1, 16, 128], strides = [1, 1, 1]} : vector<16x16x128xf32> to vector<1x16x128xf32>
    %9 = vector.shape_cast %8 : vector<1x16x128xf32> to vector<16x128xf32>
    %10 = arith.maximumf %7, %9 : vector<16x128xf32>
    %11 = vector.extract_strided_slice %2 {offsets = [3, 0, 0], sizes = [1, 16, 128], strides = [1, 1, 1]} : vector<16x16x128xf32> to vector<1x16x128xf32>
    %12 = vector.shape_cast %11 : vector<1x16x128xf32> to vector<16x128xf32>
    %13 = arith.maximumf %10, %12 : vector<16x128xf32>
    %14 = vector.extract_strided_slice %2 {offsets = [4, 0, 0], sizes = [1, 16, 128], strides = [1, 1, 1]} : vector<16x16x128xf32> to vector<1x16x128xf32>
    %15 = vector.shape_cast %14 : vector<1x16x128xf32> to vector<16x128xf32>
    %16 = arith.maximumf %13, %15 : vector<16x128xf32>
    %17 = vector.extract_strided_slice %2 {offsets = [5, 0, 0], sizes = [1, 16, 128], strides = [1, 1, 1]} : vector<16x16x128xf32> to vector<1x16x128xf32>
    %18 = vector.shape_cast %17 : vector<1x16x128xf32> to vector<16x128xf32>
    %19 = arith.maximumf %16, %18 : vector<16x128xf32>
    %20 = vector.extract_strided_slice %2 {offsets = [6, 0, 0], sizes = [1, 16, 128], strides = [1, 1, 1]} : vector<16x16x128xf32> to vector<1x16x128xf32>
    %21 = vector.shape_cast %20 : vector<1x16x128xf32> to vector<16x128xf32>
    %22 = arith.maximumf %19, %21 : vector<16x128xf32>
    %23 = vector.extract_strided_slice %2 {offsets = [7, 0, 0], sizes = [1, 16, 128], strides = [1, 1, 1]} : vector<16x16x128xf32> to vector<1x16x128xf32>
    %24 = vector.shape_cast %23 : vector<1x16x128xf32> to vector<16x128xf32>
    %25 = arith.maximumf %22, %24 : vector<16x128xf32>
    %26 = vector.extract_strided_slice %2 {offsets = [8, 0, 0], sizes = [1, 16, 128], strides = [1, 1, 1]} : vector<16x16x128xf32> to vector<1x16x128xf32>
    %27 = vector.shape_cast %26 : vector<1x16x128xf32> to vector<16x128xf32>
    %28 = arith.maximumf %25, %27 : vector<16x128xf32>
    %29 = vector.extract_strided_slice %2 {offsets = [9, 0, 0], sizes = [1, 16, 128], strides = [1, 1, 1]} : vector<16x16x128xf32> to vector<1x16x128xf32>
    %30 = vector.shape_cast %29 : vector<1x16x128xf32> to vector<16x128xf32>
    %31 = arith.maximumf %28, %30 : vector<16x128xf32>
    %32 = vector.extract_strided_slice %2 {offsets = [10, 0, 0], sizes = [1, 16, 128], strides = [1, 1, 1]} : vector<16x16x128xf32> to vector<1x16x128xf32>
    %33 = vector.shape_cast %32 : vector<1x16x128xf32> to vector<16x128xf32>
    %34 = arith.maximumf %31, %33 : vector<16x128xf32>
    %35 = vector.extract_strided_slice %2 {offsets = [11, 0, 0], sizes = [1, 16, 128], strides = [1, 1, 1]} : vector<16x16x128xf32> to vector<1x16x128xf32>
    %36 = vector.shape_cast %35 : vector<1x16x128xf32> to vector<16x128xf32>
    %37 = arith.maximumf %34, %36 : vector<16x128xf32>
    %38 = vector.extract_strided_slice %2 {offsets = [12, 0, 0], sizes = [1, 16, 128], strides = [1, 1, 1]} : vector<16x16x128xf32> to vector<1x16x128xf32>
    %39 = vector.shape_cast %38 : vector<1x16x128xf32> to vector<16x128xf32>
    %40 = arith.maximumf %37, %39 : vector<16x128xf32>
    %41 = vector.extract_strided_slice %2 {offsets = [13, 0, 0], sizes = [1, 16, 128], strides = [1, 1, 1]} : vector<16x16x128xf32> to vector<1x16x128xf32>
    %42 = vector.shape_cast %41 : vector<1x16x128xf32> to vector<16x128xf32>
    %43 = arith.maximumf %40, %42 : vector<16x128xf32>
    %44 = vector.extract_strided_slice %2 {offsets = [14, 0, 0], sizes = [1, 16, 128], strides = [1, 1, 1]} : vector<16x16x128xf32> to vector<1x16x128xf32>
    %45 = vector.shape_cast %44 : vector<1x16x128xf32> to vector<16x128xf32>
    %46 = arith.maximumf %43, %45 : vector<16x128xf32>
    %47 = vector.extract_strided_slice %2 {offsets = [15, 0, 0], sizes = [1, 16, 128], strides = [1, 1, 1]} : vector<16x16x128xf32> to vector<1x16x128xf32>
    %48 = vector.shape_cast %47 : vector<1x16x128xf32> to vector<16x128xf32>
    %49 = arith.maximumf %46, %48 : vector<16x128xf32>
    %cst = arith.constant dense<0xFF800000> : vector<128xf32>
    %50 = vector.multi_reduction <maximumf>, %49, %cst [0] : vector<16x128xf32> to vector<128xf32>
    %51 = vector.shape_cast %50 : vector<128xf32> to vector<1x128xf32>
    %52 = vector.extract_strided_slice %2 {offsets = [0, 0, 0], sizes = [1, 16, 128], strides = [1, 1, 1]} : vector<16x16x128xf32> to vector<1x16x128xf32>
    %53 = vector.shape_cast %52 : vector<1x16x128xf32> to vector<16x128xf32>
    %54 = vector.extract_strided_slice %2 {offsets = [1, 0, 0], sizes = [1, 16, 128], strides = [1, 1, 1]} : vector<16x16x128xf32> to vector<1x16x128xf32>
    %55 = vector.shape_cast %54 : vector<1x16x128xf32> to vector<16x128xf32>
    %56 = arith.maximumf %53, %55 : vector<16x128xf32>
    %57 = vector.extract_strided_slice %2 {offsets = [2, 0, 0], sizes = [1, 16, 128], strides = [1, 1, 1]} : vector<16x16x128xf32> to vector<1x16x128xf32>
    %58 = vector.shape_cast %57 : vector<1x16x128xf32> to vector<16x128xf32>
    %59 = arith.maximumf %56, %58 : vector<16x128xf32>
    %60 = vector.extract_strided_slice %2 {offsets = [3, 0, 0], sizes = [1, 16, 128], strides = [1, 1, 1]} : vector<16x16x128xf32> to vector<1x16x128xf32>
    %61 = vector.shape_cast %60 : vector<1x16x128xf32> to vector<16x128xf32>
    %62 = arith.maximumf %59, %61 : vector<16x128xf32>
    %63 = vector.extract_strided_slice %2 {offsets = [4, 0, 0], sizes = [1, 16, 128], strides = [1, 1, 1]} : vector<16x16x128xf32> to vector<1x16x128xf32>
    %64 = vector.shape_cast %63 : vector<1x16x128xf32> to vector<16x128xf32>
    %65 = vector.extract_strided_slice %2 {offsets = [5, 0, 0], sizes = [1, 16, 128], strides = [1, 1, 1]} : vector<16x16x128xf32> to vector<1x16x128xf32>
    %66 = vector.shape_cast %65 : vector<1x16x128xf32> to vector<16x128xf32>
    %67 = arith.maximumf %64, %66 : vector<16x128xf32>
    %68 = vector.extract_strided_slice %2 {offsets = [6, 0, 0], sizes = [1, 16, 128], strides = [1, 1, 1]} : vector<16x16x128xf32> to vector<1x16x128xf32>
    %69 = vector.shape_cast %68 : vector<1x16x128xf32> to vector<16x128xf32>
    %70 = arith.maximumf %67, %69 : vector<16x128xf32>
    %71 = vector.extract_strided_slice %2 {offsets = [7, 0, 0], sizes = [1, 16, 128], strides = [1, 1, 1]} : vector<16x16x128xf32> to vector<1x16x128xf32>
    %72 = vector.shape_cast %71 : vector<1x16x128xf32> to vector<16x128xf32>
    %73 = arith.maximumf %70, %72 : vector<16x128xf32>
    %74 = vector.extract_strided_slice %2 {offsets = [8, 0, 0], sizes = [1, 16, 128], strides = [1, 1, 1]} : vector<16x16x128xf32> to vector<1x16x128xf32>
    %75 = vector.shape_cast %74 : vector<1x16x128xf32> to vector<16x128xf32>
    %76 = vector.extract_strided_slice %2 {offsets = [9, 0, 0], sizes = [1, 16, 128], strides = [1, 1, 1]} : vector<16x16x128xf32> to vector<1x16x128xf32>
    %77 = vector.shape_cast %76 : vector<1x16x128xf32> to vector<16x128xf32>
    %78 = arith.maximumf %75, %77 : vector<16x128xf32>
    %79 = vector.extract_strided_slice %2 {offsets = [10, 0, 0], sizes = [1, 16, 128], strides = [1, 1, 1]} : vector<16x16x128xf32> to vector<1x16x128xf32>
    %80 = vector.shape_cast %79 : vector<1x16x128xf32> to vector<16x128xf32>
    %81 = arith.maximumf %78, %80 : vector<16x128xf32>
    %82 = vector.extract_strided_slice %2 {offsets = [11, 0, 0], sizes = [1, 16, 128], strides = [1, 1, 1]} : vector<16x16x128xf32> to vector<1x16x128xf32>
    %83 = vector.shape_cast %82 : vector<1x16x128xf32> to vector<16x128xf32>
    %84 = arith.maximumf %81, %83 : vector<16x128xf32>
    %85 = vector.extract_strided_slice %2 {offsets = [12, 0, 0], sizes = [1, 16, 128], strides = [1, 1, 1]} : vector<16x16x128xf32> to vector<1x16x128xf32>
    %86 = vector.shape_cast %85 : vector<1x16x128xf32> to vector<16x128xf32>
    %87 = vector.extract_strided_slice %2 {offsets = [13, 0, 0], sizes = [1, 16, 128], strides = [1, 1, 1]} : vector<16x16x128xf32> to vector<1x16x128xf32>
    %88 = vector.shape_cast %87 : vector<1x16x128xf32> to vector<16x128xf32>
    %89 = arith.maximumf %86, %88 : vector<16x128xf32>
    %90 = vector.extract_strided_slice %2 {offsets = [14, 0, 0], sizes = [1, 16, 128], strides = [1, 1, 1]} : vector<16x16x128xf32> to vector<1x16x128xf32>
    %91 = vector.shape_cast %90 : vector<1x16x128xf32> to vector<16x128xf32>
    %92 = arith.maximumf %89, %91 : vector<16x128xf32>
    %93 = vector.extract_strided_slice %2 {offsets = [15, 0, 0], sizes = [1, 16, 128], strides = [1, 1, 1]} : vector<16x16x128xf32> to vector<1x16x128xf32>
    %94 = vector.shape_cast %93 : vector<1x16x128xf32> to vector<16x128xf32>
    %95 = arith.maximumf %92, %94 : vector<16x128xf32>
    %96 = vector.extract_strided_slice %62 {offsets = [0, 0], sizes = [4, 128], strides = [1, 1]} : vector<16x128xf32> to vector<4x128xf32>
    %cst_1 = arith.constant dense<0xFF800000> : vector<128xf32>
    %97 = vector.multi_reduction <maximumf>, %96, %cst_1 [0] : vector<4x128xf32> to vector<128xf32>
    %98 = vector.shape_cast %97 : vector<128xf32> to vector<1x128xf32>
    %99 = vector.extract_strided_slice %62 {offsets = [4, 0], sizes = [4, 128], strides = [1, 1]} : vector<16x128xf32> to vector<4x128xf32>
    %cst_2 = arith.constant dense<0xFF800000> : vector<128xf32>
    %100 = vector.multi_reduction <maximumf>, %99, %cst_2 [0] : vector<4x128xf32> to vector<128xf32>
    %101 = vector.shape_cast %100 : vector<128xf32> to vector<1x128xf32>
    %102 = vector.extract_strided_slice %62 {offsets = [8, 0], sizes = [4, 128], strides = [1, 1]} : vector<16x128xf32> to vector<4x128xf32>
    %cst_3 = arith.constant dense<0xFF800000> : vector<128xf32>
    %103 = vector.multi_reduction <maximumf>, %102, %cst_3 [0] : vector<4x128xf32> to vector<128xf32>
    %104 = vector.shape_cast %103 : vector<128xf32> to vector<1x128xf32>
    %105 = vector.extract_strided_slice %62 {offsets = [12, 0], sizes = [4, 128], strides = [1, 1]} : vector<16x128xf32> to vector<4x128xf32>
    %cst_4 = arith.constant dense<0xFF800000> : vector<128xf32>
    %106 = vector.multi_reduction <maximumf>, %105, %cst_4 [0] : vector<4x128xf32> to vector<128xf32>
    %107 = vector.shape_cast %106 : vector<128xf32> to vector<1x128xf32>
    %108 = vector.extract_strided_slice %73 {offsets = [0, 0], sizes = [4, 128], strides = [1, 1]} : vector<16x128xf32> to vector<4x128xf32>
    %cst_5 = arith.constant dense<0xFF800000> : vector<128xf32>
    %109 = vector.multi_reduction <maximumf>, %108, %cst_5 [0] : vector<4x128xf32> to vector<128xf32>
    %110 = vector.shape_cast %109 : vector<128xf32> to vector<1x128xf32>
    %111 = vector.extract_strided_slice %73 {offsets = [4, 0], sizes = [4, 128], strides = [1, 1]} : vector<16x128xf32> to vector<4x128xf32>
    %cst_6 = arith.constant dense<0xFF800000> : vector<128xf32>
    %112 = vector.multi_reduction <maximumf>, %111, %cst_6 [0] : vector<4x128xf32> to vector<128xf32>
    %113 = vector.shape_cast %112 : vector<128xf32> to vector<1x128xf32>
    %114 = vector.extract_strided_slice %73 {offsets = [8, 0], sizes = [4, 128], strides = [1, 1]} : vector<16x128xf32> to vector<4x128xf32>
    %cst_7 = arith.constant dense<0xFF800000> : vector<128xf32>
    %115 = vector.multi_reduction <maximumf>, %114, %cst_7 [0] : vector<4x128xf32> to vector<128xf32>
    %116 = vector.shape_cast %115 : vector<128xf32> to vector<1x128xf32>
    %117 = vector.extract_strided_slice %73 {offsets = [12, 0], sizes = [4, 128], strides = [1, 1]} : vector<16x128xf32> to vector<4x128xf32>
    %cst_8 = arith.constant dense<0xFF800000> : vector<128xf32>
    %118 = vector.multi_reduction <maximumf>, %117, %cst_8 [0] : vector<4x128xf32> to vector<128xf32>
    %119 = vector.shape_cast %118 : vector<128xf32> to vector<1x128xf32>
    %120 = vector.extract_strided_slice %84 {offsets = [0, 0], sizes = [4, 128], strides = [1, 1]} : vector<16x128xf32> to vector<4x128xf32>
    %cst_9 = arith.constant dense<0xFF800000> : vector<128xf32>
    %121 = vector.multi_reduction <maximumf>, %120, %cst_9 [0] : vector<4x128xf32> to vector<128xf32>
    %122 = vector.shape_cast %121 : vector<128xf32> to vector<1x128xf32>
    %123 = vector.extract_strided_slice %84 {offsets = [4, 0], sizes = [4, 128], strides = [1, 1]} : vector<16x128xf32> to vector<4x128xf32>
    %cst_10 = arith.constant dense<0xFF800000> : vector<128xf32>
    %124 = vector.multi_reduction <maximumf>, %123, %cst_10 [0] : vector<4x128xf32> to vector<128xf32>
    %125 = vector.shape_cast %124 : vector<128xf32> to vector<1x128xf32>
    %126 = vector.extract_strided_slice %84 {offsets = [8, 0], sizes = [4, 128], strides = [1, 1]} : vector<16x128xf32> to vector<4x128xf32>
    %cst_11 = arith.constant dense<0xFF800000> : vector<128xf32>
    %127 = vector.multi_reduction <maximumf>, %126, %cst_11 [0] : vector<4x128xf32> to vector<128xf32>
    %128 = vector.shape_cast %127 : vector<128xf32> to vector<1x128xf32>
    %129 = vector.extract_strided_slice %84 {offsets = [12, 0], sizes = [4, 128], strides = [1, 1]} : vector<16x128xf32> to vector<4x128xf32>
    %cst_12 = arith.constant dense<0xFF800000> : vector<128xf32>
    %130 = vector.multi_reduction <maximumf>, %129, %cst_12 [0] : vector<4x128xf32> to vector<128xf32>
    %131 = vector.shape_cast %130 : vector<128xf32> to vector<1x128xf32>
    %132 = vector.extract_strided_slice %95 {offsets = [0, 0], sizes = [4, 128], strides = [1, 1]} : vector<16x128xf32> to vector<4x128xf32>
    %cst_13 = arith.constant dense<0xFF800000> : vector<128xf32>
    %133 = vector.multi_reduction <maximumf>, %132, %cst_13 [0] : vector<4x128xf32> to vector<128xf32>
    %134 = vector.shape_cast %133 : vector<128xf32> to vector<1x128xf32>
    %135 = vector.extract_strided_slice %95 {offsets = [4, 0], sizes = [4, 128], strides = [1, 1]} : vector<16x128xf32> to vector<4x128xf32>
    %cst_14 = arith.constant dense<0xFF800000> : vector<128xf32>
    %136 = vector.multi_reduction <maximumf>, %135, %cst_14 [0] : vector<4x128xf32> to vector<128xf32>
    %137 = vector.shape_cast %136 : vector<128xf32> to vector<1x128xf32>
    %138 = vector.extract_strided_slice %95 {offsets = [8, 0], sizes = [4, 128], strides = [1, 1]} : vector<16x128xf32> to vector<4x128xf32>
    %cst_15 = arith.constant dense<0xFF800000> : vector<128xf32>
    %139 = vector.multi_reduction <maximumf>, %138, %cst_15 [0] : vector<4x128xf32> to vector<128xf32>
    %140 = vector.shape_cast %139 : vector<128xf32> to vector<1x128xf32>
    %141 = vector.extract_strided_slice %95 {offsets = [12, 0], sizes = [4, 128], strides = [1, 1]} : vector<16x128xf32> to vector<4x128xf32>
    %cst_16 = arith.constant dense<0xFF800000> : vector<128xf32>
    %142 = vector.multi_reduction <maximumf>, %141, %cst_16 [0] : vector<4x128xf32> to vector<128xf32>
    %143 = vector.shape_cast %142 : vector<128xf32> to vector<1x128xf32>
    %144 = tpu.concatenate %98, %101, %104, %107, %110, %113, %116, %119, %122, %125, %128, %131, %134, %137, %140, %143 in 0 : vector<1x128xf32>, vector<1x128xf32>, vector<1x128xf32>, vector<1x128xf32>, vector<1x128xf32>, vector<1x128xf32>, vector<1x128xf32>, vector<1x128xf32>, vector<1x128xf32>, vector<1x128xf32>, vector<1x128xf32>, vector<1x128xf32>, vector<1x128xf32>, vector<1x128xf32>, vector<1x128xf32>, vector<1x128xf32> -> vector<16x128xf32>
    %145 = vector.extract_strided_slice %2 {offsets = [0, 0, 0], sizes = [1, 16, 128], strides = [1, 1, 1]} : vector<16x16x128xf32> to vector<1x16x128xf32>
    %146 = vector.shape_cast %145 : vector<1x16x128xf32> to vector<16x128xf32>
    %147 = vector.extract_strided_slice %2 {offsets = [1, 0, 0], sizes = [1, 16, 128], strides = [1, 1, 1]} : vector<16x16x128xf32> to vector<1x16x128xf32>
    %148 = vector.shape_cast %147 : vector<1x16x128xf32> to vector<16x128xf32>
    %149 = arith.maximumf %146, %148 : vector<16x128xf32>
    %150 = vector.extract_strided_slice %2 {offsets = [2, 0, 0], sizes = [1, 16, 128], strides = [1, 1, 1]} : vector<16x16x128xf32> to vector<1x16x128xf32>
    %151 = vector.shape_cast %150 : vector<1x16x128xf32> to vector<16x128xf32>
    %152 = vector.extract_strided_slice %2 {offsets = [3, 0, 0], sizes = [1, 16, 128], strides = [1, 1, 1]} : vector<16x16x128xf32> to vector<1x16x128xf32>
    %153 = vector.shape_cast %152 : vector<1x16x128xf32> to vector<16x128xf32>
    %154 = arith.maximumf %151, %153 : vector<16x128xf32>
    %155 = vector.extract_strided_slice %2 {offsets = [4, 0, 0], sizes = [1, 16, 128], strides = [1, 1, 1]} : vector<16x16x128xf32> to vector<1x16x128xf32>
    %156 = vector.shape_cast %155 : vector<1x16x128xf32> to vector<16x128xf32>
    %157 = vector.extract_strided_slice %2 {offsets = [5, 0, 0], sizes = [1, 16, 128], strides = [1, 1, 1]} : vector<16x16x128xf32> to vector<1x16x128xf32>
    %158 = vector.shape_cast %157 : vector<1x16x128xf32> to vector<16x128xf32>
    %159 = arith.maximumf %156, %158 : vector<16x128xf32>
    %160 = vector.extract_strided_slice %2 {offsets = [6, 0, 0], sizes = [1, 16, 128], strides = [1, 1, 1]} : vector<16x16x128xf32> to vector<1x16x128xf32>
    %161 = vector.shape_cast %160 : vector<1x16x128xf32> to vector<16x128xf32>
    %162 = vector.extract_strided_slice %2 {offsets = [7, 0, 0], sizes = [1, 16, 128], strides = [1, 1, 1]} : vector<16x16x128xf32> to vector<1x16x128xf32>
    %163 = vector.shape_cast %162 : vector<1x16x128xf32> to vector<16x128xf32>
    %164 = arith.maximumf %161, %163 : vector<16x128xf32>
    %165 = vector.extract_strided_slice %2 {offsets = [8, 0, 0], sizes = [1, 16, 128], strides = [1, 1, 1]} : vector<16x16x128xf32> to vector<1x16x128xf32>
    %166 = vector.shape_cast %165 : vector<1x16x128xf32> to vector<16x128xf32>
    %167 = vector.extract_strided_slice %2 {offsets = [9, 0, 0], sizes = [1, 16, 128], strides = [1, 1, 1]} : vector<16x16x128xf32> to vector<1x16x128xf32>
    %168 = vector.shape_cast %167 : vector<1x16x128xf32> to vector<16x128xf32>
    %169 = arith.maximumf %166, %168 : vector<16x128xf32>
    %170 = vector.extract_strided_slice %2 {offsets = [10, 0, 0], sizes = [1, 16, 128], strides = [1, 1, 1]} : vector<16x16x128xf32> to vector<1x16x128xf32>
    %171 = vector.shape_cast %170 : vector<1x16x128xf32> to vector<16x128xf32>
    %172 = vector.extract_strided_slice %2 {offsets = [11, 0, 0], sizes = [1, 16, 128], strides = [1, 1, 1]} : vector<16x16x128xf32> to vector<1x16x128xf32>
    %173 = vector.shape_cast %172 : vector<1x16x128xf32> to vector<16x128xf32>
    %174 = arith.maximumf %171, %173 : vector<16x128xf32>
    %175 = vector.extract_strided_slice %2 {offsets = [12, 0, 0], sizes = [1, 16, 128], strides = [1, 1, 1]} : vector<16x16x128xf32> to vector<1x16x128xf32>
    %176 = vector.shape_cast %175 : vector<1x16x128xf32> to vector<16x128xf32>
    %177 = vector.extract_strided_slice %2 {offsets = [13, 0, 0], sizes = [1, 16, 128], strides = [1, 1, 1]} : vector<16x16x128xf32> to vector<1x16x128xf32>
    %178 = vector.shape_cast %177 : vector<1x16x128xf32> to vector<16x128xf32>
    %179 = arith.maximumf %176, %178 : vector<16x128xf32>
    %180 = vector.extract_strided_slice %2 {offsets = [14, 0, 0], sizes = [1, 16, 128], strides = [1, 1, 1]} : vector<16x16x128xf32> to vector<1x16x128xf32>
    %181 = vector.shape_cast %180 : vector<1x16x128xf32> to vector<16x128xf32>
    %182 = vector.extract_strided_slice %2 {offsets = [15, 0, 0], sizes = [1, 16, 128], strides = [1, 1, 1]} : vector<16x16x128xf32> to vector<1x16x128xf32>
    %183 = vector.shape_cast %182 : vector<1x16x128xf32> to vector<16x128xf32>
    %184 = arith.maximumf %181, %183 : vector<16x128xf32>
    %185 = vector.extract_strided_slice %149 {offsets = [0, 0], sizes = [2, 128], strides = [1, 1]} : vector<16x128xf32> to vector<2x128xf32>
    %cst_17 = arith.constant dense<0xFF800000> : vector<128xf32>
    %186 = vector.multi_reduction <maximumf>, %185, %cst_17 [0] : vector<2x128xf32> to vector<128xf32>
    %187 = vector.shape_cast %186 : vector<128xf32> to vector<1x128xf32>
    %188 = vector.extract_strided_slice %149 {offsets = [2, 0], sizes = [2, 128], strides = [1, 1]} : vector<16x128xf32> to vector<2x128xf32>
    %cst_18 = arith.constant dense<0xFF800000> : vector<128xf32>
    %189 = vector.multi_reduction <maximumf>, %188, %cst_18 [0] : vector<2x128xf32> to vector<128xf32>
    %190 = vector.shape_cast %189 : vector<128xf32> to vector<1x128xf32>
    %191 = vector.extract_strided_slice %149 {offsets = [4, 0], sizes = [2, 128], strides = [1, 1]} : vector<16x128xf32> to vector<2x128xf32>
    %cst_19 = arith.constant dense<0xFF800000> : vector<128xf32>
    %192 = vector.multi_reduction <maximumf>, %191, %cst_19 [0] : vector<2x128xf32> to vector<128xf32>
    %193 = vector.shape_cast %192 : vector<128xf32> to vector<1x128xf32>
    %194 = vector.extract_strided_slice %149 {offsets = [6, 0], sizes = [2, 128], strides = [1, 1]} : vector<16x128xf32> to vector<2x128xf32>
    %cst_20 = arith.constant dense<0xFF800000> : vector<128xf32>
    %195 = vector.multi_reduction <maximumf>, %194, %cst_20 [0] : vector<2x128xf32> to vector<128xf32>
    %196 = vector.shape_cast %195 : vector<128xf32> to vector<1x128xf32>
    %197 = vector.extract_strided_slice %149 {offsets = [8, 0], sizes = [2, 128], strides = [1, 1]} : vector<16x128xf32> to vector<2x128xf32>
    %cst_21 = arith.constant dense<0xFF800000> : vector<128xf32>
    %198 = vector.multi_reduction <maximumf>, %197, %cst_21 [0] : vector<2x128xf32> to vector<128xf32>
    %199 = vector.shape_cast %198 : vector<128xf32> to vector<1x128xf32>
    %200 = vector.extract_strided_slice %149 {offsets = [10, 0], sizes = [2, 128], strides = [1, 1]} : vector<16x128xf32> to vector<2x128xf32>
    %cst_22 = arith.constant dense<0xFF800000> : vector<128xf32>
    %201 = vector.multi_reduction <maximumf>, %200, %cst_22 [0] : vector<2x128xf32> to vector<128xf32>
    %202 = vector.shape_cast %201 : vector<128xf32> to vector<1x128xf32>
    %203 = vector.extract_strided_slice %149 {offsets = [12, 0], sizes = [2, 128], strides = [1, 1]} : vector<16x128xf32> to vector<2x128xf32>
    %cst_23 = arith.constant dense<0xFF800000> : vector<128xf32>
    %204 = vector.multi_reduction <maximumf>, %203, %cst_23 [0] : vector<2x128xf32> to vector<128xf32>
    %205 = vector.shape_cast %204 : vector<128xf32> to vector<1x128xf32>
    %206 = vector.extract_strided_slice %149 {offsets = [14, 0], sizes = [2, 128], strides = [1, 1]} : vector<16x128xf32> to vector<2x128xf32>
    %cst_24 = arith.constant dense<0xFF800000> : vector<128xf32>
    %207 = vector.multi_reduction <maximumf>, %206, %cst_24 [0] : vector<2x128xf32> to vector<128xf32>
    %208 = vector.shape_cast %207 : vector<128xf32> to vector<1x128xf32>
    %209 = vector.extract_strided_slice %154 {offsets = [0, 0], sizes = [2, 128], strides = [1, 1]} : vector<16x128xf32> to vector<2x128xf32>
    %cst_25 = arith.constant dense<0xFF800000> : vector<128xf32>
    %210 = vector.multi_reduction <maximumf>, %209, %cst_25 [0] : vector<2x128xf32> to vector<128xf32>
    %211 = vector.shape_cast %210 : vector<128xf32> to vector<1x128xf32>
    %212 = vector.extract_strided_slice %154 {offsets = [2, 0], sizes = [2, 128], strides = [1, 1]} : vector<16x128xf32> to vector<2x128xf32>
    %cst_26 = arith.constant dense<0xFF800000> : vector<128xf32>
    %213 = vector.multi_reduction <maximumf>, %212, %cst_26 [0] : vector<2x128xf32> to vector<128xf32>
    %214 = vector.shape_cast %213 : vector<128xf32> to vector<1x128xf32>
    %215 = vector.extract_strided_slice %154 {offsets = [4, 0], sizes = [2, 128], strides = [1, 1]} : vector<16x128xf32> to vector<2x128xf32>
    %cst_27 = arith.constant dense<0xFF800000> : vector<128xf32>
    %216 = vector.multi_reduction <maximumf>, %215, %cst_27 [0] : vector<2x128xf32> to vector<128xf32>
    %217 = vector.shape_cast %216 : vector<128xf32> to vector<1x128xf32>
    %218 = vector.extract_strided_slice %154 {offsets = [6, 0], sizes = [2, 128], strides = [1, 1]} : vector<16x128xf32> to vector<2x128xf32>
    %cst_28 = arith.constant dense<0xFF800000> : vector<128xf32>
    %219 = vector.multi_reduction <maximumf>, %218, %cst_28 [0] : vector<2x128xf32> to vector<128xf32>
    %220 = vector.shape_cast %219 : vector<128xf32> to vector<1x128xf32>
    %221 = vector.extract_strided_slice %154 {offsets = [8, 0], sizes = [2, 128], strides = [1, 1]} : vector<16x128xf32> to vector<2x128xf32>
    %cst_29 = arith.constant dense<0xFF800000> : vector<128xf32>
    %222 = vector.multi_reduction <maximumf>, %221, %cst_29 [0] : vector<2x128xf32> to vector<128xf32>
    %223 = vector.shape_cast %222 : vector<128xf32> to vector<1x128xf32>
    %224 = vector.extract_strided_slice %154 {offsets = [10, 0], sizes = [2, 128], strides = [1, 1]} : vector<16x128xf32> to vector<2x128xf32>
    %cst_30 = arith.constant dense<0xFF800000> : vector<128xf32>
    %225 = vector.multi_reduction <maximumf>, %224, %cst_30 [0] : vector<2x128xf32> to vector<128xf32>
    %226 = vector.shape_cast %225 : vector<128xf32> to vector<1x128xf32>
    %227 = vector.extract_strided_slice %154 {offsets = [12, 0], sizes = [2, 128], strides = [1, 1]} : vector<16x128xf32> to vector<2x128xf32>
    %cst_31 = arith.constant dense<0xFF800000> : vector<128xf32>
    %228 = vector.multi_reduction <maximumf>, %227, %cst_31 [0] : vector<2x128xf32> to vector<128xf32>
    %229 = vector.shape_cast %228 : vector<128xf32> to vector<1x128xf32>
    %230 = vector.extract_strided_slice %154 {offsets = [14, 0], sizes = [2, 128], strides = [1, 1]} : vector<16x128xf32> to vector<2x128xf32>
    %cst_32 = arith.constant dense<0xFF800000> : vector<128xf32>
    %231 = vector.multi_reduction <maximumf>, %230, %cst_32 [0] : vector<2x128xf32> to vector<128xf32>
    %232 = vector.shape_cast %231 : vector<128xf32> to vector<1x128xf32>
    %233 = vector.extract_strided_slice %159 {offsets = [0, 0], sizes = [2, 128], strides = [1, 1]} : vector<16x128xf32> to vector<2x128xf32>
    %cst_33 = arith.constant dense<0xFF800000> : vector<128xf32>
    %234 = vector.multi_reduction <maximumf>, %233, %cst_33 [0] : vector<2x128xf32> to vector<128xf32>
    %235 = vector.shape_cast %234 : vector<128xf32> to vector<1x128xf32>
    %236 = vector.extract_strided_slice %159 {offsets = [2, 0], sizes = [2, 128], strides = [1, 1]} : vector<16x128xf32> to vector<2x128xf32>
    %cst_34 = arith.constant dense<0xFF800000> : vector<128xf32>
    %237 = vector.multi_reduction <maximumf>, %236, %cst_34 [0] : vector<2x128xf32> to vector<128xf32>
    %238 = vector.shape_cast %237 : vector<128xf32> to vector<1x128xf32>
    %239 = vector.extract_strided_slice %159 {offsets = [4, 0], sizes = [2, 128], strides = [1, 1]} : vector<16x128xf32> to vector<2x128xf32>
    %cst_35 = arith.constant dense<0xFF800000> : vector<128xf32>
    %240 = vector.multi_reduction <maximumf>, %239, %cst_35 [0] : vector<2x128xf32> to vector<128xf32>
    %241 = vector.shape_cast %240 : vector<128xf32> to vector<1x128xf32>
    %242 = vector.extract_strided_slice %159 {offsets = [6, 0], sizes = [2, 128], strides = [1, 1]} : vector<16x128xf32> to vector<2x128xf32>
    %cst_36 = arith.constant dense<0xFF800000> : vector<128xf32>
    %243 = vector.multi_reduction <maximumf>, %242, %cst_36 [0] : vector<2x128xf32> to vector<128xf32>
    %244 = vector.shape_cast %243 : vector<128xf32> to vector<1x128xf32>
    %245 = vector.extract_strided_slice %159 {offsets = [8, 0], sizes = [2, 128], strides = [1, 1]} : vector<16x128xf32> to vector<2x128xf32>
    %cst_37 = arith.constant dense<0xFF800000> : vector<128xf32>
    %246 = vector.multi_reduction <maximumf>, %245, %cst_37 [0] : vector<2x128xf32> to vector<128xf32>
    %247 = vector.shape_cast %246 : vector<128xf32> to vector<1x128xf32>
    %248 = vector.extract_strided_slice %159 {offsets = [10, 0], sizes = [2, 128], strides = [1, 1]} : vector<16x128xf32> to vector<2x128xf32>
    %cst_38 = arith.constant dense<0xFF800000> : vector<128xf32>
    %249 = vector.multi_reduction <maximumf>, %248, %cst_38 [0] : vector<2x128xf32> to vector<128xf32>
    %250 = vector.shape_cast %249 : vector<128xf32> to vector<1x128xf32>
    %251 = vector.extract_strided_slice %159 {offsets = [12, 0], sizes = [2, 128], strides = [1, 1]} : vector<16x128xf32> to vector<2x128xf32>
    %cst_39 = arith.constant dense<0xFF800000> : vector<128xf32>
    %252 = vector.multi_reduction <maximumf>, %251, %cst_39 [0] : vector<2x128xf32> to vector<128xf32>
    %253 = vector.shape_cast %252 : vector<128xf32> to vector<1x128xf32>
    %254 = vector.extract_strided_slice %159 {offsets = [14, 0], sizes = [2, 128], strides = [1, 1]} : vector<16x128xf32> to vector<2x128xf32>
    %cst_40 = arith.constant dense<0xFF800000> : vector<128xf32>
    %255 = vector.multi_reduction <maximumf>, %254, %cst_40 [0] : vector<2x128xf32> to vector<128xf32>
    %256 = vector.shape_cast %255 : vector<128xf32> to vector<1x128xf32>
    %257 = vector.extract_strided_slice %164 {offsets = [0, 0], sizes = [2, 128], strides = [1, 1]} : vector<16x128xf32> to vector<2x128xf32>
    %cst_41 = arith.constant dense<0xFF800000> : vector<128xf32>
    %258 = vector.multi_reduction <maximumf>, %257, %cst_41 [0] : vector<2x128xf32> to vector<128xf32>
    %259 = vector.shape_cast %258 : vector<128xf32> to vector<1x128xf32>
    %260 = vector.extract_strided_slice %164 {offsets = [2, 0], sizes = [2, 128], strides = [1, 1]} : vector<16x128xf32> to vector<2x128xf32>
    %cst_42 = arith.constant dense<0xFF800000> : vector<128xf32>
    %261 = vector.multi_reduction <maximumf>, %260, %cst_42 [0] : vector<2x128xf32> to vector<128xf32>
    %262 = vector.shape_cast %261 : vector<128xf32> to vector<1x128xf32>
    %263 = vector.extract_strided_slice %164 {offsets = [4, 0], sizes = [2, 128], strides = [1, 1]} : vector<16x128xf32> to vector<2x128xf32>
    %cst_43 = arith.constant dense<0xFF800000> : vector<128xf32>
    %264 = vector.multi_reduction <maximumf>, %263, %cst_43 [0] : vector<2x128xf32> to vector<128xf32>
    %265 = vector.shape_cast %264 : vector<128xf32> to vector<1x128xf32>
    %266 = vector.extract_strided_slice %164 {offsets = [6, 0], sizes = [2, 128], strides = [1, 1]} : vector<16x128xf32> to vector<2x128xf32>
    %cst_44 = arith.constant dense<0xFF800000> : vector<128xf32>
    %267 = vector.multi_reduction <maximumf>, %266, %cst_44 [0] : vector<2x128xf32> to vector<128xf32>
    %268 = vector.shape_cast %267 : vector<128xf32> to vector<1x128xf32>
    %269 = vector.extract_strided_slice %164 {offsets = [8, 0], sizes = [2, 128], strides = [1, 1]} : vector<16x128xf32> to vector<2x128xf32>
    %cst_45 = arith.constant dense<0xFF800000> : vector<128xf32>
    %270 = vector.multi_reduction <maximumf>, %269, %cst_45 [0] : vector<2x128xf32> to vector<128xf32>
    %271 = vector.shape_cast %270 : vector<128xf32> to vector<1x128xf32>
    %272 = vector.extract_strided_slice %164 {offsets = [10, 0], sizes = [2, 128], strides = [1, 1]} : vector<16x128xf32> to vector<2x128xf32>
    %cst_46 = arith.constant dense<0xFF800000> : vector<128xf32>
    %273 = vector.multi_reduction <maximumf>, %272, %cst_46 [0] : vector<2x128xf32> to vector<128xf32>
    %274 = vector.shape_cast %273 : vector<128xf32> to vector<1x128xf32>
    %275 = vector.extract_strided_slice %164 {offsets = [12, 0], sizes = [2, 128], strides = [1, 1]} : vector<16x128xf32> to vector<2x128xf32>
    %cst_47 = arith.constant dense<0xFF800000> : vector<128xf32>
    %276 = vector.multi_reduction <maximumf>, %275, %cst_47 [0] : vector<2x128xf32> to vector<128xf32>
    %277 = vector.shape_cast %276 : vector<128xf32> to vector<1x128xf32>
    %278 = vector.extract_strided_slice %164 {offsets = [14, 0], sizes = [2, 128], strides = [1, 1]} : vector<16x128xf32> to vector<2x128xf32>
    %cst_48 = arith.constant dense<0xFF800000> : vector<128xf32>
    %279 = vector.multi_reduction <maximumf>, %278, %cst_48 [0] : vector<2x128xf32> to vector<128xf32>
    %280 = vector.shape_cast %279 : vector<128xf32> to vector<1x128xf32>
    %281 = vector.extract_strided_slice %169 {offsets = [0, 0], sizes = [2, 128], strides = [1, 1]} : vector<16x128xf32> to vector<2x128xf32>
    %cst_49 = arith.constant dense<0xFF800000> : vector<128xf32>
    %282 = vector.multi_reduction <maximumf>, %281, %cst_49 [0] : vector<2x128xf32> to vector<128xf32>
    %283 = vector.shape_cast %282 : vector<128xf32> to vector<1x128xf32>
    %284 = vector.extract_strided_slice %169 {offsets = [2, 0], sizes = [2, 128], strides = [1, 1]} : vector<16x128xf32> to vector<2x128xf32>
    %cst_50 = arith.constant dense<0xFF800000> : vector<128xf32>
    %285 = vector.multi_reduction <maximumf>, %284, %cst_50 [0] : vector<2x128xf32> to vector<128xf32>
    %286 = vector.shape_cast %285 : vector<128xf32> to vector<1x128xf32>
    %287 = vector.extract_strided_slice %169 {offsets = [4, 0], sizes = [2, 128], strides = [1, 1]} : vector<16x128xf32> to vector<2x128xf32>
    %cst_51 = arith.constant dense<0xFF800000> : vector<128xf32>
    %288 = vector.multi_reduction <maximumf>, %287, %cst_51 [0] : vector<2x128xf32> to vector<128xf32>
    %289 = vector.shape_cast %288 : vector<128xf32> to vector<1x128xf32>
    %290 = vector.extract_strided_slice %169 {offsets = [6, 0], sizes = [2, 128], strides = [1, 1]} : vector<16x128xf32> to vector<2x128xf32>
    %cst_52 = arith.constant dense<0xFF800000> : vector<128xf32>
    %291 = vector.multi_reduction <maximumf>, %290, %cst_52 [0] : vector<2x128xf32> to vector<128xf32>
    %292 = vector.shape_cast %291 : vector<128xf32> to vector<1x128xf32>
    %293 = vector.extract_strided_slice %169 {offsets = [8, 0], sizes = [2, 128], strides = [1, 1]} : vector<16x128xf32> to vector<2x128xf32>
    %cst_53 = arith.constant dense<0xFF800000> : vector<128xf32>
    %294 = vector.multi_reduction <maximumf>, %293, %cst_53 [0] : vector<2x128xf32> to vector<128xf32>
    %295 = vector.shape_cast %294 : vector<128xf32> to vector<1x128xf32>
    %296 = vector.extract_strided_slice %169 {offsets = [10, 0], sizes = [2, 128], strides = [1, 1]} : vector<16x128xf32> to vector<2x128xf32>
    %cst_54 = arith.constant dense<0xFF800000> : vector<128xf32>
    %297 = vector.multi_reduction <maximumf>, %296, %cst_54 [0] : vector<2x128xf32> to vector<128xf32>
    %298 = vector.shape_cast %297 : vector<128xf32> to vector<1x128xf32>
    %299 = vector.extract_strided_slice %169 {offsets = [12, 0], sizes = [2, 128], strides = [1, 1]} : vector<16x128xf32> to vector<2x128xf32>
    %cst_55 = arith.constant dense<0xFF800000> : vector<128xf32>
    %300 = vector.multi_reduction <maximumf>, %299, %cst_55 [0] : vector<2x128xf32> to vector<128xf32>
    %301 = vector.shape_cast %300 : vector<128xf32> to vector<1x128xf32>
    %302 = vector.extract_strided_slice %169 {offsets = [14, 0], sizes = [2, 128], strides = [1, 1]} : vector<16x128xf32> to vector<2x128xf32>
    %cst_56 = arith.constant dense<0xFF800000> : vector<128xf32>
    %303 = vector.multi_reduction <maximumf>, %302, %cst_56 [0] : vector<2x128xf32> to vector<128xf32>
    %304 = vector.shape_cast %303 : vector<128xf32> to vector<1x128xf32>
    %305 = vector.extract_strided_slice %174 {offsets = [0, 0], sizes = [2, 128], strides = [1, 1]} : vector<16x128xf32> to vector<2x128xf32>
    %cst_57 = arith.constant dense<0xFF800000> : vector<128xf32>
    %306 = vector.multi_reduction <maximumf>, %305, %cst_57 [0] : vector<2x128xf32> to vector<128xf32>
    %307 = vector.shape_cast %306 : vector<128xf32> to vector<1x128xf32>
    %308 = vector.extract_strided_slice %174 {offsets = [2, 0], sizes = [2, 128], strides = [1, 1]} : vector<16x128xf32> to vector<2x128xf32>
    %cst_58 = arith.constant dense<0xFF800000> : vector<128xf32>
    %309 = vector.multi_reduction <maximumf>, %308, %cst_58 [0] : vector<2x128xf32> to vector<128xf32>
    %310 = vector.shape_cast %309 : vector<128xf32> to vector<1x128xf32>
    %311 = vector.extract_strided_slice %174 {offsets = [4, 0], sizes = [2, 128], strides = [1, 1]} : vector<16x128xf32> to vector<2x128xf32>
    %cst_59 = arith.constant dense<0xFF800000> : vector<128xf32>
    %312 = vector.multi_reduction <maximumf>, %311, %cst_59 [0] : vector<2x128xf32> to vector<128xf32>
    %313 = vector.shape_cast %312 : vector<128xf32> to vector<1x128xf32>
    %314 = vector.extract_strided_slice %174 {offsets = [6, 0], sizes = [2, 128], strides = [1, 1]} : vector<16x128xf32> to vector<2x128xf32>
    %cst_60 = arith.constant dense<0xFF800000> : vector<128xf32>
    %315 = vector.multi_reduction <maximumf>, %314, %cst_60 [0] : vector<2x128xf32> to vector<128xf32>
    %316 = vector.shape_cast %315 : vector<128xf32> to vector<1x128xf32>
    %317 = vector.extract_strided_slice %174 {offsets = [8, 0], sizes = [2, 128], strides = [1, 1]} : vector<16x128xf32> to vector<2x128xf32>
    %cst_61 = arith.constant dense<0xFF800000> : vector<128xf32>
    %318 = vector.multi_reduction <maximumf>, %317, %cst_61 [0] : vector<2x128xf32> to vector<128xf32>
    %319 = vector.shape_cast %318 : vector<128xf32> to vector<1x128xf32>
    %320 = vector.extract_strided_slice %174 {offsets = [10, 0], sizes = [2, 128], strides = [1, 1]} : vector<16x128xf32> to vector<2x128xf32>
    %cst_62 = arith.constant dense<0xFF800000> : vector<128xf32>
    %321 = vector.multi_reduction <maximumf>, %320, %cst_62 [0] : vector<2x128xf32> to vector<128xf32>
    %322 = vector.shape_cast %321 : vector<128xf32> to vector<1x128xf32>
    %323 = vector.extract_strided_slice %174 {offsets = [12, 0], sizes = [2, 128], strides = [1, 1]} : vector<16x128xf32> to vector<2x128xf32>
    %cst_63 = arith.constant dense<0xFF800000> : vector<128xf32>
    %324 = vector.multi_reduction <maximumf>, %323, %cst_63 [0] : vector<2x128xf32> to vector<128xf32>
    %325 = vector.shape_cast %324 : vector<128xf32> to vector<1x128xf32>
    %326 = vector.extract_strided_slice %174 {offsets = [14, 0], sizes = [2, 128], strides = [1, 1]} : vector<16x128xf32> to vector<2x128xf32>
    %cst_64 = arith.constant dense<0xFF800000> : vector<128xf32>
    %327 = vector.multi_reduction <maximumf>, %326, %cst_64 [0] : vector<2x128xf32> to vector<128xf32>
    %328 = vector.shape_cast %327 : vector<128xf32> to vector<1x128xf32>
    %329 = vector.extract_strided_slice %179 {offsets = [0, 0], sizes = [2, 128], strides = [1, 1]} : vector<16x128xf32> to vector<2x128xf32>
    %cst_65 = arith.constant dense<0xFF800000> : vector<128xf32>
    %330 = vector.multi_reduction <maximumf>, %329, %cst_65 [0] : vector<2x128xf32> to vector<128xf32>
    %331 = vector.shape_cast %330 : vector<128xf32> to vector<1x128xf32>
    %332 = vector.extract_strided_slice %179 {offsets = [2, 0], sizes = [2, 128], strides = [1, 1]} : vector<16x128xf32> to vector<2x128xf32>
    %cst_66 = arith.constant dense<0xFF800000> : vector<128xf32>
    %333 = vector.multi_reduction <maximumf>, %332, %cst_66 [0] : vector<2x128xf32> to vector<128xf32>
    %334 = vector.shape_cast %333 : vector<128xf32> to vector<1x128xf32>
    %335 = vector.extract_strided_slice %179 {offsets = [4, 0], sizes = [2, 128], strides = [1, 1]} : vector<16x128xf32> to vector<2x128xf32>
    %cst_67 = arith.constant dense<0xFF800000> : vector<128xf32>
    %336 = vector.multi_reduction <maximumf>, %335, %cst_67 [0] : vector<2x128xf32> to vector<128xf32>
    %337 = vector.shape_cast %336 : vector<128xf32> to vector<1x128xf32>
    %338 = vector.extract_strided_slice %179 {offsets = [6, 0], sizes = [2, 128], strides = [1, 1]} : vector<16x128xf32> to vector<2x128xf32>
    %cst_68 = arith.constant dense<0xFF800000> : vector<128xf32>
    %339 = vector.multi_reduction <maximumf>, %338, %cst_68 [0] : vector<2x128xf32> to vector<128xf32>
    %340 = vector.shape_cast %339 : vector<128xf32> to vector<1x128xf32>
    %341 = vector.extract_strided_slice %179 {offsets = [8, 0], sizes = [2, 128], strides = [1, 1]} : vector<16x128xf32> to vector<2x128xf32>
    %cst_69 = arith.constant dense<0xFF800000> : vector<128xf32>
    %342 = vector.multi_reduction <maximumf>, %341, %cst_69 [0] : vector<2x128xf32> to vector<128xf32>
    %343 = vector.shape_cast %342 : vector<128xf32> to vector<1x128xf32>
    %344 = vector.extract_strided_slice %179 {offsets = [10, 0], sizes = [2, 128], strides = [1, 1]} : vector<16x128xf32> to vector<2x128xf32>
    %cst_70 = arith.constant dense<0xFF800000> : vector<128xf32>
    %345 = vector.multi_reduction <maximumf>, %344, %cst_70 [0] : vector<2x128xf32> to vector<128xf32>
    %346 = vector.shape_cast %345 : vector<128xf32> to vector<1x128xf32>
    %347 = vector.extract_strided_slice %179 {offsets = [12, 0], sizes = [2, 128], strides = [1, 1]} : vector<16x128xf32> to vector<2x128xf32>
    %cst_71 = arith.constant dense<0xFF800000> : vector<128xf32>
    %348 = vector.multi_reduction <maximumf>, %347, %cst_71 [0] : vector<2x128xf32> to vector<128xf32>
    %349 = vector.shape_cast %348 : vector<128xf32> to vector<1x128xf32>
    %350 = vector.extract_strided_slice %179 {offsets = [14, 0], sizes = [2, 128], strides = [1, 1]} : vector<16x128xf32> to vector<2x128xf32>
    %cst_72 = arith.constant dense<0xFF800000> : vector<128xf32>
    %351 = vector.multi_reduction <maximumf>, %350, %cst_72 [0] : vector<2x128xf32> to vector<128xf32>
    %352 = vector.shape_cast %351 : vector<128xf32> to vector<1x128xf32>
    %353 = vector.extract_strided_slice %184 {offsets = [0, 0], sizes = [2, 128], strides = [1, 1]} : vector<16x128xf32> to vector<2x128xf32>
    %cst_73 = arith.constant dense<0xFF800000> : vector<128xf32>
    %354 = vector.multi_reduction <maximumf>, %353, %cst_73 [0] : vector<2x128xf32> to vector<128xf32>
    %355 = vector.shape_cast %354 : vector<128xf32> to vector<1x128xf32>
    %356 = vector.extract_strided_slice %184 {offsets = [2, 0], sizes = [2, 128], strides = [1, 1]} : vector<16x128xf32> to vector<2x128xf32>
    %cst_74 = arith.constant dense<0xFF800000> : vector<128xf32>
    %357 = vector.multi_reduction <maximumf>, %356, %cst_74 [0] : vector<2x128xf32> to vector<128xf32>
    %358 = vector.shape_cast %357 : vector<128xf32> to vector<1x128xf32>
    %359 = vector.extract_strided_slice %184 {offsets = [4, 0], sizes = [2, 128], strides = [1, 1]} : vector<16x128xf32> to vector<2x128xf32>
    %cst_75 = arith.constant dense<0xFF800000> : vector<128xf32>
    %360 = vector.multi_reduction <maximumf>, %359, %cst_75 [0] : vector<2x128xf32> to vector<128xf32>
    %361 = vector.shape_cast %360 : vector<128xf32> to vector<1x128xf32>
    %362 = vector.extract_strided_slice %184 {offsets = [6, 0], sizes = [2, 128], strides = [1, 1]} : vector<16x128xf32> to vector<2x128xf32>
    %cst_76 = arith.constant dense<0xFF800000> : vector<128xf32>
    %363 = vector.multi_reduction <maximumf>, %362, %cst_76 [0] : vector<2x128xf32> to vector<128xf32>
    %364 = vector.shape_cast %363 : vector<128xf32> to vector<1x128xf32>
    %365 = vector.extract_strided_slice %184 {offsets = [8, 0], sizes = [2, 128], strides = [1, 1]} : vector<16x128xf32> to vector<2x128xf32>
    %cst_77 = arith.constant dense<0xFF800000> : vector<128xf32>
    %366 = vector.multi_reduction <maximumf>, %365, %cst_77 [0] : vector<2x128xf32> to vector<128xf32>
    %367 = vector.shape_cast %366 : vector<128xf32> to vector<1x128xf32>
    %368 = vector.extract_strided_slice %184 {offsets = [10, 0], sizes = [2, 128], strides = [1, 1]} : vector<16x128xf32> to vector<2x128xf32>
    %cst_78 = arith.constant dense<0xFF800000> : vector<128xf32>
    %369 = vector.multi_reduction <maximumf>, %368, %cst_78 [0] : vector<2x128xf32> to vector<128xf32>
    %370 = vector.shape_cast %369 : vector<128xf32> to vector<1x128xf32>
    %371 = vector.extract_strided_slice %184 {offsets = [12, 0], sizes = [2, 128], strides = [1, 1]} : vector<16x128xf32> to vector<2x128xf32>
    %cst_79 = arith.constant dense<0xFF800000> : vector<128xf32>
    %372 = vector.multi_reduction <maximumf>, %371, %cst_79 [0] : vector<2x128xf32> to vector<128xf32>
    %373 = vector.shape_cast %372 : vector<128xf32> to vector<1x128xf32>
    %374 = vector.extract_strided_slice %184 {offsets = [14, 0], sizes = [2, 128], strides = [1, 1]} : vector<16x128xf32> to vector<2x128xf32>
    %cst_80 = arith.constant dense<0xFF800000> : vector<128xf32>
    %375 = vector.multi_reduction <maximumf>, %374, %cst_80 [0] : vector<2x128xf32> to vector<128xf32>
    %376 = vector.shape_cast %375 : vector<128xf32> to vector<1x128xf32>
    %377 = tpu.concatenate %187, %190, %193, %196, %199, %202, %205, %208, %211, %214, %217, %220, %223, %226, %229, %232 in 0 : vector<1x128xf32>, vector<1x128xf32>, vector<1x128xf32>, vector<1x128xf32>, vector<1x128xf32>, vector<1x128xf32>, vector<1x128xf32>, vector<1x128xf32>, vector<1x128xf32>, vector<1x128xf32>, vector<1x128xf32>, vector<1x128xf32>, vector<1x128xf32>, vector<1x128xf32>, vector<1x128xf32>, vector<1x128xf32> -> vector<16x128xf32>
    %378 = tpu.concatenate %235, %238, %241, %244, %247, %250, %253, %256, %259, %262, %265, %268, %271, %274, %277, %280 in 0 : vector<1x128xf32>, vector<1x128xf32>, vector<1x128xf32>, vector<1x128xf32>, vector<1x128xf32>, vector<1x128xf32>, vector<1x128xf32>, vector<1x128xf32>, vector<1x128xf32>, vector<1x128xf32>, vector<1x128xf32>, vector<1x128xf32>, vector<1x128xf32>, vector<1x128xf32>, vector<1x128xf32>, vector<1x128xf32> -> vector<16x128xf32>
    %379 = tpu.concatenate %283, %286, %289, %292, %295, %298, %301, %304, %307, %310, %313, %316, %319, %322, %325, %328 in 0 : vector<1x128xf32>, vector<1x128xf32>, vector<1x128xf32>, vector<1x128xf32>, vector<1x128xf32>, vector<1x128xf32>, vector<1x128xf32>, vector<1x128xf32>, vector<1x128xf32>, vector<1x128xf32>, vector<1x128xf32>, vector<1x128xf32>, vector<1x128xf32>, vector<1x128xf32>, vector<1x128xf32>, vector<1x128xf32> -> vector<16x128xf32>
    %380 = tpu.concatenate %331, %334, %337, %340, %343, %346, %349, %352, %355, %358, %361, %364, %367, %370, %373, %376 in 0 : vector<1x128xf32>, vector<1x128xf32>, vector<1x128xf32>, vector<1x128xf32>, vector<1x128xf32>, vector<1x128xf32>, vector<1x128xf32>, vector<1x128xf32>, vector<1x128xf32>, vector<1x128xf32>, vector<1x128xf32>, vector<1x128xf32>, vector<1x128xf32>, vector<1x128xf32>, vector<1x128xf32>, vector<1x128xf32> -> vector<16x128xf32>
    %381 = tpu.concatenate %377, %378, %379, %380 in 0 : vector<16x128xf32>, vector<16x128xf32>, vector<16x128xf32>, vector<16x128xf32> -> vector<64x128xf32>
    %382 = vector.extract_strided_slice %2 {offsets = [0, 0, 0], sizes = [1, 16, 128], strides = [1, 1, 1]} : vector<16x16x128xf32> to vector<1x16x128xf32>
    %383 = vector.shape_cast %382 : vector<1x16x128xf32> to vector<16x128xf32>
    %384 = vector.extract_strided_slice %2 {offsets = [1, 0, 0], sizes = [1, 16, 128], strides = [1, 1, 1]} : vector<16x16x128xf32> to vector<1x16x128xf32>
    %385 = vector.shape_cast %384 : vector<1x16x128xf32> to vector<16x128xf32>
    %386 = arith.maximumf %383, %385 : vector<16x128xf32>
    %387 = vector.extract_strided_slice %2 {offsets = [1, 0, 0], sizes = [1, 16, 128], strides = [1, 1, 1]} : vector<16x16x128xf32> to vector<1x16x128xf32>
    %388 = vector.shape_cast %387 : vector<1x16x128xf32> to vector<16x128xf32>
    %389 = vector.extract_strided_slice %2 {offsets = [2, 0, 0], sizes = [1, 16, 128], strides = [1, 1, 1]} : vector<16x16x128xf32> to vector<1x16x128xf32>
    %390 = vector.shape_cast %389 : vector<1x16x128xf32> to vector<16x128xf32>
    %391 = arith.maximumf %388, %390 : vector<16x128xf32>
    %392 = vector.extract_strided_slice %2 {offsets = [2, 0, 0], sizes = [1, 16, 128], strides = [1, 1, 1]} : vector<16x16x128xf32> to vector<1x16x128xf32>
    %393 = vector.shape_cast %392 : vector<1x16x128xf32> to vector<16x128xf32>
    %394 = vector.extract_strided_slice %2 {offsets = [3, 0, 0], sizes = [1, 16, 128], strides = [1, 1, 1]} : vector<16x16x128xf32> to vector<1x16x128xf32>
    %395 = vector.shape_cast %394 : vector<1x16x128xf32> to vector<16x128xf32>
    %396 = arith.maximumf %393, %395 : vector<16x128xf32>
    %397 = vector.extract_strided_slice %2 {offsets = [4, 0, 0], sizes = [1, 16, 128], strides = [1, 1, 1]} : vector<16x16x128xf32> to vector<1x16x128xf32>
    %398 = vector.shape_cast %397 : vector<1x16x128xf32> to vector<16x128xf32>
    %399 = vector.extract_strided_slice %2 {offsets = [5, 0, 0], sizes = [1, 16, 128], strides = [1, 1, 1]} : vector<16x16x128xf32> to vector<1x16x128xf32>
    %400 = vector.shape_cast %399 : vector<1x16x128xf32> to vector<16x128xf32>
    %401 = arith.maximumf %398, %400 : vector<16x128xf32>
    %402 = vector.extract_strided_slice %2 {offsets = [5, 0, 0], sizes = [1, 16, 128], strides = [1, 1, 1]} : vector<16x16x128xf32> to vector<1x16x128xf32>
    %403 = vector.shape_cast %402 : vector<1x16x128xf32> to vector<16x128xf32>
    %404 = vector.extract_strided_slice %2 {offsets = [6, 0, 0], sizes = [1, 16, 128], strides = [1, 1, 1]} : vector<16x16x128xf32> to vector<1x16x128xf32>
    %405 = vector.shape_cast %404 : vector<1x16x128xf32> to vector<16x128xf32>
    %406 = arith.maximumf %403, %405 : vector<16x128xf32>
    %407 = vector.extract_strided_slice %2 {offsets = [6, 0, 0], sizes = [1, 16, 128], strides = [1, 1, 1]} : vector<16x16x128xf32> to vector<1x16x128xf32>
    %408 = vector.shape_cast %407 : vector<1x16x128xf32> to vector<16x128xf32>
    %409 = vector.extract_strided_slice %2 {offsets = [7, 0, 0], sizes = [1, 16, 128], strides = [1, 1, 1]} : vector<16x16x128xf32> to vector<1x16x128xf32>
    %410 = vector.shape_cast %409 : vector<1x16x128xf32> to vector<16x128xf32>
    %411 = arith.maximumf %408, %410 : vector<16x128xf32>
    %412 = vector.extract_strided_slice %2 {offsets = [8, 0, 0], sizes = [1, 16, 128], strides = [1, 1, 1]} : vector<16x16x128xf32> to vector<1x16x128xf32>
    %413 = vector.shape_cast %412 : vector<1x16x128xf32> to vector<16x128xf32>
    %414 = vector.extract_strided_slice %2 {offsets = [9, 0, 0], sizes = [1, 16, 128], strides = [1, 1, 1]} : vector<16x16x128xf32> to vector<1x16x128xf32>
    %415 = vector.shape_cast %414 : vector<1x16x128xf32> to vector<16x128xf32>
    %416 = arith.maximumf %413, %415 : vector<16x128xf32>
    %417 = vector.extract_strided_slice %2 {offsets = [9, 0, 0], sizes = [1, 16, 128], strides = [1, 1, 1]} : vector<16x16x128xf32> to vector<1x16x128xf32>
    %418 = vector.shape_cast %417 : vector<1x16x128xf32> to vector<16x128xf32>
    %419 = vector.extract_strided_slice %2 {offsets = [10, 0, 0], sizes = [1, 16, 128], strides = [1, 1, 1]} : vector<16x16x128xf32> to vector<1x16x128xf32>
    %420 = vector.shape_cast %419 : vector<1x16x128xf32> to vector<16x128xf32>
    %421 = arith.maximumf %418, %420 : vector<16x128xf32>
    %422 = vector.extract_strided_slice %2 {offsets = [10, 0, 0], sizes = [1, 16, 128], strides = [1, 1, 1]} : vector<16x16x128xf32> to vector<1x16x128xf32>
    %423 = vector.shape_cast %422 : vector<1x16x128xf32> to vector<16x128xf32>
    %424 = vector.extract_strided_slice %2 {offsets = [11, 0, 0], sizes = [1, 16, 128], strides = [1, 1, 1]} : vector<16x16x128xf32> to vector<1x16x128xf32>
    %425 = vector.shape_cast %424 : vector<1x16x128xf32> to vector<16x128xf32>
    %426 = arith.maximumf %423, %425 : vector<16x128xf32>
    %427 = vector.extract_strided_slice %2 {offsets = [12, 0, 0], sizes = [1, 16, 128], strides = [1, 1, 1]} : vector<16x16x128xf32> to vector<1x16x128xf32>
    %428 = vector.shape_cast %427 : vector<1x16x128xf32> to vector<16x128xf32>
    %429 = vector.extract_strided_slice %2 {offsets = [13, 0, 0], sizes = [1, 16, 128], strides = [1, 1, 1]} : vector<16x16x128xf32> to vector<1x16x128xf32>
    %430 = vector.shape_cast %429 : vector<1x16x128xf32> to vector<16x128xf32>
    %431 = arith.maximumf %428, %430 : vector<16x128xf32>
    %432 = vector.extract_strided_slice %2 {offsets = [13, 0, 0], sizes = [1, 16, 128], strides = [1, 1, 1]} : vector<16x16x128xf32> to vector<1x16x128xf32>
    %433 = vector.shape_cast %432 : vector<1x16x128xf32> to vector<16x128xf32>
    %434 = vector.extract_strided_slice %2 {offsets = [14, 0, 0], sizes = [1, 16, 128], strides = [1, 1, 1]} : vector<16x16x128xf32> to vector<1x16x128xf32>
    %435 = vector.shape_cast %434 : vector<1x16x128xf32> to vector<16x128xf32>
    %436 = arith.maximumf %433, %435 : vector<16x128xf32>
    %437 = vector.extract_strided_slice %2 {offsets = [14, 0, 0], sizes = [1, 16, 128], strides = [1, 1, 1]} : vector<16x16x128xf32> to vector<1x16x128xf32>
    %438 = vector.shape_cast %437 : vector<1x16x128xf32> to vector<16x128xf32>
    %439 = vector.extract_strided_slice %2 {offsets = [15, 0, 0], sizes = [1, 16, 128], strides = [1, 1, 1]} : vector<16x16x128xf32> to vector<1x16x128xf32>
    %440 = vector.shape_cast %439 : vector<1x16x128xf32> to vector<16x128xf32>
    %441 = arith.maximumf %438, %440 : vector<16x128xf32>
    %442 = vector.extract_strided_slice %386 {offsets = [0, 0], sizes = [2, 128], strides = [1, 1]} : vector<16x128xf32> to vector<2x128xf32>
    %cst_81 = arith.constant dense<0xFF800000> : vector<128xf32>
    %443 = vector.multi_reduction <maximumf>, %442, %cst_81 [0] : vector<2x128xf32> to vector<128xf32>
    %444 = vector.shape_cast %443 : vector<128xf32> to vector<1x128xf32>
    %445 = vector.extract_strided_slice %386 {offsets = [1, 0], sizes = [2, 128], strides = [1, 1]} : vector<16x128xf32> to vector<2x128xf32>
    %cst_82 = arith.constant dense<0xFF800000> : vector<128xf32>
    %446 = vector.multi_reduction <maximumf>, %445, %cst_82 [0] : vector<2x128xf32> to vector<128xf32>
    %447 = vector.shape_cast %446 : vector<128xf32> to vector<1x128xf32>
    %448 = vector.extract_strided_slice %386 {offsets = [2, 0], sizes = [2, 128], strides = [1, 1]} : vector<16x128xf32> to vector<2x128xf32>
    %cst_83 = arith.constant dense<0xFF800000> : vector<128xf32>
    %449 = vector.multi_reduction <maximumf>, %448, %cst_83 [0] : vector<2x128xf32> to vector<128xf32>
    %450 = vector.shape_cast %449 : vector<128xf32> to vector<1x128xf32>
    %451 = vector.extract_strided_slice %386 {offsets = [4, 0], sizes = [2, 128], strides = [1, 1]} : vector<16x128xf32> to vector<2x128xf32>
    %cst_84 = arith.constant dense<0xFF800000> : vector<128xf32>
    %452 = vector.multi_reduction <maximumf>, %451, %cst_84 [0] : vector<2x128xf32> to vector<128xf32>
    %453 = vector.shape_cast %452 : vector<128xf32> to vector<1x128xf32>
    %454 = vector.extract_strided_slice %386 {offsets = [5, 0], sizes = [2, 128], strides = [1, 1]} : vector<16x128xf32> to vector<2x128xf32>
    %cst_85 = arith.constant dense<0xFF800000> : vector<128xf32>
    %455 = vector.multi_reduction <maximumf>, %454, %cst_85 [0] : vector<2x128xf32> to vector<128xf32>
    %456 = vector.shape_cast %455 : vector<128xf32> to vector<1x128xf32>
    %457 = vector.extract_strided_slice %386 {offsets = [6, 0], sizes = [2, 128], strides = [1, 1]} : vector<16x128xf32> to vector<2x128xf32>
    %cst_86 = arith.constant dense<0xFF800000> : vector<128xf32>
    %458 = vector.multi_reduction <maximumf>, %457, %cst_86 [0] : vector<2x128xf32> to vector<128xf32>
    %459 = vector.shape_cast %458 : vector<128xf32> to vector<1x128xf32>
    %460 = vector.extract_strided_slice %386 {offsets = [8, 0], sizes = [2, 128], strides = [1, 1]} : vector<16x128xf32> to vector<2x128xf32>
    %cst_87 = arith.constant dense<0xFF800000> : vector<128xf32>
    %461 = vector.multi_reduction <maximumf>, %460, %cst_87 [0] : vector<2x128xf32> to vector<128xf32>
    %462 = vector.shape_cast %461 : vector<128xf32> to vector<1x128xf32>
    %463 = vector.extract_strided_slice %386 {offsets = [9, 0], sizes = [2, 128], strides = [1, 1]} : vector<16x128xf32> to vector<2x128xf32>
    %cst_88 = arith.constant dense<0xFF800000> : vector<128xf32>
    %464 = vector.multi_reduction <maximumf>, %463, %cst_88 [0] : vector<2x128xf32> to vector<128xf32>
    %465 = vector.shape_cast %464 : vector<128xf32> to vector<1x128xf32>
    %466 = vector.extract_strided_slice %386 {offsets = [10, 0], sizes = [2, 128], strides = [1, 1]} : vector<16x128xf32> to vector<2x128xf32>
    %cst_89 = arith.constant dense<0xFF800000> : vector<128xf32>
    %467 = vector.multi_reduction <maximumf>, %466, %cst_89 [0] : vector<2x128xf32> to vector<128xf32>
    %468 = vector.shape_cast %467 : vector<128xf32> to vector<1x128xf32>
    %469 = vector.extract_strided_slice %386 {offsets = [12, 0], sizes = [2, 128], strides = [1, 1]} : vector<16x128xf32> to vector<2x128xf32>
    %cst_90 = arith.constant dense<0xFF800000> : vector<128xf32>
    %470 = vector.multi_reduction <maximumf>, %469, %cst_90 [0] : vector<2x128xf32> to vector<128xf32>
    %471 = vector.shape_cast %470 : vector<128xf32> to vector<1x128xf32>
    %472 = vector.extract_strided_slice %386 {offsets = [13, 0], sizes = [2, 128], strides = [1, 1]} : vector<16x128xf32> to vector<2x128xf32>
    %cst_91 = arith.constant dense<0xFF800000> : vector<128xf32>
    %473 = vector.multi_reduction <maximumf>, %472, %cst_91 [0] : vector<2x128xf32> to vector<128xf32>
    %474 = vector.shape_cast %473 : vector<128xf32> to vector<1x128xf32>
    %475 = vector.extract_strided_slice %386 {offsets = [14, 0], sizes = [2, 128], strides = [1, 1]} : vector<16x128xf32> to vector<2x128xf32>
    %cst_92 = arith.constant dense<0xFF800000> : vector<128xf32>
    %476 = vector.multi_reduction <maximumf>, %475, %cst_92 [0] : vector<2x128xf32> to vector<128xf32>
    %477 = vector.shape_cast %476 : vector<128xf32> to vector<1x128xf32>
    %478 = vector.extract_strided_slice %391 {offsets = [0, 0], sizes = [2, 128], strides = [1, 1]} : vector<16x128xf32> to vector<2x128xf32>
    %cst_93 = arith.constant dense<0xFF800000> : vector<128xf32>
    %479 = vector.multi_reduction <maximumf>, %478, %cst_93 [0] : vector<2x128xf32> to vector<128xf32>
    %480 = vector.shape_cast %479 : vector<128xf32> to vector<1x128xf32>
    %481 = vector.extract_strided_slice %391 {offsets = [1, 0], sizes = [2, 128], strides = [1, 1]} : vector<16x128xf32> to vector<2x128xf32>
    %cst_94 = arith.constant dense<0xFF800000> : vector<128xf32>
    %482 = vector.multi_reduction <maximumf>, %481, %cst_94 [0] : vector<2x128xf32> to vector<128xf32>
    %483 = vector.shape_cast %482 : vector<128xf32> to vector<1x128xf32>
    %484 = vector.extract_strided_slice %391 {offsets = [2, 0], sizes = [2, 128], strides = [1, 1]} : vector<16x128xf32> to vector<2x128xf32>
    %cst_95 = arith.constant dense<0xFF800000> : vector<128xf32>
    %485 = vector.multi_reduction <maximumf>, %484, %cst_95 [0] : vector<2x128xf32> to vector<128xf32>
    %486 = vector.shape_cast %485 : vector<128xf32> to vector<1x128xf32>
    %487 = vector.extract_strided_slice %391 {offsets = [4, 0], sizes = [2, 128], strides = [1, 1]} : vector<16x128xf32> to vector<2x128xf32>
    %cst_96 = arith.constant dense<0xFF800000> : vector<128xf32>
    %488 = vector.multi_reduction <maximumf>, %487, %cst_96 [0] : vector<2x128xf32> to vector<128xf32>
    %489 = vector.shape_cast %488 : vector<128xf32> to vector<1x128xf32>
    %490 = vector.extract_strided_slice %391 {offsets = [5, 0], sizes = [2, 128], strides = [1, 1]} : vector<16x128xf32> to vector<2x128xf32>
    %cst_97 = arith.constant dense<0xFF800000> : vector<128xf32>
    %491 = vector.multi_reduction <maximumf>, %490, %cst_97 [0] : vector<2x128xf32> to vector<128xf32>
    %492 = vector.shape_cast %491 : vector<128xf32> to vector<1x128xf32>
    %493 = vector.extract_strided_slice %391 {offsets = [6, 0], sizes = [2, 128], strides = [1, 1]} : vector<16x128xf32> to vector<2x128xf32>
    %cst_98 = arith.constant dense<0xFF800000> : vector<128xf32>
    %494 = vector.multi_reduction <maximumf>, %493, %cst_98 [0] : vector<2x128xf32> to vector<128xf32>
    %495 = vector.shape_cast %494 : vector<128xf32> to vector<1x128xf32>
    %496 = vector.extract_strided_slice %391 {offsets = [8, 0], sizes = [2, 128], strides = [1, 1]} : vector<16x128xf32> to vector<2x128xf32>
    %cst_99 = arith.constant dense<0xFF800000> : vector<128xf32>
    %497 = vector.multi_reduction <maximumf>, %496, %cst_99 [0] : vector<2x128xf32> to vector<128xf32>
    %498 = vector.shape_cast %497 : vector<128xf32> to vector<1x128xf32>
    %499 = vector.extract_strided_slice %391 {offsets = [9, 0], sizes = [2, 128], strides = [1, 1]} : vector<16x128xf32> to vector<2x128xf32>
    %cst_100 = arith.constant dense<0xFF800000> : vector<128xf32>
    %500 = vector.multi_reduction <maximumf>, %499, %cst_100 [0] : vector<2x128xf32> to vector<128xf32>
    %501 = vector.shape_cast %500 : vector<128xf32> to vector<1x128xf32>
    %502 = vector.extract_strided_slice %391 {offsets = [10, 0], sizes = [2, 128], strides = [1, 1]} : vector<16x128xf32> to vector<2x128xf32>
    %cst_101 = arith.constant dense<0xFF800000> : vector<128xf32>
    %503 = vector.multi_reduction <maximumf>, %502, %cst_101 [0] : vector<2x128xf32> to vector<128xf32>
    %504 = vector.shape_cast %503 : vector<128xf32> to vector<1x128xf32>
    %505 = vector.extract_strided_slice %391 {offsets = [12, 0], sizes = [2, 128], strides = [1, 1]} : vector<16x128xf32> to vector<2x128xf32>
    %cst_102 = arith.constant dense<0xFF800000> : vector<128xf32>
    %506 = vector.multi_reduction <maximumf>, %505, %cst_102 [0] : vector<2x128xf32> to vector<128xf32>
    %507 = vector.shape_cast %506 : vector<128xf32> to vector<1x128xf32>
    %508 = vector.extract_strided_slice %391 {offsets = [13, 0], sizes = [2, 128], strides = [1, 1]} : vector<16x128xf32> to vector<2x128xf32>
    %cst_103 = arith.constant dense<0xFF800000> : vector<128xf32>
    %509 = vector.multi_reduction <maximumf>, %508, %cst_103 [0] : vector<2x128xf32> to vector<128xf32>
    %510 = vector.shape_cast %509 : vector<128xf32> to vector<1x128xf32>
    %511 = vector.extract_strided_slice %391 {offsets = [14, 0], sizes = [2, 128], strides = [1, 1]} : vector<16x128xf32> to vector<2x128xf32>
    %cst_104 = arith.constant dense<0xFF800000> : vector<128xf32>
    %512 = vector.multi_reduction <maximumf>, %511, %cst_104 [0] : vector<2x128xf32> to vector<128xf32>
    %513 = vector.shape_cast %512 : vector<128xf32> to vector<1x128xf32>
    %514 = vector.extract_strided_slice %396 {offsets = [0, 0], sizes = [2, 128], strides = [1, 1]} : vector<16x128xf32> to vector<2x128xf32>
    %cst_105 = arith.constant dense<0xFF800000> : vector<128xf32>
    %515 = vector.multi_reduction <maximumf>, %514, %cst_105 [0] : vector<2x128xf32> to vector<128xf32>
    %516 = vector.shape_cast %515 : vector<128xf32> to vector<1x128xf32>
    %517 = vector.extract_strided_slice %396 {offsets = [1, 0], sizes = [2, 128], strides = [1, 1]} : vector<16x128xf32> to vector<2x128xf32>
    %cst_106 = arith.constant dense<0xFF800000> : vector<128xf32>
    %518 = vector.multi_reduction <maximumf>, %517, %cst_106 [0] : vector<2x128xf32> to vector<128xf32>
    %519 = vector.shape_cast %518 : vector<128xf32> to vector<1x128xf32>
    %520 = vector.extract_strided_slice %396 {offsets = [2, 0], sizes = [2, 128], strides = [1, 1]} : vector<16x128xf32> to vector<2x128xf32>
    %cst_107 = arith.constant dense<0xFF800000> : vector<128xf32>
    %521 = vector.multi_reduction <maximumf>, %520, %cst_107 [0] : vector<2x128xf32> to vector<128xf32>
    %522 = vector.shape_cast %521 : vector<128xf32> to vector<1x128xf32>
    %523 = vector.extract_strided_slice %396 {offsets = [4, 0], sizes = [2, 128], strides = [1, 1]} : vector<16x128xf32> to vector<2x128xf32>
    %cst_108 = arith.constant dense<0xFF800000> : vector<128xf32>
    %524 = vector.multi_reduction <maximumf>, %523, %cst_108 [0] : vector<2x128xf32> to vector<128xf32>
    %525 = vector.shape_cast %524 : vector<128xf32> to vector<1x128xf32>
    %526 = vector.extract_strided_slice %396 {offsets = [5, 0], sizes = [2, 128], strides = [1, 1]} : vector<16x128xf32> to vector<2x128xf32>
    %cst_109 = arith.constant dense<0xFF800000> : vector<128xf32>
    %527 = vector.multi_reduction <maximumf>, %526, %cst_109 [0] : vector<2x128xf32> to vector<128xf32>
    %528 = vector.shape_cast %527 : vector<128xf32> to vector<1x128xf32>
    %529 = vector.extract_strided_slice %396 {offsets = [6, 0], sizes = [2, 128], strides = [1, 1]} : vector<16x128xf32> to vector<2x128xf32>
    %cst_110 = arith.constant dense<0xFF800000> : vector<128xf32>
    %530 = vector.multi_reduction <maximumf>, %529, %cst_110 [0] : vector<2x128xf32> to vector<128xf32>
    %531 = vector.shape_cast %530 : vector<128xf32> to vector<1x128xf32>
    %532 = vector.extract_strided_slice %396 {offsets = [8, 0], sizes = [2, 128], strides = [1, 1]} : vector<16x128xf32> to vector<2x128xf32>
    %cst_111 = arith.constant dense<0xFF800000> : vector<128xf32>
    %533 = vector.multi_reduction <maximumf>, %532, %cst_111 [0] : vector<2x128xf32> to vector<128xf32>
    %534 = vector.shape_cast %533 : vector<128xf32> to vector<1x128xf32>
    %535 = vector.extract_strided_slice %396 {offsets = [9, 0], sizes = [2, 128], strides = [1, 1]} : vector<16x128xf32> to vector<2x128xf32>
    %cst_112 = arith.constant dense<0xFF800000> : vector<128xf32>
    %536 = vector.multi_reduction <maximumf>, %535, %cst_112 [0] : vector<2x128xf32> to vector<128xf32>
    %537 = vector.shape_cast %536 : vector<128xf32> to vector<1x128xf32>
    %538 = vector.extract_strided_slice %396 {offsets = [10, 0], sizes = [2, 128], strides = [1, 1]} : vector<16x128xf32> to vector<2x128xf32>
    %cst_113 = arith.constant dense<0xFF800000> : vector<128xf32>
    %539 = vector.multi_reduction <maximumf>, %538, %cst_113 [0] : vector<2x128xf32> to vector<128xf32>
    %540 = vector.shape_cast %539 : vector<128xf32> to vector<1x128xf32>
    %541 = vector.extract_strided_slice %396 {offsets = [12, 0], sizes = [2, 128], strides = [1, 1]} : vector<16x128xf32> to vector<2x128xf32>
    %cst_114 = arith.constant dense<0xFF800000> : vector<128xf32>
    %542 = vector.multi_reduction <maximumf>, %541, %cst_114 [0] : vector<2x128xf32> to vector<128xf32>
    %543 = vector.shape_cast %542 : vector<128xf32> to vector<1x128xf32>
    %544 = vector.extract_strided_slice %396 {offsets = [13, 0], sizes = [2, 128], strides = [1, 1]} : vector<16x128xf32> to vector<2x128xf32>
    %cst_115 = arith.constant dense<0xFF800000> : vector<128xf32>
    %545 = vector.multi_reduction <maximumf>, %544, %cst_115 [0] : vector<2x128xf32> to vector<128xf32>
    %546 = vector.shape_cast %545 : vector<128xf32> to vector<1x128xf32>
    %547 = vector.extract_strided_slice %396 {offsets = [14, 0], sizes = [2, 128], strides = [1, 1]} : vector<16x128xf32> to vector<2x128xf32>
    %cst_116 = arith.constant dense<0xFF800000> : vector<128xf32>
    %548 = vector.multi_reduction <maximumf>, %547, %cst_116 [0] : vector<2x128xf32> to vector<128xf32>
    %549 = vector.shape_cast %548 : vector<128xf32> to vector<1x128xf32>
    %550 = vector.extract_strided_slice %401 {offsets = [0, 0], sizes = [2, 128], strides = [1, 1]} : vector<16x128xf32> to vector<2x128xf32>
    %cst_117 = arith.constant dense<0xFF800000> : vector<128xf32>
    %551 = vector.multi_reduction <maximumf>, %550, %cst_117 [0] : vector<2x128xf32> to vector<128xf32>
    %552 = vector.shape_cast %551 : vector<128xf32> to vector<1x128xf32>
    %553 = vector.extract_strided_slice %401 {offsets = [1, 0], sizes = [2, 128], strides = [1, 1]} : vector<16x128xf32> to vector<2x128xf32>
    %cst_118 = arith.constant dense<0xFF800000> : vector<128xf32>
    %554 = vector.multi_reduction <maximumf>, %553, %cst_118 [0] : vector<2x128xf32> to vector<128xf32>
    %555 = vector.shape_cast %554 : vector<128xf32> to vector<1x128xf32>
    %556 = vector.extract_strided_slice %401 {offsets = [2, 0], sizes = [2, 128], strides = [1, 1]} : vector<16x128xf32> to vector<2x128xf32>
    %cst_119 = arith.constant dense<0xFF800000> : vector<128xf32>
    %557 = vector.multi_reduction <maximumf>, %556, %cst_119 [0] : vector<2x128xf32> to vector<128xf32>
    %558 = vector.shape_cast %557 : vector<128xf32> to vector<1x128xf32>
    %559 = vector.extract_strided_slice %401 {offsets = [4, 0], sizes = [2, 128], strides = [1, 1]} : vector<16x128xf32> to vector<2x128xf32>
    %cst_120 = arith.constant dense<0xFF800000> : vector<128xf32>
    %560 = vector.multi_reduction <maximumf>, %559, %cst_120 [0] : vector<2x128xf32> to vector<128xf32>
    %561 = vector.shape_cast %560 : vector<128xf32> to vector<1x128xf32>
    %562 = vector.extract_strided_slice %401 {offsets = [5, 0], sizes = [2, 128], strides = [1, 1]} : vector<16x128xf32> to vector<2x128xf32>
    %cst_121 = arith.constant dense<0xFF800000> : vector<128xf32>
    %563 = vector.multi_reduction <maximumf>, %562, %cst_121 [0] : vector<2x128xf32> to vector<128xf32>
    %564 = vector.shape_cast %563 : vector<128xf32> to vector<1x128xf32>
    %565 = vector.extract_strided_slice %401 {offsets = [6, 0], sizes = [2, 128], strides = [1, 1]} : vector<16x128xf32> to vector<2x128xf32>
    %cst_122 = arith.constant dense<0xFF800000> : vector<128xf32>
    %566 = vector.multi_reduction <maximumf>, %565, %cst_122 [0] : vector<2x128xf32> to vector<128xf32>
    %567 = vector.shape_cast %566 : vector<128xf32> to vector<1x128xf32>
    %568 = vector.extract_strided_slice %401 {offsets = [8, 0], sizes = [2, 128], strides = [1, 1]} : vector<16x128xf32> to vector<2x128xf32>
    %cst_123 = arith.constant dense<0xFF800000> : vector<128xf32>
    %569 = vector.multi_reduction <maximumf>, %568, %cst_123 [0] : vector<2x128xf32> to vector<128xf32>
    %570 = vector.shape_cast %569 : vector<128xf32> to vector<1x128xf32>
    %571 = vector.extract_strided_slice %401 {offsets = [9, 0], sizes = [2, 128], strides = [1, 1]} : vector<16x128xf32> to vector<2x128xf32>
    %cst_124 = arith.constant dense<0xFF800000> : vector<128xf32>
    %572 = vector.multi_reduction <maximumf>, %571, %cst_124 [0] : vector<2x128xf32> to vector<128xf32>
    %573 = vector.shape_cast %572 : vector<128xf32> to vector<1x128xf32>
    %574 = vector.extract_strided_slice %401 {offsets = [10, 0], sizes = [2, 128], strides = [1, 1]} : vector<16x128xf32> to vector<2x128xf32>
    %cst_125 = arith.constant dense<0xFF800000> : vector<128xf32>
    %575 = vector.multi_reduction <maximumf>, %574, %cst_125 [0] : vector<2x128xf32> to vector<128xf32>
    %576 = vector.shape_cast %575 : vector<128xf32> to vector<1x128xf32>
    %577 = vector.extract_strided_slice %401 {offsets = [12, 0], sizes = [2, 128], strides = [1, 1]} : vector<16x128xf32> to vector<2x128xf32>
    %cst_126 = arith.constant dense<0xFF800000> : vector<128xf32>
    %578 = vector.multi_reduction <maximumf>, %577, %cst_126 [0] : vector<2x128xf32> to vector<128xf32>
    %579 = vector.shape_cast %578 : vector<128xf32> to vector<1x128xf32>
    %580 = vector.extract_strided_slice %401 {offsets = [13, 0], sizes = [2, 128], strides = [1, 1]} : vector<16x128xf32> to vector<2x128xf32>
    %cst_127 = arith.constant dense<0xFF800000> : vector<128xf32>
    %581 = vector.multi_reduction <maximumf>, %580, %cst_127 [0] : vector<2x128xf32> to vector<128xf32>
    %582 = vector.shape_cast %581 : vector<128xf32> to vector<1x128xf32>
    %583 = vector.extract_strided_slice %401 {offsets = [14, 0], sizes = [2, 128], strides = [1, 1]} : vector<16x128xf32> to vector<2x128xf32>
    %cst_128 = arith.constant dense<0xFF800000> : vector<128xf32>
    %584 = vector.multi_reduction <maximumf>, %583, %cst_128 [0] : vector<2x128xf32> to vector<128xf32>
    %585 = vector.shape_cast %584 : vector<128xf32> to vector<1x128xf32>
    %586 = vector.extract_strided_slice %406 {offsets = [0, 0], sizes = [2, 128], strides = [1, 1]} : vector<16x128xf32> to vector<2x128xf32>
    %cst_129 = arith.constant dense<0xFF800000> : vector<128xf32>
    %587 = vector.multi_reduction <maximumf>, %586, %cst_129 [0] : vector<2x128xf32> to vector<128xf32>
    %588 = vector.shape_cast %587 : vector<128xf32> to vector<1x128xf32>
    %589 = vector.extract_strided_slice %406 {offsets = [1, 0], sizes = [2, 128], strides = [1, 1]} : vector<16x128xf32> to vector<2x128xf32>
    %cst_130 = arith.constant dense<0xFF800000> : vector<128xf32>
    %590 = vector.multi_reduction <maximumf>, %589, %cst_130 [0] : vector<2x128xf32> to vector<128xf32>
    %591 = vector.shape_cast %590 : vector<128xf32> to vector<1x128xf32>
    %592 = vector.extract_strided_slice %406 {offsets = [2, 0], sizes = [2, 128], strides = [1, 1]} : vector<16x128xf32> to vector<2x128xf32>
    %cst_131 = arith.constant dense<0xFF800000> : vector<128xf32>
    %593 = vector.multi_reduction <maximumf>, %592, %cst_131 [0] : vector<2x128xf32> to vector<128xf32>
    %594 = vector.shape_cast %593 : vector<128xf32> to vector<1x128xf32>
    %595 = vector.extract_strided_slice %406 {offsets = [4, 0], sizes = [2, 128], strides = [1, 1]} : vector<16x128xf32> to vector<2x128xf32>
    %cst_132 = arith.constant dense<0xFF800000> : vector<128xf32>
    %596 = vector.multi_reduction <maximumf>, %595, %cst_132 [0] : vector<2x128xf32> to vector<128xf32>
    %597 = vector.shape_cast %596 : vector<128xf32> to vector<1x128xf32>
    %598 = vector.extract_strided_slice %406 {offsets = [5, 0], sizes = [2, 128], strides = [1, 1]} : vector<16x128xf32> to vector<2x128xf32>
    %cst_133 = arith.constant dense<0xFF800000> : vector<128xf32>
    %599 = vector.multi_reduction <maximumf>, %598, %cst_133 [0] : vector<2x128xf32> to vector<128xf32>
    %600 = vector.shape_cast %599 : vector<128xf32> to vector<1x128xf32>
    %601 = vector.extract_strided_slice %406 {offsets = [6, 0], sizes = [2, 128], strides = [1, 1]} : vector<16x128xf32> to vector<2x128xf32>
    %cst_134 = arith.constant dense<0xFF800000> : vector<128xf32>
    %602 = vector.multi_reduction <maximumf>, %601, %cst_134 [0] : vector<2x128xf32> to vector<128xf32>
    %603 = vector.shape_cast %602 : vector<128xf32> to vector<1x128xf32>
    %604 = vector.extract_strided_slice %406 {offsets = [8, 0], sizes = [2, 128], strides = [1, 1]} : vector<16x128xf32> to vector<2x128xf32>
    %cst_135 = arith.constant dense<0xFF800000> : vector<128xf32>
    %605 = vector.multi_reduction <maximumf>, %604, %cst_135 [0] : vector<2x128xf32> to vector<128xf32>
    %606 = vector.shape_cast %605 : vector<128xf32> to vector<1x128xf32>
    %607 = vector.extract_strided_slice %406 {offsets = [9, 0], sizes = [2, 128], strides = [1, 1]} : vector<16x128xf32> to vector<2x128xf32>
    %cst_136 = arith.constant dense<0xFF800000> : vector<128xf32>
    %608 = vector.multi_reduction <maximumf>, %607, %cst_136 [0] : vector<2x128xf32> to vector<128xf32>
    %609 = vector.shape_cast %608 : vector<128xf32> to vector<1x128xf32>
    %610 = vector.extract_strided_slice %406 {offsets = [10, 0], sizes = [2, 128], strides = [1, 1]} : vector<16x128xf32> to vector<2x128xf32>
    %cst_137 = arith.constant dense<0xFF800000> : vector<128xf32>
    %611 = vector.multi_reduction <maximumf>, %610, %cst_137 [0] : vector<2x128xf32> to vector<128xf32>
    %612 = vector.shape_cast %611 : vector<128xf32> to vector<1x128xf32>
    %613 = vector.extract_strided_slice %406 {offsets = [12, 0], sizes = [2, 128], strides = [1, 1]} : vector<16x128xf32> to vector<2x128xf32>
    %cst_138 = arith.constant dense<0xFF800000> : vector<128xf32>
    %614 = vector.multi_reduction <maximumf>, %613, %cst_138 [0] : vector<2x128xf32> to vector<128xf32>
    %615 = vector.shape_cast %614 : vector<128xf32> to vector<1x128xf32>
    %616 = vector.extract_strided_slice %406 {offsets = [13, 0], sizes = [2, 128], strides = [1, 1]} : vector<16x128xf32> to vector<2x128xf32>
    %cst_139 = arith.constant dense<0xFF800000> : vector<128xf32>
    %617 = vector.multi_reduction <maximumf>, %616, %cst_139 [0] : vector<2x128xf32> to vector<128xf32>
    %618 = vector.shape_cast %617 : vector<128xf32> to vector<1x128xf32>
    %619 = vector.extract_strided_slice %406 {offsets = [14, 0], sizes = [2, 128], strides = [1, 1]} : vector<16x128xf32> to vector<2x128xf32>
    %cst_140 = arith.constant dense<0xFF800000> : vector<128xf32>
    %620 = vector.multi_reduction <maximumf>, %619, %cst_140 [0] : vector<2x128xf32> to vector<128xf32>
    %621 = vector.shape_cast %620 : vector<128xf32> to vector<1x128xf32>
    %622 = vector.extract_strided_slice %411 {offsets = [0, 0], sizes = [2, 128], strides = [1, 1]} : vector<16x128xf32> to vector<2x128xf32>
    %cst_141 = arith.constant dense<0xFF800000> : vector<128xf32>
    %623 = vector.multi_reduction <maximumf>, %622, %cst_141 [0] : vector<2x128xf32> to vector<128xf32>
    %624 = vector.shape_cast %623 : vector<128xf32> to vector<1x128xf32>
    %625 = vector.extract_strided_slice %411 {offsets = [1, 0], sizes = [2, 128], strides = [1, 1]} : vector<16x128xf32> to vector<2x128xf32>
    %cst_142 = arith.constant dense<0xFF800000> : vector<128xf32>
    %626 = vector.multi_reduction <maximumf>, %625, %cst_142 [0] : vector<2x128xf32> to vector<128xf32>
    %627 = vector.shape_cast %626 : vector<128xf32> to vector<1x128xf32>
    %628 = vector.extract_strided_slice %411 {offsets = [2, 0], sizes = [2, 128], strides = [1, 1]} : vector<16x128xf32> to vector<2x128xf32>
    %cst_143 = arith.constant dense<0xFF800000> : vector<128xf32>
    %629 = vector.multi_reduction <maximumf>, %628, %cst_143 [0] : vector<2x128xf32> to vector<128xf32>
    %630 = vector.shape_cast %629 : vector<128xf32> to vector<1x128xf32>
    %631 = vector.extract_strided_slice %411 {offsets = [4, 0], sizes = [2, 128], strides = [1, 1]} : vector<16x128xf32> to vector<2x128xf32>
    %cst_144 = arith.constant dense<0xFF800000> : vector<128xf32>
    %632 = vector.multi_reduction <maximumf>, %631, %cst_144 [0] : vector<2x128xf32> to vector<128xf32>
    %633 = vector.shape_cast %632 : vector<128xf32> to vector<1x128xf32>
    %634 = vector.extract_strided_slice %411 {offsets = [5, 0], sizes = [2, 128], strides = [1, 1]} : vector<16x128xf32> to vector<2x128xf32>
    %cst_145 = arith.constant dense<0xFF800000> : vector<128xf32>
    %635 = vector.multi_reduction <maximumf>, %634, %cst_145 [0] : vector<2x128xf32> to vector<128xf32>
    %636 = vector.shape_cast %635 : vector<128xf32> to vector<1x128xf32>
    %637 = vector.extract_strided_slice %411 {offsets = [6, 0], sizes = [2, 128], strides = [1, 1]} : vector<16x128xf32> to vector<2x128xf32>
    %cst_146 = arith.constant dense<0xFF800000> : vector<128xf32>
    %638 = vector.multi_reduction <maximumf>, %637, %cst_146 [0] : vector<2x128xf32> to vector<128xf32>
    %639 = vector.shape_cast %638 : vector<128xf32> to vector<1x128xf32>
    %640 = vector.extract_strided_slice %411 {offsets = [8, 0], sizes = [2, 128], strides = [1, 1]} : vector<16x128xf32> to vector<2x128xf32>
    %cst_147 = arith.constant dense<0xFF800000> : vector<128xf32>
    %641 = vector.multi_reduction <maximumf>, %640, %cst_147 [0] : vector<2x128xf32> to vector<128xf32>
    %642 = vector.shape_cast %641 : vector<128xf32> to vector<1x128xf32>
    %643 = vector.extract_strided_slice %411 {offsets = [9, 0], sizes = [2, 128], strides = [1, 1]} : vector<16x128xf32> to vector<2x128xf32>
    %cst_148 = arith.constant dense<0xFF800000> : vector<128xf32>
    %644 = vector.multi_reduction <maximumf>, %643, %cst_148 [0] : vector<2x128xf32> to vector<128xf32>
    %645 = vector.shape_cast %644 : vector<128xf32> to vector<1x128xf32>
    %646 = vector.extract_strided_slice %411 {offsets = [10, 0], sizes = [2, 128], strides = [1, 1]} : vector<16x128xf32> to vector<2x128xf32>
    %cst_149 = arith.constant dense<0xFF800000> : vector<128xf32>
    %647 = vector.multi_reduction <maximumf>, %646, %cst_149 [0] : vector<2x128xf32> to vector<128xf32>
    %648 = vector.shape_cast %647 : vector<128xf32> to vector<1x128xf32>
    %649 = vector.extract_strided_slice %411 {offsets = [12, 0], sizes = [2, 128], strides = [1, 1]} : vector<16x128xf32> to vector<2x128xf32>
    %cst_150 = arith.constant dense<0xFF800000> : vector<128xf32>
    %650 = vector.multi_reduction <maximumf>, %649, %cst_150 [0] : vector<2x128xf32> to vector<128xf32>
    %651 = vector.shape_cast %650 : vector<128xf32> to vector<1x128xf32>
    %652 = vector.extract_strided_slice %411 {offsets = [13, 0], sizes = [2, 128], strides = [1, 1]} : vector<16x128xf32> to vector<2x128xf32>
    %cst_151 = arith.constant dense<0xFF800000> : vector<128xf32>
    %653 = vector.multi_reduction <maximumf>, %652, %cst_151 [0] : vector<2x128xf32> to vector<128xf32>
    %654 = vector.shape_cast %653 : vector<128xf32> to vector<1x128xf32>
    %655 = vector.extract_strided_slice %411 {offsets = [14, 0], sizes = [2, 128], strides = [1, 1]} : vector<16x128xf32> to vector<2x128xf32>
    %cst_152 = arith.constant dense<0xFF800000> : vector<128xf32>
    %656 = vector.multi_reduction <maximumf>, %655, %cst_152 [0] : vector<2x128xf32> to vector<128xf32>
    %657 = vector.shape_cast %656 : vector<128xf32> to vector<1x128xf32>
    %658 = vector.extract_strided_slice %416 {offsets = [0, 0], sizes = [2, 128], strides = [1, 1]} : vector<16x128xf32> to vector<2x128xf32>
    %cst_153 = arith.constant dense<0xFF800000> : vector<128xf32>
    %659 = vector.multi_reduction <maximumf>, %658, %cst_153 [0] : vector<2x128xf32> to vector<128xf32>
    %660 = vector.shape_cast %659 : vector<128xf32> to vector<1x128xf32>
    %661 = vector.extract_strided_slice %416 {offsets = [1, 0], sizes = [2, 128], strides = [1, 1]} : vector<16x128xf32> to vector<2x128xf32>
    %cst_154 = arith.constant dense<0xFF800000> : vector<128xf32>
    %662 = vector.multi_reduction <maximumf>, %661, %cst_154 [0] : vector<2x128xf32> to vector<128xf32>
    %663 = vector.shape_cast %662 : vector<128xf32> to vector<1x128xf32>
    %664 = vector.extract_strided_slice %416 {offsets = [2, 0], sizes = [2, 128], strides = [1, 1]} : vector<16x128xf32> to vector<2x128xf32>
    %cst_155 = arith.constant dense<0xFF800000> : vector<128xf32>
    %665 = vector.multi_reduction <maximumf>, %664, %cst_155 [0] : vector<2x128xf32> to vector<128xf32>
    %666 = vector.shape_cast %665 : vector<128xf32> to vector<1x128xf32>
    %667 = vector.extract_strided_slice %416 {offsets = [4, 0], sizes = [2, 128], strides = [1, 1]} : vector<16x128xf32> to vector<2x128xf32>
    %cst_156 = arith.constant dense<0xFF800000> : vector<128xf32>
    %668 = vector.multi_reduction <maximumf>, %667, %cst_156 [0] : vector<2x128xf32> to vector<128xf32>
    %669 = vector.shape_cast %668 : vector<128xf32> to vector<1x128xf32>
    %670 = vector.extract_strided_slice %416 {offsets = [5, 0], sizes = [2, 128], strides = [1, 1]} : vector<16x128xf32> to vector<2x128xf32>
    %cst_157 = arith.constant dense<0xFF800000> : vector<128xf32>
    %671 = vector.multi_reduction <maximumf>, %670, %cst_157 [0] : vector<2x128xf32> to vector<128xf32>
    %672 = vector.shape_cast %671 : vector<128xf32> to vector<1x128xf32>
    %673 = vector.extract_strided_slice %416 {offsets = [6, 0], sizes = [2, 128], strides = [1, 1]} : vector<16x128xf32> to vector<2x128xf32>
    %cst_158 = arith.constant dense<0xFF800000> : vector<128xf32>
    %674 = vector.multi_reduction <maximumf>, %673, %cst_158 [0] : vector<2x128xf32> to vector<128xf32>
    %675 = vector.shape_cast %674 : vector<128xf32> to vector<1x128xf32>
    %676 = vector.extract_strided_slice %416 {offsets = [8, 0], sizes = [2, 128], strides = [1, 1]} : vector<16x128xf32> to vector<2x128xf32>
    %cst_159 = arith.constant dense<0xFF800000> : vector<128xf32>
    %677 = vector.multi_reduction <maximumf>, %676, %cst_159 [0] : vector<2x128xf32> to vector<128xf32>
    %678 = vector.shape_cast %677 : vector<128xf32> to vector<1x128xf32>
    %679 = vector.extract_strided_slice %416 {offsets = [9, 0], sizes = [2, 128], strides = [1, 1]} : vector<16x128xf32> to vector<2x128xf32>
    %cst_160 = arith.constant dense<0xFF800000> : vector<128xf32>
    %680 = vector.multi_reduction <maximumf>, %679, %cst_160 [0] : vector<2x128xf32> to vector<128xf32>
    %681 = vector.shape_cast %680 : vector<128xf32> to vector<1x128xf32>
    %682 = vector.extract_strided_slice %416 {offsets = [10, 0], sizes = [2, 128], strides = [1, 1]} : vector<16x128xf32> to vector<2x128xf32>
    %cst_161 = arith.constant dense<0xFF800000> : vector<128xf32>
    %683 = vector.multi_reduction <maximumf>, %682, %cst_161 [0] : vector<2x128xf32> to vector<128xf32>
    %684 = vector.shape_cast %683 : vector<128xf32> to vector<1x128xf32>
    %685 = vector.extract_strided_slice %416 {offsets = [12, 0], sizes = [2, 128], strides = [1, 1]} : vector<16x128xf32> to vector<2x128xf32>
    %cst_162 = arith.constant dense<0xFF800000> : vector<128xf32>
    %686 = vector.multi_reduction <maximumf>, %685, %cst_162 [0] : vector<2x128xf32> to vector<128xf32>
    %687 = vector.shape_cast %686 : vector<128xf32> to vector<1x128xf32>
    %688 = vector.extract_strided_slice %416 {offsets = [13, 0], sizes = [2, 128], strides = [1, 1]} : vector<16x128xf32> to vector<2x128xf32>
    %cst_163 = arith.constant dense<0xFF800000> : vector<128xf32>
    %689 = vector.multi_reduction <maximumf>, %688, %cst_163 [0] : vector<2x128xf32> to vector<128xf32>
    %690 = vector.shape_cast %689 : vector<128xf32> to vector<1x128xf32>
    %691 = vector.extract_strided_slice %416 {offsets = [14, 0], sizes = [2, 128], strides = [1, 1]} : vector<16x128xf32> to vector<2x128xf32>
    %cst_164 = arith.constant dense<0xFF800000> : vector<128xf32>
    %692 = vector.multi_reduction <maximumf>, %691, %cst_164 [0] : vector<2x128xf32> to vector<128xf32>
    %693 = vector.shape_cast %692 : vector<128xf32> to vector<1x128xf32>
    %694 = vector.extract_strided_slice %421 {offsets = [0, 0], sizes = [2, 128], strides = [1, 1]} : vector<16x128xf32> to vector<2x128xf32>
    %cst_165 = arith.constant dense<0xFF800000> : vector<128xf32>
    %695 = vector.multi_reduction <maximumf>, %694, %cst_165 [0] : vector<2x128xf32> to vector<128xf32>
    %696 = vector.shape_cast %695 : vector<128xf32> to vector<1x128xf32>
    %697 = vector.extract_strided_slice %421 {offsets = [1, 0], sizes = [2, 128], strides = [1, 1]} : vector<16x128xf32> to vector<2x128xf32>
    %cst_166 = arith.constant dense<0xFF800000> : vector<128xf32>
    %698 = vector.multi_reduction <maximumf>, %697, %cst_166 [0] : vector<2x128xf32> to vector<128xf32>
    %699 = vector.shape_cast %698 : vector<128xf32> to vector<1x128xf32>
    %700 = vector.extract_strided_slice %421 {offsets = [2, 0], sizes = [2, 128], strides = [1, 1]} : vector<16x128xf32> to vector<2x128xf32>
    %cst_167 = arith.constant dense<0xFF800000> : vector<128xf32>
    %701 = vector.multi_reduction <maximumf>, %700, %cst_167 [0] : vector<2x128xf32> to vector<128xf32>
    %702 = vector.shape_cast %701 : vector<128xf32> to vector<1x128xf32>
    %703 = vector.extract_strided_slice %421 {offsets = [4, 0], sizes = [2, 128], strides = [1, 1]} : vector<16x128xf32> to vector<2x128xf32>
    %cst_168 = arith.constant dense<0xFF800000> : vector<128xf32>
    %704 = vector.multi_reduction <maximumf>, %703, %cst_168 [0] : vector<2x128xf32> to vector<128xf32>
    %705 = vector.shape_cast %704 : vector<128xf32> to vector<1x128xf32>
    %706 = vector.extract_strided_slice %421 {offsets = [5, 0], sizes = [2, 128], strides = [1, 1]} : vector<16x128xf32> to vector<2x128xf32>
    %cst_169 = arith.constant dense<0xFF800000> : vector<128xf32>
    %707 = vector.multi_reduction <maximumf>, %706, %cst_169 [0] : vector<2x128xf32> to vector<128xf32>
    %708 = vector.shape_cast %707 : vector<128xf32> to vector<1x128xf32>
    %709 = vector.extract_strided_slice %421 {offsets = [6, 0], sizes = [2, 128], strides = [1, 1]} : vector<16x128xf32> to vector<2x128xf32>
    %cst_170 = arith.constant dense<0xFF800000> : vector<128xf32>
    %710 = vector.multi_reduction <maximumf>, %709, %cst_170 [0] : vector<2x128xf32> to vector<128xf32>
    %711 = vector.shape_cast %710 : vector<128xf32> to vector<1x128xf32>
    %712 = vector.extract_strided_slice %421 {offsets = [8, 0], sizes = [2, 128], strides = [1, 1]} : vector<16x128xf32> to vector<2x128xf32>
    %cst_171 = arith.constant dense<0xFF800000> : vector<128xf32>
    %713 = vector.multi_reduction <maximumf>, %712, %cst_171 [0] : vector<2x128xf32> to vector<128xf32>
    %714 = vector.shape_cast %713 : vector<128xf32> to vector<1x128xf32>
    %715 = vector.extract_strided_slice %421 {offsets = [9, 0], sizes = [2, 128], strides = [1, 1]} : vector<16x128xf32> to vector<2x128xf32>
    %cst_172 = arith.constant dense<0xFF800000> : vector<128xf32>
    %716 = vector.multi_reduction <maximumf>, %715, %cst_172 [0] : vector<2x128xf32> to vector<128xf32>
    %717 = vector.shape_cast %716 : vector<128xf32> to vector<1x128xf32>
    %718 = vector.extract_strided_slice %421 {offsets = [10, 0], sizes = [2, 128], strides = [1, 1]} : vector<16x128xf32> to vector<2x128xf32>
    %cst_173 = arith.constant dense<0xFF800000> : vector<128xf32>
    %719 = vector.multi_reduction <maximumf>, %718, %cst_173 [0] : vector<2x128xf32> to vector<128xf32>
    %720 = vector.shape_cast %719 : vector<128xf32> to vector<1x128xf32>
    %721 = vector.extract_strided_slice %421 {offsets = [12, 0], sizes = [2, 128], strides = [1, 1]} : vector<16x128xf32> to vector<2x128xf32>
    %cst_174 = arith.constant dense<0xFF800000> : vector<128xf32>
    %722 = vector.multi_reduction <maximumf>, %721, %cst_174 [0] : vector<2x128xf32> to vector<128xf32>
    %723 = vector.shape_cast %722 : vector<128xf32> to vector<1x128xf32>
    %724 = vector.extract_strided_slice %421 {offsets = [13, 0], sizes = [2, 128], strides = [1, 1]} : vector<16x128xf32> to vector<2x128xf32>
    %cst_175 = arith.constant dense<0xFF800000> : vector<128xf32>
    %725 = vector.multi_reduction <maximumf>, %724, %cst_175 [0] : vector<2x128xf32> to vector<128xf32>
    %726 = vector.shape_cast %725 : vector<128xf32> to vector<1x128xf32>
    %727 = vector.extract_strided_slice %421 {offsets = [14, 0], sizes = [2, 128], strides = [1, 1]} : vector<16x128xf32> to vector<2x128xf32>
    %cst_176 = arith.constant dense<0xFF800000> : vector<128xf32>
    %728 = vector.multi_reduction <maximumf>, %727, %cst_176 [0] : vector<2x128xf32> to vector<128xf32>
    %729 = vector.shape_cast %728 : vector<128xf32> to vector<1x128xf32>
    %730 = vector.extract_strided_slice %426 {offsets = [0, 0], sizes = [2, 128], strides = [1, 1]} : vector<16x128xf32> to vector<2x128xf32>
    %cst_177 = arith.constant dense<0xFF800000> : vector<128xf32>
    %731 = vector.multi_reduction <maximumf>, %730, %cst_177 [0] : vector<2x128xf32> to vector<128xf32>
    %732 = vector.shape_cast %731 : vector<128xf32> to vector<1x128xf32>
    %733 = vector.extract_strided_slice %426 {offsets = [1, 0], sizes = [2, 128], strides = [1, 1]} : vector<16x128xf32> to vector<2x128xf32>
    %cst_178 = arith.constant dense<0xFF800000> : vector<128xf32>
    %734 = vector.multi_reduction <maximumf>, %733, %cst_178 [0] : vector<2x128xf32> to vector<128xf32>
    %735 = vector.shape_cast %734 : vector<128xf32> to vector<1x128xf32>
    %736 = vector.extract_strided_slice %426 {offsets = [2, 0], sizes = [2, 128], strides = [1, 1]} : vector<16x128xf32> to vector<2x128xf32>
    %cst_179 = arith.constant dense<0xFF800000> : vector<128xf32>
    %737 = vector.multi_reduction <maximumf>, %736, %cst_179 [0] : vector<2x128xf32> to vector<128xf32>
    %738 = vector.shape_cast %737 : vector<128xf32> to vector<1x128xf32>
    %739 = vector.extract_strided_slice %426 {offsets = [4, 0], sizes = [2, 128], strides = [1, 1]} : vector<16x128xf32> to vector<2x128xf32>
    %cst_180 = arith.constant dense<0xFF800000> : vector<128xf32>
    %740 = vector.multi_reduction <maximumf>, %739, %cst_180 [0] : vector<2x128xf32> to vector<128xf32>
    %741 = vector.shape_cast %740 : vector<128xf32> to vector<1x128xf32>
    %742 = vector.extract_strided_slice %426 {offsets = [5, 0], sizes = [2, 128], strides = [1, 1]} : vector<16x128xf32> to vector<2x128xf32>
    %cst_181 = arith.constant dense<0xFF800000> : vector<128xf32>
    %743 = vector.multi_reduction <maximumf>, %742, %cst_181 [0] : vector<2x128xf32> to vector<128xf32>
    %744 = vector.shape_cast %743 : vector<128xf32> to vector<1x128xf32>
    %745 = vector.extract_strided_slice %426 {offsets = [6, 0], sizes = [2, 128], strides = [1, 1]} : vector<16x128xf32> to vector<2x128xf32>
    %cst_182 = arith.constant dense<0xFF800000> : vector<128xf32>
    %746 = vector.multi_reduction <maximumf>, %745, %cst_182 [0] : vector<2x128xf32> to vector<128xf32>
    %747 = vector.shape_cast %746 : vector<128xf32> to vector<1x128xf32>
    %748 = vector.extract_strided_slice %426 {offsets = [8, 0], sizes = [2, 128], strides = [1, 1]} : vector<16x128xf32> to vector<2x128xf32>
    %cst_183 = arith.constant dense<0xFF800000> : vector<128xf32>
    %749 = vector.multi_reduction <maximumf>, %748, %cst_183 [0] : vector<2x128xf32> to vector<128xf32>
    %750 = vector.shape_cast %749 : vector<128xf32> to vector<1x128xf32>
    %751 = vector.extract_strided_slice %426 {offsets = [9, 0], sizes = [2, 128], strides = [1, 1]} : vector<16x128xf32> to vector<2x128xf32>
    %cst_184 = arith.constant dense<0xFF800000> : vector<128xf32>
    %752 = vector.multi_reduction <maximumf>, %751, %cst_184 [0] : vector<2x128xf32> to vector<128xf32>
    %753 = vector.shape_cast %752 : vector<128xf32> to vector<1x128xf32>
    %754 = vector.extract_strided_slice %426 {offsets = [10, 0], sizes = [2, 128], strides = [1, 1]} : vector<16x128xf32> to vector<2x128xf32>
    %cst_185 = arith.constant dense<0xFF800000> : vector<128xf32>
    %755 = vector.multi_reduction <maximumf>, %754, %cst_185 [0] : vector<2x128xf32> to vector<128xf32>
    %756 = vector.shape_cast %755 : vector<128xf32> to vector<1x128xf32>
    %757 = vector.extract_strided_slice %426 {offsets = [12, 0], sizes = [2, 128], strides = [1, 1]} : vector<16x128xf32> to vector<2x128xf32>
    %cst_186 = arith.constant dense<0xFF800000> : vector<128xf32>
    %758 = vector.multi_reduction <maximumf>, %757, %cst_186 [0] : vector<2x128xf32> to vector<128xf32>
    %759 = vector.shape_cast %758 : vector<128xf32> to vector<1x128xf32>
    %760 = vector.extract_strided_slice %426 {offsets = [13, 0], sizes = [2, 128], strides = [1, 1]} : vector<16x128xf32> to vector<2x128xf32>
    %cst_187 = arith.constant dense<0xFF800000> : vector<128xf32>
    %761 = vector.multi_reduction <maximumf>, %760, %cst_187 [0] : vector<2x128xf32> to vector<128xf32>
    %762 = vector.shape_cast %761 : vector<128xf32> to vector<1x128xf32>
    %763 = vector.extract_strided_slice %426 {offsets = [14, 0], sizes = [2, 128], strides = [1, 1]} : vector<16x128xf32> to vector<2x128xf32>
    %cst_188 = arith.constant dense<0xFF800000> : vector<128xf32>
    %764 = vector.multi_reduction <maximumf>, %763, %cst_188 [0] : vector<2x128xf32> to vector<128xf32>
    %765 = vector.shape_cast %764 : vector<128xf32> to vector<1x128xf32>
    %766 = vector.extract_strided_slice %431 {offsets = [0, 0], sizes = [2, 128], strides = [1, 1]} : vector<16x128xf32> to vector<2x128xf32>
    %cst_189 = arith.constant dense<0xFF800000> : vector<128xf32>
    %767 = vector.multi_reduction <maximumf>, %766, %cst_189 [0] : vector<2x128xf32> to vector<128xf32>
    %768 = vector.shape_cast %767 : vector<128xf32> to vector<1x128xf32>
    %769 = vector.extract_strided_slice %431 {offsets = [1, 0], sizes = [2, 128], strides = [1, 1]} : vector<16x128xf32> to vector<2x128xf32>
    %cst_190 = arith.constant dense<0xFF800000> : vector<128xf32>
    %770 = vector.multi_reduction <maximumf>, %769, %cst_190 [0] : vector<2x128xf32> to vector<128xf32>
    %771 = vector.shape_cast %770 : vector<128xf32> to vector<1x128xf32>
    %772 = vector.extract_strided_slice %431 {offsets = [2, 0], sizes = [2, 128], strides = [1, 1]} : vector<16x128xf32> to vector<2x128xf32>
    %cst_191 = arith.constant dense<0xFF800000> : vector<128xf32>
    %773 = vector.multi_reduction <maximumf>, %772, %cst_191 [0] : vector<2x128xf32> to vector<128xf32>
    %774 = vector.shape_cast %773 : vector<128xf32> to vector<1x128xf32>
    %775 = vector.extract_strided_slice %431 {offsets = [4, 0], sizes = [2, 128], strides = [1, 1]} : vector<16x128xf32> to vector<2x128xf32>
    %cst_192 = arith.constant dense<0xFF800000> : vector<128xf32>
    %776 = vector.multi_reduction <maximumf>, %775, %cst_192 [0] : vector<2x128xf32> to vector<128xf32>
    %777 = vector.shape_cast %776 : vector<128xf32> to vector<1x128xf32>
    %778 = vector.extract_strided_slice %431 {offsets = [5, 0], sizes = [2, 128], strides = [1, 1]} : vector<16x128xf32> to vector<2x128xf32>
    %cst_193 = arith.constant dense<0xFF800000> : vector<128xf32>
    %779 = vector.multi_reduction <maximumf>, %778, %cst_193 [0] : vector<2x128xf32> to vector<128xf32>
    %780 = vector.shape_cast %779 : vector<128xf32> to vector<1x128xf32>
    %781 = vector.extract_strided_slice %431 {offsets = [6, 0], sizes = [2, 128], strides = [1, 1]} : vector<16x128xf32> to vector<2x128xf32>
    %cst_194 = arith.constant dense<0xFF800000> : vector<128xf32>
    %782 = vector.multi_reduction <maximumf>, %781, %cst_194 [0] : vector<2x128xf32> to vector<128xf32>
    %783 = vector.shape_cast %782 : vector<128xf32> to vector<1x128xf32>
    %784 = vector.extract_strided_slice %431 {offsets = [8, 0], sizes = [2, 128], strides = [1, 1]} : vector<16x128xf32> to vector<2x128xf32>
    %cst_195 = arith.constant dense<0xFF800000> : vector<128xf32>
    %785 = vector.multi_reduction <maximumf>, %784, %cst_195 [0] : vector<2x128xf32> to vector<128xf32>
    %786 = vector.shape_cast %785 : vector<128xf32> to vector<1x128xf32>
    %787 = vector.extract_strided_slice %431 {offsets = [9, 0], sizes = [2, 128], strides = [1, 1]} : vector<16x128xf32> to vector<2x128xf32>
    %cst_196 = arith.constant dense<0xFF800000> : vector<128xf32>
    %788 = vector.multi_reduction <maximumf>, %787, %cst_196 [0] : vector<2x128xf32> to vector<128xf32>
    %789 = vector.shape_cast %788 : vector<128xf32> to vector<1x128xf32>
    %790 = vector.extract_strided_slice %431 {offsets = [10, 0], sizes = [2, 128], strides = [1, 1]} : vector<16x128xf32> to vector<2x128xf32>
    %cst_197 = arith.constant dense<0xFF800000> : vector<128xf32>
    %791 = vector.multi_reduction <maximumf>, %790, %cst_197 [0] : vector<2x128xf32> to vector<128xf32>
    %792 = vector.shape_cast %791 : vector<128xf32> to vector<1x128xf32>
    %793 = vector.extract_strided_slice %431 {offsets = [12, 0], sizes = [2, 128], strides = [1, 1]} : vector<16x128xf32> to vector<2x128xf32>
    %cst_198 = arith.constant dense<0xFF800000> : vector<128xf32>
    %794 = vector.multi_reduction <maximumf>, %793, %cst_198 [0] : vector<2x128xf32> to vector<128xf32>
    %795 = vector.shape_cast %794 : vector<128xf32> to vector<1x128xf32>
    %796 = vector.extract_strided_slice %431 {offsets = [13, 0], sizes = [2, 128], strides = [1, 1]} : vector<16x128xf32> to vector<2x128xf32>
    %cst_199 = arith.constant dense<0xFF800000> : vector<128xf32>
    %797 = vector.multi_reduction <maximumf>, %796, %cst_199 [0] : vector<2x128xf32> to vector<128xf32>
    %798 = vector.shape_cast %797 : vector<128xf32> to vector<1x128xf32>
    %799 = vector.extract_strided_slice %431 {offsets = [14, 0], sizes = [2, 128], strides = [1, 1]} : vector<16x128xf32> to vector<2x128xf32>
    %cst_200 = arith.constant dense<0xFF800000> : vector<128xf32>
    %800 = vector.multi_reduction <maximumf>, %799, %cst_200 [0] : vector<2x128xf32> to vector<128xf32>
    %801 = vector.shape_cast %800 : vector<128xf32> to vector<1x128xf32>
    %802 = vector.extract_strided_slice %436 {offsets = [0, 0], sizes = [2, 128], strides = [1, 1]} : vector<16x128xf32> to vector<2x128xf32>
    %cst_201 = arith.constant dense<0xFF800000> : vector<128xf32>
    %803 = vector.multi_reduction <maximumf>, %802, %cst_201 [0] : vector<2x128xf32> to vector<128xf32>
    %804 = vector.shape_cast %803 : vector<128xf32> to vector<1x128xf32>
    %805 = vector.extract_strided_slice %436 {offsets = [1, 0], sizes = [2, 128], strides = [1, 1]} : vector<16x128xf32> to vector<2x128xf32>
    %cst_202 = arith.constant dense<0xFF800000> : vector<128xf32>
    %806 = vector.multi_reduction <maximumf>, %805, %cst_202 [0] : vector<2x128xf32> to vector<128xf32>
    %807 = vector.shape_cast %806 : vector<128xf32> to vector<1x128xf32>
    %808 = vector.extract_strided_slice %436 {offsets = [2, 0], sizes = [2, 128], strides = [1, 1]} : vector<16x128xf32> to vector<2x128xf32>
    %cst_203 = arith.constant dense<0xFF800000> : vector<128xf32>
    %809 = vector.multi_reduction <maximumf>, %808, %cst_203 [0] : vector<2x128xf32> to vector<128xf32>
    %810 = vector.shape_cast %809 : vector<128xf32> to vector<1x128xf32>
    %811 = vector.extract_strided_slice %436 {offsets = [4, 0], sizes = [2, 128], strides = [1, 1]} : vector<16x128xf32> to vector<2x128xf32>
    %cst_204 = arith.constant dense<0xFF800000> : vector<128xf32>
    %812 = vector.multi_reduction <maximumf>, %811, %cst_204 [0] : vector<2x128xf32> to vector<128xf32>
    %813 = vector.shape_cast %812 : vector<128xf32> to vector<1x128xf32>
    %814 = vector.extract_strided_slice %436 {offsets = [5, 0], sizes = [2, 128], strides = [1, 1]} : vector<16x128xf32> to vector<2x128xf32>
    %cst_205 = arith.constant dense<0xFF800000> : vector<128xf32>
    %815 = vector.multi_reduction <maximumf>, %814, %cst_205 [0] : vector<2x128xf32> to vector<128xf32>
    %816 = vector.shape_cast %815 : vector<128xf32> to vector<1x128xf32>
    %817 = vector.extract_strided_slice %436 {offsets = [6, 0], sizes = [2, 128], strides = [1, 1]} : vector<16x128xf32> to vector<2x128xf32>
    %cst_206 = arith.constant dense<0xFF800000> : vector<128xf32>
    %818 = vector.multi_reduction <maximumf>, %817, %cst_206 [0] : vector<2x128xf32> to vector<128xf32>
    %819 = vector.shape_cast %818 : vector<128xf32> to vector<1x128xf32>
    %820 = vector.extract_strided_slice %436 {offsets = [8, 0], sizes = [2, 128], strides = [1, 1]} : vector<16x128xf32> to vector<2x128xf32>
    %cst_207 = arith.constant dense<0xFF800000> : vector<128xf32>
    %821 = vector.multi_reduction <maximumf>, %820, %cst_207 [0] : vector<2x128xf32> to vector<128xf32>
    %822 = vector.shape_cast %821 : vector<128xf32> to vector<1x128xf32>
    %823 = vector.extract_strided_slice %436 {offsets = [9, 0], sizes = [2, 128], strides = [1, 1]} : vector<16x128xf32> to vector<2x128xf32>
    %cst_208 = arith.constant dense<0xFF800000> : vector<128xf32>
    %824 = vector.multi_reduction <maximumf>, %823, %cst_208 [0] : vector<2x128xf32> to vector<128xf32>
    %825 = vector.shape_cast %824 : vector<128xf32> to vector<1x128xf32>
    %826 = vector.extract_strided_slice %436 {offsets = [10, 0], sizes = [2, 128], strides = [1, 1]} : vector<16x128xf32> to vector<2x128xf32>
    %cst_209 = arith.constant dense<0xFF800000> : vector<128xf32>
    %827 = vector.multi_reduction <maximumf>, %826, %cst_209 [0] : vector<2x128xf32> to vector<128xf32>
    %828 = vector.shape_cast %827 : vector<128xf32> to vector<1x128xf32>
    %829 = vector.extract_strided_slice %436 {offsets = [12, 0], sizes = [2, 128], strides = [1, 1]} : vector<16x128xf32> to vector<2x128xf32>
    %cst_210 = arith.constant dense<0xFF800000> : vector<128xf32>
    %830 = vector.multi_reduction <maximumf>, %829, %cst_210 [0] : vector<2x128xf32> to vector<128xf32>
    %831 = vector.shape_cast %830 : vector<128xf32> to vector<1x128xf32>
    %832 = vector.extract_strided_slice %436 {offsets = [13, 0], sizes = [2, 128], strides = [1, 1]} : vector<16x128xf32> to vector<2x128xf32>
    %cst_211 = arith.constant dense<0xFF800000> : vector<128xf32>
    %833 = vector.multi_reduction <maximumf>, %832, %cst_211 [0] : vector<2x128xf32> to vector<128xf32>
    %834 = vector.shape_cast %833 : vector<128xf32> to vector<1x128xf32>
    %835 = vector.extract_strided_slice %436 {offsets = [14, 0], sizes = [2, 128], strides = [1, 1]} : vector<16x128xf32> to vector<2x128xf32>
    %cst_212 = arith.constant dense<0xFF800000> : vector<128xf32>
    %836 = vector.multi_reduction <maximumf>, %835, %cst_212 [0] : vector<2x128xf32> to vector<128xf32>
    %837 = vector.shape_cast %836 : vector<128xf32> to vector<1x128xf32>
    %838 = vector.extract_strided_slice %441 {offsets = [0, 0], sizes = [2, 128], strides = [1, 1]} : vector<16x128xf32> to vector<2x128xf32>
    %cst_213 = arith.constant dense<0xFF800000> : vector<128xf32>
    %839 = vector.multi_reduction <maximumf>, %838, %cst_213 [0] : vector<2x128xf32> to vector<128xf32>
    %840 = vector.shape_cast %839 : vector<128xf32> to vector<1x128xf32>
    %841 = vector.extract_strided_slice %441 {offsets = [1, 0], sizes = [2, 128], strides = [1, 1]} : vector<16x128xf32> to vector<2x128xf32>
    %cst_214 = arith.constant dense<0xFF800000> : vector<128xf32>
    %842 = vector.multi_reduction <maximumf>, %841, %cst_214 [0] : vector<2x128xf32> to vector<128xf32>
    %843 = vector.shape_cast %842 : vector<128xf32> to vector<1x128xf32>
    %844 = vector.extract_strided_slice %441 {offsets = [2, 0], sizes = [2, 128], strides = [1, 1]} : vector<16x128xf32> to vector<2x128xf32>
    %cst_215 = arith.constant dense<0xFF800000> : vector<128xf32>
    %845 = vector.multi_reduction <maximumf>, %844, %cst_215 [0] : vector<2x128xf32> to vector<128xf32>
    %846 = vector.shape_cast %845 : vector<128xf32> to vector<1x128xf32>
    %847 = vector.extract_strided_slice %441 {offsets = [4, 0], sizes = [2, 128], strides = [1, 1]} : vector<16x128xf32> to vector<2x128xf32>
    %cst_216 = arith.constant dense<0xFF800000> : vector<128xf32>
    %848 = vector.multi_reduction <maximumf>, %847, %cst_216 [0] : vector<2x128xf32> to vector<128xf32>
    %849 = vector.shape_cast %848 : vector<128xf32> to vector<1x128xf32>
    %850 = vector.extract_strided_slice %441 {offsets = [5, 0], sizes = [2, 128], strides = [1, 1]} : vector<16x128xf32> to vector<2x128xf32>
    %cst_217 = arith.constant dense<0xFF800000> : vector<128xf32>
    %851 = vector.multi_reduction <maximumf>, %850, %cst_217 [0] : vector<2x128xf32> to vector<128xf32>
    %852 = vector.shape_cast %851 : vector<128xf32> to vector<1x128xf32>
    %853 = vector.extract_strided_slice %441 {offsets = [6, 0], sizes = [2, 128], strides = [1, 1]} : vector<16x128xf32> to vector<2x128xf32>
    %cst_218 = arith.constant dense<0xFF800000> : vector<128xf32>
    %854 = vector.multi_reduction <maximumf>, %853, %cst_218 [0] : vector<2x128xf32> to vector<128xf32>
    %855 = vector.shape_cast %854 : vector<128xf32> to vector<1x128xf32>
    %856 = vector.extract_strided_slice %441 {offsets = [8, 0], sizes = [2, 128], strides = [1, 1]} : vector<16x128xf32> to vector<2x128xf32>
    %cst_219 = arith.constant dense<0xFF800000> : vector<128xf32>
    %857 = vector.multi_reduction <maximumf>, %856, %cst_219 [0] : vector<2x128xf32> to vector<128xf32>
    %858 = vector.shape_cast %857 : vector<128xf32> to vector<1x128xf32>
    %859 = vector.extract_strided_slice %441 {offsets = [9, 0], sizes = [2, 128], strides = [1, 1]} : vector<16x128xf32> to vector<2x128xf32>
    %cst_220 = arith.constant dense<0xFF800000> : vector<128xf32>
    %860 = vector.multi_reduction <maximumf>, %859, %cst_220 [0] : vector<2x128xf32> to vector<128xf32>
    %861 = vector.shape_cast %860 : vector<128xf32> to vector<1x128xf32>
    %862 = vector.extract_strided_slice %441 {offsets = [10, 0], sizes = [2, 128], strides = [1, 1]} : vector<16x128xf32> to vector<2x128xf32>
    %cst_221 = arith.constant dense<0xFF800000> : vector<128xf32>
    %863 = vector.multi_reduction <maximumf>, %862, %cst_221 [0] : vector<2x128xf32> to vector<128xf32>
    %864 = vector.shape_cast %863 : vector<128xf32> to vector<1x128xf32>
    %865 = vector.extract_strided_slice %441 {offsets = [12, 0], sizes = [2, 128], strides = [1, 1]} : vector<16x128xf32> to vector<2x128xf32>
    %cst_222 = arith.constant dense<0xFF800000> : vector<128xf32>
    %866 = vector.multi_reduction <maximumf>, %865, %cst_222 [0] : vector<2x128xf32> to vector<128xf32>
    %867 = vector.shape_cast %866 : vector<128xf32> to vector<1x128xf32>
    %868 = vector.extract_strided_slice %441 {offsets = [13, 0], sizes = [2, 128], strides = [1, 1]} : vector<16x128xf32> to vector<2x128xf32>
    %cst_223 = arith.constant dense<0xFF800000> : vector<128xf32>
    %869 = vector.multi_reduction <maximumf>, %868, %cst_223 [0] : vector<2x128xf32> to vector<128xf32>
    %870 = vector.shape_cast %869 : vector<128xf32> to vector<1x128xf32>
    %871 = vector.extract_strided_slice %441 {offsets = [14, 0], sizes = [2, 128], strides = [1, 1]} : vector<16x128xf32> to vector<2x128xf32>
    %cst_224 = arith.constant dense<0xFF800000> : vector<128xf32>
    %872 = vector.multi_reduction <maximumf>, %871, %cst_224 [0] : vector<2x128xf32> to vector<128xf32>
    %873 = vector.shape_cast %872 : vector<128xf32> to vector<1x128xf32>
    %874 = tpu.concatenate %444, %447, %450, %453, %456, %459, %462, %465, %468, %471, %474, %477, %480, %483, %486, %489 in 0 : vector<1x128xf32>, vector<1x128xf32>, vector<1x128xf32>, vector<1x128xf32>, vector<1x128xf32>, vector<1x128xf32>, vector<1x128xf32>, vector<1x128xf32>, vector<1x128xf32>, vector<1x128xf32>, vector<1x128xf32>, vector<1x128xf32>, vector<1x128xf32>, vector<1x128xf32>, vector<1x128xf32>, vector<1x128xf32> -> vector<16x128xf32>
    %875 = tpu.concatenate %492, %495, %498, %501, %504, %507, %510, %513, %516, %519, %522, %525, %528, %531, %534, %537 in 0 : vector<1x128xf32>, vector<1x128xf32>, vector<1x128xf32>, vector<1x128xf32>, vector<1x128xf32>, vector<1x128xf32>, vector<1x128xf32>, vector<1x128xf32>, vector<1x128xf32>, vector<1x128xf32>, vector<1x128xf32>, vector<1x128xf32>, vector<1x128xf32>, vector<1x128xf32>, vector<1x128xf32>, vector<1x128xf32> -> vector<16x128xf32>
    %876 = tpu.concatenate %540, %543, %546, %549, %552, %555, %558, %561, %564, %567, %570, %573, %576, %579, %582, %585 in 0 : vector<1x128xf32>, vector<1x128xf32>, vector<1x128xf32>, vector<1x128xf32>, vector<1x128xf32>, vector<1x128xf32>, vector<1x128xf32>, vector<1x128xf32>, vector<1x128xf32>, vector<1x128xf32>, vector<1x128xf32>, vector<1x128xf32>, vector<1x128xf32>, vector<1x128xf32>, vector<1x128xf32>, vector<1x128xf32> -> vector<16x128xf32>
    %877 = tpu.concatenate %588, %591, %594, %597, %600, %603, %606, %609, %612, %615, %618, %621, %624, %627, %630, %633 in 0 : vector<1x128xf32>, vector<1x128xf32>, vector<1x128xf32>, vector<1x128xf32>, vector<1x128xf32>, vector<1x128xf32>, vector<1x128xf32>, vector<1x128xf32>, vector<1x128xf32>, vector<1x128xf32>, vector<1x128xf32>, vector<1x128xf32>, vector<1x128xf32>, vector<1x128xf32>, vector<1x128xf32>, vector<1x128xf32> -> vector<16x128xf32>
    %878 = tpu.concatenate %636, %639, %642, %645, %648, %651, %654, %657, %660, %663, %666, %669, %672, %675, %678, %681 in 0 : vector<1x128xf32>, vector<1x128xf32>, vector<1x128xf32>, vector<1x128xf32>, vector<1x128xf32>, vector<1x128xf32>, vector<1x128xf32>, vector<1x128xf32>, vector<1x128xf32>, vector<1x128xf32>, vector<1x128xf32>, vector<1x128xf32>, vector<1x128xf32>, vector<1x128xf32>, vector<1x128xf32>, vector<1x128xf32> -> vector<16x128xf32>
    %879 = tpu.concatenate %684, %687, %690, %693, %696, %699, %702, %705, %708, %711, %714, %717, %720, %723, %726, %729 in 0 : vector<1x128xf32>, vector<1x128xf32>, vector<1x128xf32>, vector<1x128xf32>, vector<1x128xf32>, vector<1x128xf32>, vector<1x128xf32>, vector<1x128xf32>, vector<1x128xf32>, vector<1x128xf32>, vector<1x128xf32>, vector<1x128xf32>, vector<1x128xf32>, vector<1x128xf32>, vector<1x128xf32>, vector<1x128xf32> -> vector<16x128xf32>
    %880 = tpu.concatenate %732, %735, %738, %741, %744, %747, %750, %753, %756, %759, %762, %765, %768, %771, %774, %777 in 0 : vector<1x128xf32>, vector<1x128xf32>, vector<1x128xf32>, vector<1x128xf32>, vector<1x128xf32>, vector<1x128xf32>, vector<1x128xf32>, vector<1x128xf32>, vector<1x128xf32>, vector<1x128xf32>, vector<1x128xf32>, vector<1x128xf32>, vector<1x128xf32>, vector<1x128xf32>, vector<1x128xf32>, vector<1x128xf32> -> vector<16x128xf32>
    %881 = tpu.concatenate %780, %783, %786, %789, %792, %795, %798, %801, %804, %807, %810, %813, %816, %819, %822, %825 in 0 : vector<1x128xf32>, vector<1x128xf32>, vector<1x128xf32>, vector<1x128xf32>, vector<1x128xf32>, vector<1x128xf32>, vector<1x128xf32>, vector<1x128xf32>, vector<1x128xf32>, vector<1x128xf32>, vector<1x128xf32>, vector<1x128xf32>, vector<1x128xf32>, vector<1x128xf32>, vector<1x128xf32>, vector<1x128xf32> -> vector<16x128xf32>
    %882 = tpu.concatenate %828, %831, %834, %837, %840, %843, %846, %849, %852, %855, %858, %861, %864, %867, %870, %873 in 0 : vector<1x128xf32>, vector<1x128xf32>, vector<1x128xf32>, vector<1x128xf32>, vector<1x128xf32>, vector<1x128xf32>, vector<1x128xf32>, vector<1x128xf32>, vector<1x128xf32>, vector<1x128xf32>, vector<1x128xf32>, vector<1x128xf32>, vector<1x128xf32>, vector<1x128xf32>, vector<1x128xf32>, vector<1x128xf32> -> vector<16x128xf32>
    %883 = tpu.concatenate %874, %875, %876, %877, %878, %879, %880, %881, %882 in 0 : vector<16x128xf32>, vector<16x128xf32>, vector<16x128xf32>, vector<16x128xf32>, vector<16x128xf32>, vector<16x128xf32>, vector<16x128xf32>, vector<16x128xf32>, vector<16x128xf32> -> vector<144x128xf32>
    %884 = tpu.concatenate %51, %144, %381, %883 in 0 : vector<1x128xf32>, vector<16x128xf32>, vector<64x128xf32>, vector<144x128xf32> -> vector<225x128xf32>
    %c0_225 = arith.constant 0 : index
    %c0_226 = arith.constant 0 : index
    %885 = vector.load %arg2[%c0_225, %c0_226] : memref<225x128xf32, #tpu.memory_space<vmem>>, vector<225x128xf32>
    tpu.vector_store %arg2[%c0_225, %c0_226], %884 {strides = array<i32>} : memref<225x128xf32, #tpu.memory_space<vmem>>, vector<225x128xf32>,
    return
  }
  func.func @transform_0(%arg0: i32) -> (i32, i32) {
    %c0_i32 = arith.constant 0 : i32
    %c0_i32_0 = arith.constant 0 : i32
    return %arg0, %c0_i32 : i32, i32
  }
  func.func @transform_1(%arg0: i32) -> (i32, i32) {
    %c0_i32 = arith.constant 0 : i32
    %c0_i32_0 = arith.constant 0 : i32
    return %c0_i32, %arg0 : i32, i32
  }
}

</mosaic_0001>

<llo_original>
// kernel: tpu_custom_call.1
$region0: #{tpu_custom_call.1}
  #allocation0 [shape = 'u32[]', space=smem, size = 0x4, offset = 0x4, fixed_abs, tag = 'smem constant byte address 0x4 - core index']
  #allocation1 [shape = 'u32[144,128]{1,0:T(1,128)}', space=vmem, size = 0x12000, scoped, tag = 'internal scratch']
  %s0 = inlined_call_operand.hbm [shape: f32[128,256], index: 0, kind: input, shape index: {}]
  %s1 = inlined_call_operand.hbm [shape: f32[225,128], index: 1, kind: output, shape index: {}]
  %s2 = sld [smem:[#allocation0]]
  $region18: #{tpu_custom_call.1} parent=0
    _
  %s4 = ssub.s32 1, %s2
  %s5 = scalar_select 0, %s4, %s2
  $region1: #{tpu_custom_call.1} parent=0
    #allocation2 [shape = 'u8[131072]{0}', space=vmem, size = 0x20000, scoped, tag = 'input window, operand 0, single buffered']
    #allocation3 [shape = 's32[1]{0}', space=sflag, size = 0x4, scoped, tag = 'scoped memory for tpu_custom_call.1']
    #allocation4 [shape = 's32[1]{0}', space=sflag, size = 0x4, scoped, tag = 'scoped memory for tpu_custom_call.1']
    #allocation5 [shape = 'u8[118784]{0}', space=vmem, size = 0x1d000, scoped, tag = 'output window, operand 0, single buffered']
    %6 = vsyncpa [#allocation3], 0
    %7 = vsyncpa [#allocation4], 0
    // Predicated region
    $region2: #{tpu_custom_call.1} parent=1 // pred_check
      _
    $region3: #{tpu_custom_call.1} parent=1 // pred_check_branch
      %9 = sbr.rel (0) target = $region5
    $region4: #{tpu_custom_call.1} parent=1 // pred_region
      %s11 = ssub.s32 4096, 4096
      %12 = vsyncadd [#allocation3], %s11
      %s13 = sshll.u32 [#allocation2], 4
      %s14 = int_to_ptr.vmem [resolvable:$true] %s13
      %19 = dma.hbm_to_vmem [thread:$0]  %s0, 4096, %s14, [#allocation3], 256, 256, 16
    $region5: #{tpu_custom_call.1} parent=1 // pred_fallthru
      _
    // Predicated region
    $region6: #{tpu_custom_call.1} parent=1 // pred_check
      _
    $region7: #{tpu_custom_call.1} parent=1 // pred_check_branch
      %21 = sbr.rel (0) target = $region9
    $region8: #{tpu_custom_call.1} parent=1 // pred_region
      %22 = dma.done [#allocation3], 4096
    $region9: #{tpu_custom_call.1} parent=1 // pred_fallthru
      _
    %v23 = vld [vmem:[#allocation2] sm:$0xff]
    %v24 = vld [vmem:[#allocation2 + $0x8] sm:$0xff]
    %v25 = vld [vmem:[#allocation2 + $0x10] sm:$0xff]
    %v26 = vld [vmem:[#allocation2 + $0x18] sm:$0xff]
    %v27 = vld [vmem:[#allocation2 + $0x20] sm:$0xff]
    %v28 = vld [vmem:[#allocation2 + $0x28] sm:$0xff]
    %v29 = vld [vmem:[#allocation2 + $0x30] sm:$0xff]
    %v30 = vld [vmem:[#allocation2 + $0x38] sm:$0xff]
    %v31 = vld [vmem:[#allocation2 + $0x40] sm:$0xff]
    %v32 = vld [vmem:[#allocation2 + $0x48] sm:$0xff]
    %v33 = vld [vmem:[#allocation2 + $0x50] sm:$0xff]
    %v34 = vld [vmem:[#allocation2 + $0x58] sm:$0xff]
    %v35 = vld [vmem:[#allocation2 + $0x60] sm:$0xff]
    %v36 = vld [vmem:[#allocation2 + $0x68] sm:$0xff]
    %v37 = vld [vmem:[#allocation2 + $0x70] sm:$0xff]
    %v38 = vld [vmem:[#allocation2 + $0x78] sm:$0xff]
    %v39 = vld [vmem:[#allocation2 + $0x80] sm:$0xff]
    %v40 = vld [vmem:[#allocation2 + $0x88] sm:$0xff]
    %v41 = vld [vmem:[#allocation2 + $0x90] sm:$0xff]
    %v42 = vld [vmem:[#allocation2 + $0x98] sm:$0xff]
    %v43 = vld [vmem:[#allocation2 + $0xa0] sm:$0xff]
    %v44 = vld [vmem:[#allocation2 + $0xa8] sm:$0xff]
    %v45 = vld [vmem:[#allocation2 + $0xb0] sm:$0xff]
    %v46 = vld [vmem:[#allocation2 + $0xb8] sm:$0xff]
    %v47 = vld [vmem:[#allocation2 + $0xc0] sm:$0xff]
    %v48 = vld [vmem:[#allocation2 + $0xc8] sm:$0xff]
    %v49 = vld [vmem:[#allocation2 + $0xd0] sm:$0xff]
    %v50 = vld [vmem:[#allocation2 + $0xd8] sm:$0xff]
    %v51 = vld [vmem:[#allocation2 + $0xe0] sm:$0xff]
    %v52 = vld [vmem:[#allocation2 + $0xe8] sm:$0xff]
    %v53 = vld [vmem:[#allocation2 + $0xf0] sm:$0xff]
    %v54 = vld [vmem:[#allocation2 + $0xf8] sm:$0xff]
    %55 = vxpose.xlu0.b32.start [1/16] %v23, 128
    %56 = vxpose.xlu0.b32.cont [2/16] %v25, 128
    %57 = vxpose.xlu0.b32.cont [3/16] %v27, 128
    %58 = vxpose.xlu0.b32.cont [4/16] %v29, 128
    %59 = vxpose.xlu0.b32.cont [5/16] %v31, 128
    %60 = vxpose.xlu0.b32.cont [6/16] %v33, 128
    %61 = vxpose.xlu0.b32.cont [7/16] %v35, 128
    %62 = vxpose.xlu0.b32.cont [8/16] %v37, 128
    %63 = vxpose.xlu0.b32.cont [9/16] %v39, 128
    %64 = vxpose.xlu0.b32.cont [10/16] %v41, 128
    %65 = vxpose.xlu0.b32.cont [11/16] %v43, 128
    %66 = vxpose.xlu0.b32.cont [12/16] %v45, 128
    %67 = vxpose.xlu0.b32.cont [13/16] %v47, 128
    %68 = vxpose.xlu0.b32.cont [14/16] %v49, 128
    %69 = vxpose.xlu0.b32.cont [15/16] %v51, 128
    %70 = vxpose.xlu0.b32.end [16/16] %v53, 128
    %v71 = vpop.trf.xlu0
    %v72 = vpop.trf.xlu0
    %v73 = vpop.trf.xlu0
    %v74 = vpop.trf.xlu0
    %v75 = vpop.trf.xlu0
    %v76 = vpop.trf.xlu0
    %v77 = vpop.trf.xlu0
    %v78 = vpop.trf.xlu0
    %v79 = vpop.trf.xlu0
    %v80 = vpop.trf.xlu0
    %v81 = vpop.trf.xlu0
    %v82 = vpop.trf.xlu0
    %v83 = vpop.trf.xlu0
    %v84 = vpop.trf.xlu0
    %v85 = vpop.trf.xlu0
    %v86 = vpop.trf.xlu0
    %87 = vxpose.xlu0.b32.start [1/16] %v24, 128
    %88 = vxpose.xlu0.b32.cont [2/16] %v26, 128
    %89 = vxpose.xlu0.b32.cont [3/16] %v28, 128
    %90 = vxpose.xlu0.b32.cont [4/16] %v30, 128
    %91 = vxpose.xlu0.b32.cont [5/16] %v32, 128
    %92 = vxpose.xlu0.b32.cont [6/16] %v34, 128
    %93 = vxpose.xlu0.b32.cont [7/16] %v36, 128
    %94 = vxpose.xlu0.b32.cont [8/16] %v38, 128
    %95 = vxpose.xlu0.b32.cont [9/16] %v40, 128
    %96 = vxpose.xlu0.b32.cont [10/16] %v42, 128
    %97 = vxpose.xlu0.b32.cont [11/16] %v44, 128
    %98 = vxpose.xlu0.b32.cont [12/16] %v46, 128
    %99 = vxpose.xlu0.b32.cont [13/16] %v48, 128
    %100 = vxpose.xlu0.b32.cont [14/16] %v50, 128
    %101 = vxpose.xlu0.b32.cont [15/16] %v52, 128
    %102 = vxpose.xlu0.b32.end [16/16] %v54, 128
    %v103 = vpop.trf.xlu0
    %v104 = vpop.trf.xlu0
    %v105 = vpop.trf.xlu0
    %v106 = vpop.trf.xlu0
    %v107 = vpop.trf.xlu0
    %v108 = vpop.trf.xlu0
    %v109 = vpop.trf.xlu0
    %v110 = vpop.trf.xlu0
    %v111 = vpop.trf.xlu0
    %v112 = vpop.trf.xlu0
    %v113 = vpop.trf.xlu0
    %v114 = vpop.trf.xlu0
    %v115 = vpop.trf.xlu0
    %v116 = vpop.trf.xlu0
    %v117 = vpop.trf.xlu0
    %v118 = vpop.trf.xlu0
    %v119 = vmax.f32 %v71, %v73
    %v120 = vmax.f32 %v72, %v74
    %v121 = vmax.f32 %v119, %v75
    %v122 = vmax.f32 %v120, %v76
    %v123 = vmax.f32 %v121, %v77
    %v124 = vmax.f32 %v122, %v78
    %v125 = vmax.f32 %v123, %v79
    %v126 = vmax.f32 %v124, %v80
    %v127 = vmax.f32 %v125, %v81
    %v128 = vmax.f32 %v126, %v82
    %v129 = vmax.f32 %v127, %v83
    %v130 = vmax.f32 %v128, %v84
    %v131 = vmax.f32 %v129, %v85
    %v132 = vmax.f32 %v130, %v86
    %v133 = vmax.f32 %v131, %v103
    %v134 = vmax.f32 %v132, %v104
    %v135 = vmax.f32 %v133, %v105
    %v136 = vmax.f32 %v134, %v106
    %v137 = vmax.f32 %v135, %v107
    %v138 = vmax.f32 %v136, %v108
    %v139 = vmax.f32 %v137, %v109
    %v140 = vmax.f32 %v138, %v110
    %v141 = vmax.f32 %v139, %v111
    %v142 = vmax.f32 %v140, %v112
    %v143 = vmax.f32 %v141, %v113
    %v144 = vmax.f32 %v142, %v114
    %v145 = vmax.f32 %v143, %v115
    %v146 = vmax.f32 %v144, %v116
    %v147 = vmax.f32 %v145, %v117
    %v148 = vmax.f32 %v146, %v118
    %v149 = vmax.f32 %v147, %v148
    %v150 = vrot.slane %v149, 4
    %v151 = vmax.f32 %v149, %v150
    %v152 = vrot.slane %v151, 2
    %v153 = vmax.f32 %v151, %v152
    %v154 = vrot.slane %v153, 1
    %v155 = vmax.f32 %v153, %v154
    %v156 = vmax.f32 %v79, %v81
    %v157 = vmax.f32 %v80, %v82
    %v158 = vmax.f32 %v156, %v83
    %v159 = vmax.f32 %v157, %v84
    %v160 = vmax.f32 %v158, %v85
    %v161 = vmax.f32 %v159, %v86
    %v162 = vmax.f32 %v103, %v105
    %v163 = vmax.f32 %v104, %v106
    %v164 = vmax.f32 %v162, %v107
    %v165 = vmax.f32 %v163, %v108
    %v166 = vmax.f32 %v164, %v109
    %v167 = vmax.f32 %v165, %v110
    %v168 = vmax.f32 %v111, %v113
    %v169 = vmax.f32 %v112, %v114
    %v170 = vmax.f32 %v168, %v115
    %v171 = vmax.f32 %v169, %v116
    %v172 = vmax.f32 %v170, %v117
    %v173 = vmax.f32 %v171, %v118
    %vm174 = vcmask 1043456
    %v175 = vsel %vm174, %v123, -inf
    %v176 = vrot.slane %v175, 4
    %v177 = vmax.f32 %v175, %v176
    %v178 = vrot.slane %v177, 2
    %v179 = vmax.f32 %v177, %v178
    %v180 = vrot.slane %v179, 1
    %v181 = vmax.f32 %v179, %v180
    %vm182 = vcmask 1047556
    %v183 = vsel %vm182, %v123, -inf
    %v184 = vrot.slane %v183, 4
    %v185 = vmax.f32 %v183, %v184
    %v186 = vrot.slane %v185, 2
    %v187 = vmax.f32 %v185, %v186
    %v188 = vrot.slane %v187, 1
    %v189 = vmax.f32 %v187, %v188
    %v190 = vsel %vm174, %v124, -inf
    %v191 = vrot.slane %v190, 4
    %v192 = vmax.f32 %v190, %v191
    %v193 = vrot.slane %v192, 2
    %v194 = vmax.f32 %v192, %v193
    %v195 = vrot.slane %v194, 1
    %v196 = vmax.f32 %v194, %v195
    %v197 = vsel %vm182, %v124, -inf
    %v198 = vrot.slane %v197, 4
    %v199 = vmax.f32 %v197, %v198
    %v200 = vrot.slane %v199, 2
    %v201 = vmax.f32 %v199, %v200
    %v202 = vrot.slane %v201, 1
    %v203 = vmax.f32 %v201, %v202
    %v204 = vsel %vm174, %v160, -inf
    %v205 = vrot.slane %v204, 4
    %v206 = vmax.f32 %v204, %v205
    %v207 = vrot.slane %v206, 2
    %v208 = vmax.f32 %v206, %v207
    %v209 = vrot.slane %v208, 1
    %v210 = vmax.f32 %v208, %v209
    %v211 = vsel %vm182, %v160, -inf
    %v212 = vrot.slane %v211, 4
    %v213 = vmax.f32 %v211, %v212
    %v214 = vrot.slane %v213, 2
    %v215 = vmax.f32 %v213, %v214
    %v216 = vrot.slane %v215, 1
    %v217 = vmax.f32 %v215, %v216
    %v218 = vsel %vm174, %v161, -inf
    %v219 = vrot.slane %v218, 4
    %v220 = vmax.f32 %v218, %v219
    %v221 = vrot.slane %v220, 2
    %v222 = vmax.f32 %v220, %v221
    %v223 = vrot.slane %v222, 1
    %v224 = vmax.f32 %v222, %v223
    %v225 = vsel %vm182, %v161, -inf
    %v226 = vrot.slane %v225, 4
    %v227 = vmax.f32 %v225, %v226
    %v228 = vrot.slane %v227, 2
    %v229 = vmax.f32 %v227, %v228
    %v230 = vrot.slane %v229, 1
    %v231 = vmax.f32 %v229, %v230
    %v232 = vsel %vm174, %v166, -inf
    %v233 = vrot.slane %v232, 4
    %v234 = vmax.f32 %v232, %v233
    %v235 = vrot.slane %v234, 2
    %v236 = vmax.f32 %v234, %v235
    %v237 = vrot.slane %v236, 1
    %v238 = vmax.f32 %v236, %v237
    %v239 = vsel %vm182, %v166, -inf
    %v240 = vrot.slane %v239, 4
    %v241 = vmax.f32 %v239, %v240
    %v242 = vrot.slane %v241, 2
    %v243 = vmax.f32 %v241, %v242
    %v244 = vrot.slane %v243, 1
    %v245 = vmax.f32 %v243, %v244
    %v246 = vsel %vm174, %v167, -inf
    %v247 = vrot.slane %v246, 4
    %v248 = vmax.f32 %v246, %v247
    %v249 = vrot.slane %v248, 2
    %v250 = vmax.f32 %v248, %v249
    %v251 = vrot.slane %v250, 1
    %v252 = vmax.f32 %v250, %v251
    %v253 = vsel %vm182, %v167, -inf
    %v254 = vrot.slane %v253, 4
    %v255 = vmax.f32 %v253, %v254
    %v256 = vrot.slane %v255, 2
    %v257 = vmax.f32 %v255, %v256
    %v258 = vrot.slane %v257, 1
    %v259 = vmax.f32 %v257, %v258
    %v260 = vsel %vm174, %v172, -inf
    %v261 = vrot.slane %v260, 4
    %v262 = vmax.f32 %v260, %v261
    %v263 = vrot.slane %v262, 2
    %v264 = vmax.f32 %v262, %v263
    %v265 = vrot.slane %v264, 1
    %v266 = vmax.f32 %v264, %v265
    %v267 = vsel %vm182, %v172, -inf
    %v268 = vrot.slane %v267, 4
    %v269 = vmax.f32 %v267, %v268
    %v270 = vrot.slane %v269, 2
    %v271 = vmax.f32 %v269, %v270
    %v272 = vrot.slane %v271, 1
    %v273 = vmax.f32 %v271, %v272
    %v274 = vsel %vm174, %v173, -inf
    %v275 = vrot.slane %v274, 4
    %v276 = vmax.f32 %v274, %v275
    %v277 = vrot.slane %v276, 2
    %v278 = vmax.f32 %v276, %v277
    %v279 = vrot.slane %v278, 1
    %v280 = vmax.f32 %v278, %v279
    %v281 = vsel %vm182, %v173, -inf
    %v282 = vrot.slane %v281, 4
    %v283 = vmax.f32 %v281, %v282
    %v284 = vrot.slane %v283, 2
    %v285 = vmax.f32 %v283, %v284
    %v286 = vrot.slane %v285, 1
    %v287 = vmax.f32 %v285, %v286
    %vm288 = vcmask 1040384
    %v289 = vsel %vm288, %v181, %v189
    %vm290 = vcmask 1041408
    %v291 = vsel %vm290, %v289, %v196
    %vm292 = vcmask 1042432
    %v293 = vsel %vm292, %v291, %v203
    %v294 = vsel %vm174, %v293, %v210
    %vm295 = vcmask 1044480
    %v296 = vsel %vm295, %v294, %v217
    %vm297 = vcmask 1045504
    %v298 = vsel %vm297, %v296, %v224
    %vm299 = vcmask 1046528
    %v300 = vsel %vm299, %v298, %v231
    %v301 = vsel %vm288, %v238, %v245
    %v302 = vsel %vm290, %v301, %v252
    %v303 = vsel %vm292, %v302, %v259
    %v304 = vsel %vm174, %v303, %v266
    %v305 = vsel %vm295, %v304, %v273
    %v306 = vsel %vm297, %v305, %v280
    %v307 = vsel %vm299, %v306, %v287
    %v308 = vmax.f32 %v75, %v77
    %v309 = vmax.f32 %v76, %v78
    %v310 = vmax.f32 %v83, %v85
    %v311 = vmax.f32 %v84, %v86
    %v312 = vmax.f32 %v107, %v109
    %v313 = vmax.f32 %v108, %v110
    %v314 = vmax.f32 %v115, %v117
    %v315 = vmax.f32 %v116, %v118
    %v316 = vsel %vm290, %v119, -inf
    %v317 = vrot.slane %v316, 4
    %v318 = vmax.f32 %v316, %v317
    %v319 = vrot.slane %v318, 2
    %v320 = vmax.f32 %v318, %v319
    %v321 = vrot.slane %v320, 1
    %v322 = vmax.f32 %v320, %v321
    %vm323 = vcmask 1043458
    %v324 = vsel %vm323, %v119, -inf
    %v325 = vrot.slane %v324, 4
    %v326 = vmax.f32 %v324, %v325
    %v327 = vrot.slane %v326, 2
    %v328 = vmax.f32 %v326, %v327
    %v329 = vrot.slane %v328, 1
    %v330 = vmax.f32 %v328, %v329
    %vm331 = vcmask 1045508
    %v332 = vsel %vm331, %v119, -inf
    %v333 = vrot.slane %v332, 4
    %v334 = vmax.f32 %v332, %v333
    %v335 = vrot.slane %v334, 2
    %v336 = vmax.f32 %v334, %v335
    %v337 = vrot.slane %v336, 1
    %v338 = vmax.f32 %v336, %v337
    %vm339 = vcmask 1047558
    %v340 = vsel %vm339, %v119, -inf
    %v341 = vrot.slane %v340, 4
    %v342 = vmax.f32 %v340, %v341
    %v343 = vrot.slane %v342, 2
    %v344 = vmax.f32 %v342, %v343
    %v345 = vrot.slane %v344, 1
    %v346 = vmax.f32 %v344, %v345
    %v347 = vsel %vm290, %v120, -inf
    %v348 = vrot.slane %v347, 4
    %v349 = vmax.f32 %v347, %v348
    %v350 = vrot.slane %v349, 2
    %v351 = vmax.f32 %v349, %v350
    %v352 = vrot.slane %v351, 1
    %v353 = vmax.f32 %v351, %v352
    %v354 = vsel %vm323, %v120, -inf
    %v355 = vrot.slane %v354, 4
    %v356 = vmax.f32 %v354, %v355
    %v357 = vrot.slane %v356, 2
    %v358 = vmax.f32 %v356, %v357
    %v359 = vrot.slane %v358, 1
    %v360 = vmax.f32 %v358, %v359
    %v361 = vsel %vm331, %v120, -inf
    %v362 = vrot.slane %v361, 4
    %v363 = vmax.f32 %v361, %v362
    %v364 = vrot.slane %v363, 2
    %v365 = vmax.f32 %v363, %v364
    %v366 = vrot.slane %v365, 1
    %v367 = vmax.f32 %v365, %v366
    %v368 = vsel %vm339, %v120, -inf
    %v369 = vrot.slane %v368, 4
    %v370 = vmax.f32 %v368, %v369
    %v371 = vrot.slane %v370, 2
    %v372 = vmax.f32 %v370, %v371
    %v373 = vrot.slane %v372, 1
    %v374 = vmax.f32 %v372, %v373
    %v375 = vsel %vm290, %v308, -inf
    %v376 = vrot.slane %v375, 4
    %v377 = vmax.f32 %v375, %v376
    %v378 = vrot.slane %v377, 2
    %v379 = vmax.f32 %v377, %v378
    %v380 = vrot.slane %v379, 1
    %v381 = vmax.f32 %v379, %v380
    %v382 = vsel %vm323, %v308, -inf
    %v383 = vrot.slane %v382, 4
    %v384 = vmax.f32 %v382, %v383
    %v385 = vrot.slane %v384, 2
    %v386 = vmax.f32 %v384, %v385
    %v387 = vrot.slane %v386, 1
    %v388 = vmax.f32 %v386, %v387
    %v389 = vsel %vm331, %v308, -inf
    %v390 = vrot.slane %v389, 4
    %v391 = vmax.f32 %v389, %v390
    %v392 = vrot.slane %v391, 2
    %v393 = vmax.f32 %v391, %v392
    %v394 = vrot.slane %v393, 1
    %v395 = vmax.f32 %v393, %v394
    %v396 = vsel %vm339, %v308, -inf
    %v397 = vrot.slane %v396, 4
    %v398 = vmax.f32 %v396, %v397
    %v399 = vrot.slane %v398, 2
    %v400 = vmax.f32 %v398, %v399
    %v401 = vrot.slane %v400, 1
    %v402 = vmax.f32 %v400, %v401
    %v403 = vsel %vm290, %v309, -inf
    %v404 = vrot.slane %v403, 4
    %v405 = vmax.f32 %v403, %v404
    %v406 = vrot.slane %v405, 2
    %v407 = vmax.f32 %v405, %v406
    %v408 = vrot.slane %v407, 1
    %v409 = vmax.f32 %v407, %v408
    %v410 = vsel %vm323, %v309, -inf
    %v411 = vrot.slane %v410, 4
    %v412 = vmax.f32 %v410, %v411
    %v413 = vrot.slane %v412, 2
    %v414 = vmax.f32 %v412, %v413
    %v415 = vrot.slane %v414, 1
    %v416 = vmax.f32 %v414, %v415
    %v417 = vsel %vm331, %v309, -inf
    %v418 = vrot.slane %v417, 4
    %v419 = vmax.f32 %v417, %v418
    %v420 = vrot.slane %v419, 2
    %v421 = vmax.f32 %v419, %v420
    %v422 = vrot.slane %v421, 1
    %v423 = vmax.f32 %v421, %v422
    %v424 = vsel %vm339, %v309, -inf
    %v425 = vrot.slane %v424, 4
    %v426 = vmax.f32 %v424, %v425
    %v427 = vrot.slane %v426, 2
    %v428 = vmax.f32 %v426, %v427
    %v429 = vrot.slane %v428, 1
    %v430 = vmax.f32 %v428, %v429
    %v431 = vsel %vm290, %v156, -inf
    %v432 = vrot.slane %v431, 4
    %v433 = vmax.f32 %v431, %v432
    %v434 = vrot.slane %v433, 2
    %v435 = vmax.f32 %v433, %v434
    %v436 = vrot.slane %v435, 1
    %v437 = vmax.f32 %v435, %v436
    %v438 = vsel %vm323, %v156, -inf
    %v439 = vrot.slane %v438, 4
    %v440 = vmax.f32 %v438, %v439
    %v441 = vrot.slane %v440, 2
    %v442 = vmax.f32 %v440, %v441
    %v443 = vrot.slane %v442, 1
    %v444 = vmax.f32 %v442, %v443
    %v445 = vsel %vm331, %v156, -inf
    %v446 = vrot.slane %v445, 4
    %v447 = vmax.f32 %v445, %v446
    %v448 = vrot.slane %v447, 2
    %v449 = vmax.f32 %v447, %v448
    %v450 = vrot.slane %v449, 1
    %v451 = vmax.f32 %v449, %v450
    %v452 = vsel %vm339, %v156, -inf
    %v453 = vrot.slane %v452, 4
    %v454 = vmax.f32 %v452, %v453
    %v455 = vrot.slane %v454, 2
    %v456 = vmax.f32 %v454, %v455
    %v457 = vrot.slane %v456, 1
    %v458 = vmax.f32 %v456, %v457
    %v459 = vsel %vm290, %v157, -inf
    %v460 = vrot.slane %v459, 4
    %v461 = vmax.f32 %v459, %v460
    %v462 = vrot.slane %v461, 2
    %v463 = vmax.f32 %v461, %v462
    %v464 = vrot.slane %v463, 1
    %v465 = vmax.f32 %v463, %v464
    %v466 = vsel %vm323, %v157, -inf
    %v467 = vrot.slane %v466, 4
    %v468 = vmax.f32 %v466, %v467
    %v469 = vrot.slane %v468, 2
    %v470 = vmax.f32 %v468, %v469
    %v471 = vrot.slane %v470, 1
    %v472 = vmax.f32 %v470, %v471
    %v473 = vsel %vm331, %v157, -inf
    %v474 = vrot.slane %v473, 4
    %v475 = vmax.f32 %v473, %v474
    %v476 = vrot.slane %v475, 2
    %v477 = vmax.f32 %v475, %v476
    %v478 = vrot.slane %v477, 1
    %v479 = vmax.f32 %v477, %v478
    %v480 = vsel %vm339, %v157, -inf
    %v481 = vrot.slane %v480, 4
    %v482 = vmax.f32 %v480, %v481
    %v483 = vrot.slane %v482, 2
    %v484 = vmax.f32 %v482, %v483
    %v485 = vrot.slane %v484, 1
    %v486 = vmax.f32 %v484, %v485
    %v487 = vsel %vm290, %v310, -inf
    %v488 = vrot.slane %v487, 4
    %v489 = vmax.f32 %v487, %v488
    %v490 = vrot.slane %v489, 2
    %v491 = vmax.f32 %v489, %v490
    %v492 = vrot.slane %v491, 1
    %v493 = vmax.f32 %v491, %v492
    %v494 = vsel %vm323, %v310, -inf
    %v495 = vrot.slane %v494, 4
    %v496 = vmax.f32 %v494, %v495
    %v497 = vrot.slane %v496, 2
    %v498 = vmax.f32 %v496, %v497
    %v499 = vrot.slane %v498, 1
    %v500 = vmax.f32 %v498, %v499
    %v501 = vsel %vm331, %v310, -inf
    %v502 = vrot.slane %v501, 4
    %v503 = vmax.f32 %v501, %v502
    %v504 = vrot.slane %v503, 2
    %v505 = vmax.f32 %v503, %v504
    %v506 = vrot.slane %v505, 1
    %v507 = vmax.f32 %v505, %v506
    %v508 = vsel %vm339, %v310, -inf
    %v509 = vrot.slane %v508, 4
    %v510 = vmax.f32 %v508, %v509
    %v511 = vrot.slane %v510, 2
    %v512 = vmax.f32 %v510, %v511
    %v513 = vrot.slane %v512, 1
    %v514 = vmax.f32 %v512, %v513
    %v515 = vsel %vm290, %v311, -inf
    %v516 = vrot.slane %v515, 4
    %v517 = vmax.f32 %v515, %v516
    %v518 = vrot.slane %v517, 2
    %v519 = vmax.f32 %v517, %v518
    %v520 = vrot.slane %v519, 1
    %v521 = vmax.f32 %v519, %v520
    %v522 = vsel %vm323, %v311, -inf
    %v523 = vrot.slane %v522, 4
    %v524 = vmax.f32 %v522, %v523
    %v525 = vrot.slane %v524, 2
    %v526 = vmax.f32 %v524, %v525
    %v527 = vrot.slane %v526, 1
    %v528 = vmax.f32 %v526, %v527
    %v529 = vsel %vm331, %v311, -inf
    %v530 = vrot.slane %v529, 4
    %v531 = vmax.f32 %v529, %v530
    %v532 = vrot.slane %v531, 2
    %v533 = vmax.f32 %v531, %v532
    %v534 = vrot.slane %v533, 1
    %v535 = vmax.f32 %v533, %v534
    %v536 = vsel %vm339, %v311, -inf
    %v537 = vrot.slane %v536, 4
    %v538 = vmax.f32 %v536, %v537
    %v539 = vrot.slane %v538, 2
    %v540 = vmax.f32 %v538, %v539
    %v541 = vrot.slane %v540, 1
    %v542 = vmax.f32 %v540, %v541
    %v543 = vsel %vm290, %v162, -inf
    %v544 = vrot.slane %v543, 4
    %v545 = vmax.f32 %v543, %v544
    %v546 = vrot.slane %v545, 2
    %v547 = vmax.f32 %v545, %v546
    %v548 = vrot.slane %v547, 1
    %v549 = vmax.f32 %v547, %v548
    %v550 = vsel %vm323, %v162, -inf
    %v551 = vrot.slane %v550, 4
    %v552 = vmax.f32 %v550, %v551
    %v553 = vrot.slane %v552, 2
    %v554 = vmax.f32 %v552, %v553
    %v555 = vrot.slane %v554, 1
    %v556 = vmax.f32 %v554, %v555
    %v557 = vsel %vm331, %v162, -inf
    %v558 = vrot.slane %v557, 4
    %v559 = vmax.f32 %v557, %v558
    %v560 = vrot.slane %v559, 2
    %v561 = vmax.f32 %v559, %v560
    %v562 = vrot.slane %v561, 1
    %v563 = vmax.f32 %v561, %v562
    %v564 = vsel %vm339, %v162, -inf
    %v565 = vrot.slane %v564, 4
    %v566 = vmax.f32 %v564, %v565
    %v567 = vrot.slane %v566, 2
    %v568 = vmax.f32 %v566, %v567
    %v569 = vrot.slane %v568, 1
    %v570 = vmax.f32 %v568, %v569
    %v571 = vsel %vm290, %v163, -inf
    %v572 = vrot.slane %v571, 4
    %v573 = vmax.f32 %v571, %v572
    %v574 = vrot.slane %v573, 2
    %v575 = vmax.f32 %v573, %v574
    %v576 = vrot.slane %v575, 1
    %v577 = vmax.f32 %v575, %v576
    %v578 = vsel %vm323, %v163, -inf
    %v579 = vrot.slane %v578, 4
    %v580 = vmax.f32 %v578, %v579
    %v581 = vrot.slane %v580, 2
    %v582 = vmax.f32 %v580, %v581
    %v583 = vrot.slane %v582, 1
    %v584 = vmax.f32 %v582, %v583
    %v585 = vsel %vm331, %v163, -inf
    %v586 = vrot.slane %v585, 4
    %v587 = vmax.f32 %v585, %v586
    %v588 = vrot.slane %v587, 2
    %v589 = vmax.f32 %v587, %v588
    %v590 = vrot.slane %v589, 1
    %v591 = vmax.f32 %v589, %v590
    %v592 = vsel %vm339, %v163, -inf
    %v593 = vrot.slane %v592, 4
    %v594 = vmax.f32 %v592, %v593
    %v595 = vrot.slane %v594, 2
    %v596 = vmax.f32 %v594, %v595
    %v597 = vrot.slane %v596, 1
    %v598 = vmax.f32 %v596, %v597
    %v599 = vsel %vm290, %v312, -inf
    %v600 = vrot.slane %v599, 4
    %v601 = vmax.f32 %v599, %v600
    %v602 = vrot.slane %v601, 2
    %v603 = vmax.f32 %v601, %v602
    %v604 = vrot.slane %v603, 1
    %v605 = vmax.f32 %v603, %v604
    %v606 = vsel %vm323, %v312, -inf
    %v607 = vrot.slane %v606, 4
    %v608 = vmax.f32 %v606, %v607
    %v609 = vrot.slane %v608, 2
    %v610 = vmax.f32 %v608, %v609
    %v611 = vrot.slane %v610, 1
    %v612 = vmax.f32 %v610, %v611
    %v613 = vsel %vm331, %v312, -inf
    %v614 = vrot.slane %v613, 4
    %v615 = vmax.f32 %v613, %v614
    %v616 = vrot.slane %v615, 2
    %v617 = vmax.f32 %v615, %v616
    %v618 = vrot.slane %v617, 1
    %v619 = vmax.f32 %v617, %v618
    %v620 = vsel %vm339, %v312, -inf
    %v621 = vrot.slane %v620, 4
    %v622 = vmax.f32 %v620, %v621
    %v623 = vrot.slane %v622, 2
    %v624 = vmax.f32 %v622, %v623
    %v625 = vrot.slane %v624, 1
    %v626 = vmax.f32 %v624, %v625
    %v627 = vsel %vm290, %v313, -inf
    %v628 = vrot.slane %v627, 4
    %v629 = vmax.f32 %v627, %v628
    %v630 = vrot.slane %v629, 2
    %v631 = vmax.f32 %v629, %v630
    %v632 = vrot.slane %v631, 1
    %v633 = vmax.f32 %v631, %v632
    %v634 = vsel %vm323, %v313, -inf
    %v635 = vrot.slane %v634, 4
    %v636 = vmax.f32 %v634, %v635
    %v637 = vrot.slane %v636, 2
    %v638 = vmax.f32 %v636, %v637
    %v639 = vrot.slane %v638, 1
    %v640 = vmax.f32 %v638, %v639
    %v641 = vsel %vm331, %v313, -inf
    %v642 = vrot.slane %v641, 4
    %v643 = vmax.f32 %v641, %v642
    %v644 = vrot.slane %v643, 2
    %v645 = vmax.f32 %v643, %v644
    %v646 = vrot.slane %v645, 1
    %v647 = vmax.f32 %v645, %v646
    %v648 = vsel %vm339, %v313, -inf
    %v649 = vrot.slane %v648, 4
    %v650 = vmax.f32 %v648, %v649
    %v651 = vrot.slane %v650, 2
    %v652 = vmax.f32 %v650, %v651
    %v653 = vrot.slane %v652, 1
    %v654 = vmax.f32 %v652, %v653
    %v655 = vsel %vm290, %v168, -inf
    %v656 = vrot.slane %v655, 4
    %v657 = vmax.f32 %v655, %v656
    %v658 = vrot.slane %v657, 2
    %v659 = vmax.f32 %v657, %v658
    %v660 = vrot.slane %v659, 1
    %v661 = vmax.f32 %v659, %v660
    %v662 = vsel %vm323, %v168, -inf
    %v663 = vrot.slane %v662, 4
    %v664 = vmax.f32 %v662, %v663
    %v665 = vrot.slane %v664, 2
    %v666 = vmax.f32 %v664, %v665
    %v667 = vrot.slane %v666, 1
    %v668 = vmax.f32 %v666, %v667
    %v669 = vsel %vm331, %v168, -inf
    %v670 = vrot.slane %v669, 4
    %v671 = vmax.f32 %v669, %v670
    %v672 = vrot.slane %v671, 2
    %v673 = vmax.f32 %v671, %v672
    %v674 = vrot.slane %v673, 1
    %v675 = vmax.f32 %v673, %v674
    %v676 = vsel %vm339, %v168, -inf
    %v677 = vrot.slane %v676, 4
    %v678 = vmax.f32 %v676, %v677
    %v679 = vrot.slane %v678, 2
    %v680 = vmax.f32 %v678, %v679
    %v681 = vrot.slane %v680, 1
    %v682 = vmax.f32 %v680, %v681
    %v683 = vsel %vm290, %v169, -inf
    %v684 = vrot.slane %v683, 4
    %v685 = vmax.f32 %v683, %v684
    %v686 = vrot.slane %v685, 2
    %v687 = vmax.f32 %v685, %v686
    %v688 = vrot.slane %v687, 1
    %v689 = vmax.f32 %v687, %v688
    %v690 = vsel %vm323, %v169, -inf
    %v691 = vrot.slane %v690, 4
    %v692 = vmax.f32 %v690, %v691
    %v693 = vrot.slane %v692, 2
    %v694 = vmax.f32 %v692, %v693
    %v695 = vrot.slane %v694, 1
    %v696 = vmax.f32 %v694, %v695
    %v697 = vsel %vm331, %v169, -inf
    %v698 = vrot.slane %v697, 4
    %v699 = vmax.f32 %v697, %v698
    %v700 = vrot.slane %v699, 2
    %v701 = vmax.f32 %v699, %v700
    %v702 = vrot.slane %v701, 1
    %v703 = vmax.f32 %v701, %v702
    %v704 = vsel %vm339, %v169, -inf
    %v705 = vrot.slane %v704, 4
    %v706 = vmax.f32 %v704, %v705
    %v707 = vrot.slane %v706, 2
    %v708 = vmax.f32 %v706, %v707
    %v709 = vrot.slane %v708, 1
    %v710 = vmax.f32 %v708, %v709
    %v711 = vsel %vm290, %v314, -inf
    %v712 = vrot.slane %v711, 4
    %v713 = vmax.f32 %v711, %v712
    %v714 = vrot.slane %v713, 2
    %v715 = vmax.f32 %v713, %v714
    %v716 = vrot.slane %v715, 1
    %v717 = vmax.f32 %v715, %v716
    %v718 = vsel %vm323, %v314, -inf
    %v719 = vrot.slane %v718, 4
    %v720 = vmax.f32 %v718, %v719
    %v721 = vrot.slane %v720, 2
    %v722 = vmax.f32 %v720, %v721
    %v723 = vrot.slane %v722, 1
    %v724 = vmax.f32 %v722, %v723
    %v725 = vsel %vm331, %v314, -inf
    %v726 = vrot.slane %v725, 4
    %v727 = vmax.f32 %v725, %v726
    %v728 = vrot.slane %v727, 2
    %v729 = vmax.f32 %v727, %v728
    %v730 = vrot.slane %v729, 1
    %v731 = vmax.f32 %v729, %v730
    %v732 = vsel %vm339, %v314, -inf
    %v733 = vrot.slane %v732, 4
    %v734 = vmax.f32 %v732, %v733
    %v735 = vrot.slane %v734, 2
    %v736 = vmax.f32 %v734, %v735
    %v737 = vrot.slane %v736, 1
    %v738 = vmax.f32 %v736, %v737
    %v739 = vsel %vm290, %v315, -inf
    %v740 = vrot.slane %v739, 4
    %v741 = vmax.f32 %v739, %v740
    %v742 = vrot.slane %v741, 2
    %v743 = vmax.f32 %v741, %v742
    %v744 = vrot.slane %v743, 1
    %v745 = vmax.f32 %v743, %v744
    %v746 = vsel %vm323, %v315, -inf
    %v747 = vrot.slane %v746, 4
    %v748 = vmax.f32 %v746, %v747
    %v749 = vrot.slane %v748, 2
    %v750 = vmax.f32 %v748, %v749
    %v751 = vrot.slane %v750, 1
    %v752 = vmax.f32 %v750, %v751
    %v753 = vsel %vm331, %v315, -inf
    %v754 = vrot.slane %v753, 4
    %v755 = vmax.f32 %v753, %v754
    %v756 = vrot.slane %v755, 2
    %v757 = vmax.f32 %v755, %v756
    %v758 = vrot.slane %v757, 1
    %v759 = vmax.f32 %v757, %v758
    %v760 = vsel %vm339, %v315, -inf
    %v761 = vrot.slane %v760, 4
    %v762 = vmax.f32 %v760, %v761
    %v763 = vrot.slane %v762, 2
    %v764 = vmax.f32 %v762, %v763
    %v765 = vrot.slane %v764, 1
    %v766 = vmax.f32 %v764, %v765
    %v767 = vsel %vm288, %v322, %v330
    %v768 = vsel %vm290, %v767, %v338
    %v769 = vsel %vm292, %v768, %v346
    %v770 = vsel %vm174, %v769, %v353
    %v771 = vsel %vm295, %v770, %v360
    %v772 = vsel %vm297, %v771, %v367
    %v773 = vsel %vm299, %v772, %v374
    %v774 = vsel %vm288, %v381, %v388
    %v775 = vsel %vm290, %v774, %v395
    %v776 = vsel %vm292, %v775, %v402
    %v777 = vsel %vm174, %v776, %v409
    %v778 = vsel %vm295, %v777, %v416
    %v779 = vsel %vm297, %v778, %v423
    %v780 = vsel %vm299, %v779, %v430
    %v781 = vsel %vm288, %v437, %v444
    %v782 = vsel %vm290, %v781, %v451
    %v783 = vsel %vm292, %v782, %v458
    %v784 = vsel %vm174, %v783, %v465
    %v785 = vsel %vm295, %v784, %v472
    %v786 = vsel %vm297, %v785, %v479
    %v787 = vsel %vm299, %v786, %v486
    %v788 = vsel %vm288, %v493, %v500
    %v789 = vsel %vm290, %v788, %v507
    %v790 = vsel %vm292, %v789, %v514
    %v791 = vsel %vm174, %v790, %v521
    %v792 = vsel %vm295, %v791, %v528
    %v793 = vsel %vm297, %v792, %v535
    %v794 = vsel %vm299, %v793, %v542
    %v795 = vsel %vm288, %v549, %v556
    %v796 = vsel %vm290, %v795, %v563
    %v797 = vsel %vm292, %v796, %v570
    %v798 = vsel %vm174, %v797, %v577
    %v799 = vsel %vm295, %v798, %v584
    %v800 = vsel %vm297, %v799, %v591
    %v801 = vsel %vm299, %v800, %v598
    %v802 = vsel %vm288, %v605, %v612
    %v803 = vsel %vm290, %v802, %v619
    %v804 = vsel %vm292, %v803, %v626
    %v805 = vsel %vm174, %v804, %v633
    %v806 = vsel %vm295, %v805, %v640
    %v807 = vsel %vm297, %v806, %v647
    %v808 = vsel %vm299, %v807, %v654
    %v809 = vsel %vm288, %v661, %v668
    %v810 = vsel %vm290, %v809, %v675
    %v811 = vsel %vm292, %v810, %v682
    %v812 = vsel %vm174, %v811, %v689
    %v813 = vsel %vm295, %v812, %v696
    %v814 = vsel %vm297, %v813, %v703
    %v815 = vsel %vm299, %v814, %v710
    %v816 = vsel %vm288, %v717, %v724
    %v817 = vsel %vm290, %v816, %v731
    %v818 = vsel %vm292, %v817, %v738
    %v819 = vsel %vm174, %v818, %v745
    %v820 = vsel %vm295, %v819, %v752
    %v821 = vsel %vm297, %v820, %v759
    %v822 = vsel %vm299, %v821, %v766
    %v823 = vmax.f32 %v73, %v75
    %v824 = vmax.f32 %v74, %v76
    %v825 = vmax.f32 %v81, %v83
    %v826 = vmax.f32 %v82, %v84
    %v827 = vmax.f32 %v105, %v107
    %v828 = vmax.f32 %v106, %v108
    %v829 = vmax.f32 %v113, %v115
    %v830 = vmax.f32 %v114, %v116
    %vm831 = vcmask 1042433
    %v832 = vsel %vm831, %v119, -inf
    %v833 = vrot.slane %v832, 4
    %v834 = vmax.f32 %v832, %v833
    %v835 = vrot.slane %v834, 2
    %v836 = vmax.f32 %v834, %v835
    %v837 = vrot.slane %v836, 1
    %v838 = vmax.f32 %v836, %v837
    %vm839 = vcmask 1046533
    %v840 = vsel %vm839, %v119, -inf
    %v841 = vrot.slane %v840, 4
    %v842 = vmax.f32 %v840, %v841
    %v843 = vrot.slane %v842, 2
    %v844 = vmax.f32 %v842, %v843
    %v845 = vrot.slane %v844, 1
    %v846 = vmax.f32 %v844, %v845
    %v847 = vsel %vm831, %v120, -inf
    %v848 = vrot.slane %v847, 4
    %v849 = vmax.f32 %v847, %v848
    %v850 = vrot.slane %v849, 2
    %v851 = vmax.f32 %v849, %v850
    %v852 = vrot.slane %v851, 1
    %v853 = vmax.f32 %v851, %v852
    %v854 = vsel %vm839, %v120, -inf
    %v855 = vrot.slane %v854, 4
    %v856 = vmax.f32 %v854, %v855
    %v857 = vrot.slane %v856, 2
    %v858 = vmax.f32 %v856, %v857
    %v859 = vrot.slane %v858, 1
    %v860 = vmax.f32 %v858, %v859
    %v861 = vsel %vm290, %v823, -inf
    %v862 = vrot.slane %v861, 4
    %v863 = vmax.f32 %v861, %v862
    %v864 = vrot.slane %v863, 2
    %v865 = vmax.f32 %v863, %v864
    %v866 = vrot.slane %v865, 1
    %v867 = vmax.f32 %v865, %v866
    %v868 = vsel %vm831, %v823, -inf
    %v869 = vrot.slane %v868, 4
    %v870 = vmax.f32 %v868, %v869
    %v871 = vrot.slane %v870, 2
    %v872 = vmax.f32 %v870, %v871
    %v873 = vrot.slane %v872, 1
    %v874 = vmax.f32 %v872, %v873
    %v875 = vsel %vm323, %v823, -inf
    %v876 = vrot.slane %v875, 4
    %v877 = vmax.f32 %v875, %v876
    %v878 = vrot.slane %v877, 2
    %v879 = vmax.f32 %v877, %v878
    %v880 = vrot.slane %v879, 1
    %v881 = vmax.f32 %v879, %v880
    %v882 = vsel %vm331, %v823, -inf
    %v883 = vrot.slane %v882, 4
    %v884 = vmax.f32 %v882, %v883
    %v885 = vrot.slane %v884, 2
    %v886 = vmax.f32 %v884, %v885
    %v887 = vrot.slane %v886, 1
    %v888 = vmax.f32 %v886, %v887
    %v889 = vsel %vm839, %v823, -inf
    %v890 = vrot.slane %v889, 4
    %v891 = vmax.f32 %v889, %v890
    %v892 = vrot.slane %v891, 2
    %v893 = vmax.f32 %v891, %v892
    %v894 = vrot.slane %v893, 1
    %v895 = vmax.f32 %v893, %v894
    %v896 = vsel %vm339, %v823, -inf
    %v897 = vrot.slane %v896, 4
    %v898 = vmax.f32 %v896, %v897
    %v899 = vrot.slane %v898, 2
    %v900 = vmax.f32 %v898, %v899
    %v901 = vrot.slane %v900, 1
    %v902 = vmax.f32 %v900, %v901
    %v903 = vsel %vm290, %v824, -inf
    %v904 = vrot.slane %v903, 4
    %v905 = vmax.f32 %v903, %v904
    %v906 = vrot.slane %v905, 2
    %v907 = vmax.f32 %v905, %v906
    %v908 = vrot.slane %v907, 1
    %v909 = vmax.f32 %v907, %v908
    %v910 = vsel %vm831, %v824, -inf
    %v911 = vrot.slane %v910, 4
    %v912 = vmax.f32 %v910, %v911
    %v913 = vrot.slane %v912, 2
    %v914 = vmax.f32 %v912, %v913
    %v915 = vrot.slane %v914, 1
    %v916 = vmax.f32 %v914, %v915
    %v917 = vsel %vm323, %v824, -inf
    %v918 = vrot.slane %v917, 4
    %v919 = vmax.f32 %v917, %v918
    %v920 = vrot.slane %v919, 2
    %v921 = vmax.f32 %v919, %v920
    %v922 = vrot.slane %v921, 1
    %v923 = vmax.f32 %v921, %v922
    %v924 = vsel %vm331, %v824, -inf
    %v925 = vrot.slane %v924, 4
    %v926 = vmax.f32 %v924, %v925
    %v927 = vrot.slane %v926, 2
    %v928 = vmax.f32 %v926, %v927
    %v929 = vrot.slane %v928, 1
    %v930 = vmax.f32 %v928, %v929
    %v931 = vsel %vm839, %v824, -inf
    %v932 = vrot.slane %v931, 4
    %v933 = vmax.f32 %v931, %v932
    %v934 = vrot.slane %v933, 2
    %v935 = vmax.f32 %v933, %v934
    %v936 = vrot.slane %v935, 1
    %v937 = vmax.f32 %v935, %v936
    %v938 = vsel %vm339, %v824, -inf
    %v939 = vrot.slane %v938, 4
    %v940 = vmax.f32 %v938, %v939
    %v941 = vrot.slane %v940, 2
    %v942 = vmax.f32 %v940, %v941
    %v943 = vrot.slane %v942, 1
    %v944 = vmax.f32 %v942, %v943
    %v945 = vsel %vm831, %v308, -inf
    %v946 = vrot.slane %v945, 4
    %v947 = vmax.f32 %v945, %v946
    %v948 = vrot.slane %v947, 2
    %v949 = vmax.f32 %v947, %v948
    %v950 = vrot.slane %v949, 1
    %v951 = vmax.f32 %v949, %v950
    %v952 = vsel %vm839, %v308, -inf
    %v953 = vrot.slane %v952, 4
    %v954 = vmax.f32 %v952, %v953
    %v955 = vrot.slane %v954, 2
    %v956 = vmax.f32 %v954, %v955
    %v957 = vrot.slane %v956, 1
    %v958 = vmax.f32 %v956, %v957
    %v959 = vsel %vm831, %v309, -inf
    %v960 = vrot.slane %v959, 4
    %v961 = vmax.f32 %v959, %v960
    %v962 = vrot.slane %v961, 2
    %v963 = vmax.f32 %v961, %v962
    %v964 = vrot.slane %v963, 1
    %v965 = vmax.f32 %v963, %v964
    %v966 = vsel %vm839, %v309, -inf
    %v967 = vrot.slane %v966, 4
    %v968 = vmax.f32 %v966, %v967
    %v969 = vrot.slane %v968, 2
    %v970 = vmax.f32 %v968, %v969
    %v971 = vrot.slane %v970, 1
    %v972 = vmax.f32 %v970, %v971
    %v973 = vsel %vm831, %v156, -inf
    %v974 = vrot.slane %v973, 4
    %v975 = vmax.f32 %v973, %v974
    %v976 = vrot.slane %v975, 2
    %v977 = vmax.f32 %v975, %v976
    %v978 = vrot.slane %v977, 1
    %v979 = vmax.f32 %v977, %v978
    %v980 = vsel %vm839, %v156, -inf
    %v981 = vrot.slane %v980, 4
    %v982 = vmax.f32 %v980, %v981
    %v983 = vrot.slane %v982, 2
    %v984 = vmax.f32 %v982, %v983
    %v985 = vrot.slane %v984, 1
    %v986 = vmax.f32 %v984, %v985
    %v987 = vsel %vm831, %v157, -inf
    %v988 = vrot.slane %v987, 4
    %v989 = vmax.f32 %v987, %v988
    %v990 = vrot.slane %v989, 2
    %v991 = vmax.f32 %v989, %v990
    %v992 = vrot.slane %v991, 1
    %v993 = vmax.f32 %v991, %v992
    %v994 = vsel %vm839, %v157, -inf
    %v995 = vrot.slane %v994, 4
    %v996 = vmax.f32 %v994, %v995
    %v997 = vrot.slane %v996, 2
    %v998 = vmax.f32 %v996, %v997
    %v999 = vrot.slane %v998, 1
    %v1000 = vmax.f32 %v998, %v999
    %v1001 = vsel %vm290, %v825, -inf
    %v1002 = vrot.slane %v1001, 4
    %v1003 = vmax.f32 %v1001, %v1002
    %v1004 = vrot.slane %v1003, 2
    %v1005 = vmax.f32 %v1003, %v1004
    %v1006 = vrot.slane %v1005, 1
    %v1007 = vmax.f32 %v1005, %v1006
    %v1008 = vsel %vm831, %v825, -inf
    %v1009 = vrot.slane %v1008, 4
    %v1010 = vmax.f32 %v1008, %v1009
    %v1011 = vrot.slane %v1010, 2
    %v1012 = vmax.f32 %v1010, %v1011
    %v1013 = vrot.slane %v1012, 1
    %v1014 = vmax.f32 %v1012, %v1013
    %v1015 = vsel %vm323, %v825, -inf
    %v1016 = vrot.slane %v1015, 4
    %v1017 = vmax.f32 %v1015, %v1016
    %v1018 = vrot.slane %v1017, 2
    %v1019 = vmax.f32 %v1017, %v1018
    %v1020 = vrot.slane %v1019, 1
    %v1021 = vmax.f32 %v1019, %v1020
    %v1022 = vsel %vm331, %v825, -inf
    %v1023 = vrot.slane %v1022, 4
    %v1024 = vmax.f32 %v1022, %v1023
    %v1025 = vrot.slane %v1024, 2
    %v1026 = vmax.f32 %v1024, %v1025
    %v1027 = vrot.slane %v1026, 1
    %v1028 = vmax.f32 %v1026, %v1027
    %v1029 = vsel %vm839, %v825, -inf
    %v1030 = vrot.slane %v1029, 4
    %v1031 = vmax.f32 %v1029, %v1030
    %v1032 = vrot.slane %v1031, 2
    %v1033 = vmax.f32 %v1031, %v1032
    %v1034 = vrot.slane %v1033, 1
    %v1035 = vmax.f32 %v1033, %v1034
    %v1036 = vsel %vm339, %v825, -inf
    %v1037 = vrot.slane %v1036, 4
    %v1038 = vmax.f32 %v1036, %v1037
    %v1039 = vrot.slane %v1038, 2
    %v1040 = vmax.f32 %v1038, %v1039
    %v1041 = vrot.slane %v1040, 1
    %v1042 = vmax.f32 %v1040, %v1041
    %v1043 = vsel %vm290, %v826, -inf
    %v1044 = vrot.slane %v1043, 4
    %v1045 = vmax.f32 %v1043, %v1044
    %v1046 = vrot.slane %v1045, 2
    %v1047 = vmax.f32 %v1045, %v1046
    %v1048 = vrot.slane %v1047, 1
    %v1049 = vmax.f32 %v1047, %v1048
    %v1050 = vsel %vm831, %v826, -inf
    %v1051 = vrot.slane %v1050, 4
    %v1052 = vmax.f32 %v1050, %v1051
    %v1053 = vrot.slane %v1052, 2
    %v1054 = vmax.f32 %v1052, %v1053
    %v1055 = vrot.slane %v1054, 1
    %v1056 = vmax.f32 %v1054, %v1055
    %v1057 = vsel %vm323, %v826, -inf
    %v1058 = vrot.slane %v1057, 4
    %v1059 = vmax.f32 %v1057, %v1058
    %v1060 = vrot.slane %v1059, 2
    %v1061 = vmax.f32 %v1059, %v1060
    %v1062 = vrot.slane %v1061, 1
    %v1063 = vmax.f32 %v1061, %v1062
    %v1064 = vsel %vm331, %v826, -inf
    %v1065 = vrot.slane %v1064, 4
    %v1066 = vmax.f32 %v1064, %v1065
    %v1067 = vrot.slane %v1066, 2
    %v1068 = vmax.f32 %v1066, %v1067
    %v1069 = vrot.slane %v1068, 1
    %v1070 = vmax.f32 %v1068, %v1069
    %v1071 = vsel %vm839, %v826, -inf
    %v1072 = vrot.slane %v1071, 4
    %v1073 = vmax.f32 %v1071, %v1072
    %v1074 = vrot.slane %v1073, 2
    %v1075 = vmax.f32 %v1073, %v1074
    %v1076 = vrot.slane %v1075, 1
    %v1077 = vmax.f32 %v1075, %v1076
    %v1078 = vsel %vm339, %v826, -inf
    %v1079 = vrot.slane %v1078, 4
    %v1080 = vmax.f32 %v1078, %v1079
    %v1081 = vrot.slane %v1080, 2
    %v1082 = vmax.f32 %v1080, %v1081
    %v1083 = vrot.slane %v1082, 1
    %v1084 = vmax.f32 %v1082, %v1083
    %v1085 = vsel %vm831, %v310, -inf
    %v1086 = vrot.slane %v1085, 4
    %v1087 = vmax.f32 %v1085, %v1086
    %v1088 = vrot.slane %v1087, 2
    %v1089 = vmax.f32 %v1087, %v1088
    %v1090 = vrot.slane %v1089, 1
    %v1091 = vmax.f32 %v1089, %v1090
    %v1092 = vsel %vm839, %v310, -inf
    %v1093 = vrot.slane %v1092, 4
    %v1094 = vmax.f32 %v1092, %v1093
    %v1095 = vrot.slane %v1094, 2
    %v1096 = vmax.f32 %v1094, %v1095
    %v1097 = vrot.slane %v1096, 1
    %v1098 = vmax.f32 %v1096, %v1097
    %v1099 = vsel %vm831, %v311, -inf
    %v1100 = vrot.slane %v1099, 4
    %v1101 = vmax.f32 %v1099, %v1100
    %v1102 = vrot.slane %v1101, 2
    %v1103 = vmax.f32 %v1101, %v1102
    %v1104 = vrot.slane %v1103, 1
    %v1105 = vmax.f32 %v1103, %v1104
    %v1106 = vsel %vm839, %v311, -inf
    %v1107 = vrot.slane %v1106, 4
    %v1108 = vmax.f32 %v1106, %v1107
    %v1109 = vrot.slane %v1108, 2
    %v1110 = vmax.f32 %v1108, %v1109
    %v1111 = vrot.slane %v1110, 1
    %v1112 = vmax.f32 %v1110, %v1111
    %v1113 = vsel %vm831, %v162, -inf
    %v1114 = vrot.slane %v1113, 4
    %v1115 = vmax.f32 %v1113, %v1114
    %v1116 = vrot.slane %v1115, 2
    %v1117 = vmax.f32 %v1115, %v1116
    %v1118 = vrot.slane %v1117, 1
    %v1119 = vmax.f32 %v1117, %v1118
    %v1120 = vsel %vm839, %v162, -inf
    %v1121 = vrot.slane %v1120, 4
    %v1122 = vmax.f32 %v1120, %v1121
    %v1123 = vrot.slane %v1122, 2
    %v1124 = vmax.f32 %v1122, %v1123
    %v1125 = vrot.slane %v1124, 1
    %v1126 = vmax.f32 %v1124, %v1125
    %v1127 = vsel %vm831, %v163, -inf
    %v1128 = vrot.slane %v1127, 4
    %v1129 = vmax.f32 %v1127, %v1128
    %v1130 = vrot.slane %v1129, 2
    %v1131 = vmax.f32 %v1129, %v1130
    %v1132 = vrot.slane %v1131, 1
    %v1133 = vmax.f32 %v1131, %v1132
    %v1134 = vsel %vm839, %v163, -inf
    %v1135 = vrot.slane %v1134, 4
    %v1136 = vmax.f32 %v1134, %v1135
    %v1137 = vrot.slane %v1136, 2
    %v1138 = vmax.f32 %v1136, %v1137
    %v1139 = vrot.slane %v1138, 1
    %v1140 = vmax.f32 %v1138, %v1139
    %v1141 = vsel %vm290, %v827, -inf
    %v1142 = vrot.slane %v1141, 4
    %v1143 = vmax.f32 %v1141, %v1142
    %v1144 = vrot.slane %v1143, 2
    %v1145 = vmax.f32 %v1143, %v1144
    %v1146 = vrot.slane %v1145, 1
    %v1147 = vmax.f32 %v1145, %v1146
    %v1148 = vsel %vm831, %v827, -inf
    %v1149 = vrot.slane %v1148, 4
    %v1150 = vmax.f32 %v1148, %v1149
    %v1151 = vrot.slane %v1150, 2
    %v1152 = vmax.f32 %v1150, %v1151
    %v1153 = vrot.slane %v1152, 1
    %v1154 = vmax.f32 %v1152, %v1153
    %v1155 = vsel %vm323, %v827, -inf
    %v1156 = vrot.slane %v1155, 4
    %v1157 = vmax.f32 %v1155, %v1156
    %v1158 = vrot.slane %v1157, 2
    %v1159 = vmax.f32 %v1157, %v1158
    %v1160 = vrot.slane %v1159, 1
    %v1161 = vmax.f32 %v1159, %v1160
    %v1162 = vsel %vm331, %v827, -inf
    %v1163 = vrot.slane %v1162, 4
    %v1164 = vmax.f32 %v1162, %v1163
    %v1165 = vrot.slane %v1164, 2
    %v1166 = vmax.f32 %v1164, %v1165
    %v1167 = vrot.slane %v1166, 1
    %v1168 = vmax.f32 %v1166, %v1167
    %v1169 = vsel %vm839, %v827, -inf
    %v1170 = vrot.slane %v1169, 4
    %v1171 = vmax.f32 %v1169, %v1170
    %v1172 = vrot.slane %v1171, 2
    %v1173 = vmax.f32 %v1171, %v1172
    %v1174 = vrot.slane %v1173, 1
    %v1175 = vmax.f32 %v1173, %v1174
    %v1176 = vsel %vm339, %v827, -inf
    %v1177 = vrot.slane %v1176, 4
    %v1178 = vmax.f32 %v1176, %v1177
    %v1179 = vrot.slane %v1178, 2
    %v1180 = vmax.f32 %v1178, %v1179
    %v1181 = vrot.slane %v1180, 1
    %v1182 = vmax.f32 %v1180, %v1181
    %v1183 = vsel %vm290, %v828, -inf
    %v1184 = vrot.slane %v1183, 4
    %v1185 = vmax.f32 %v1183, %v1184
    %v1186 = vrot.slane %v1185, 2
    %v1187 = vmax.f32 %v1185, %v1186
    %v1188 = vrot.slane %v1187, 1
    %v1189 = vmax.f32 %v1187, %v1188
    %v1190 = vsel %vm831, %v828, -inf
    %v1191 = vrot.slane %v1190, 4
    %v1192 = vmax.f32 %v1190, %v1191
    %v1193 = vrot.slane %v1192, 2
    %v1194 = vmax.f32 %v1192, %v1193
    %v1195 = vrot.slane %v1194, 1
    %v1196 = vmax.f32 %v1194, %v1195
    %v1197 = vsel %vm323, %v828, -inf
    %v1198 = vrot.slane %v1197, 4
    %v1199 = vmax.f32 %v1197, %v1198
    %v1200 = vrot.slane %v1199, 2
    %v1201 = vmax.f32 %v1199, %v1200
    %v1202 = vrot.slane %v1201, 1
    %v1203 = vmax.f32 %v1201, %v1202
    %v1204 = vsel %vm331, %v828, -inf
    %v1205 = vrot.slane %v1204, 4
    %v1206 = vmax.f32 %v1204, %v1205
    %v1207 = vrot.slane %v1206, 2
    %v1208 = vmax.f32 %v1206, %v1207
    %v1209 = vrot.slane %v1208, 1
    %v1210 = vmax.f32 %v1208, %v1209
    %v1211 = vsel %vm839, %v828, -inf
    %v1212 = vrot.slane %v1211, 4
    %v1213 = vmax.f32 %v1211, %v1212
    %v1214 = vrot.slane %v1213, 2
    %v1215 = vmax.f32 %v1213, %v1214
    %v1216 = vrot.slane %v1215, 1
    %v1217 = vmax.f32 %v1215, %v1216
    %v1218 = vsel %vm339, %v828, -inf
    %v1219 = vrot.slane %v1218, 4
    %v1220 = vmax.f32 %v1218, %v1219
    %v1221 = vrot.slane %v1220, 2
    %v1222 = vmax.f32 %v1220, %v1221
    %v1223 = vrot.slane %v1222, 1
    %v1224 = vmax.f32 %v1222, %v1223
    %v1225 = vsel %vm831, %v312, -inf
    %v1226 = vrot.slane %v1225, 4
    %v1227 = vmax.f32 %v1225, %v1226
    %v1228 = vrot.slane %v1227, 2
    %v1229 = vmax.f32 %v1227, %v1228
    %v1230 = vrot.slane %v1229, 1
    %v1231 = vmax.f32 %v1229, %v1230
    %v1232 = vsel %vm839, %v312, -inf
    %v1233 = vrot.slane %v1232, 4
    %v1234 = vmax.f32 %v1232, %v1233
    %v1235 = vrot.slane %v1234, 2
    %v1236 = vmax.f32 %v1234, %v1235
    %v1237 = vrot.slane %v1236, 1
    %v1238 = vmax.f32 %v1236, %v1237
    %v1239 = vsel %vm831, %v313, -inf
    %v1240 = vrot.slane %v1239, 4
    %v1241 = vmax.f32 %v1239, %v1240
    %v1242 = vrot.slane %v1241, 2
    %v1243 = vmax.f32 %v1241, %v1242
    %v1244 = vrot.slane %v1243, 1
    %v1245 = vmax.f32 %v1243, %v1244
    %v1246 = vsel %vm839, %v313, -inf
    %v1247 = vrot.slane %v1246, 4
    %v1248 = vmax.f32 %v1246, %v1247
    %v1249 = vrot.slane %v1248, 2
    %v1250 = vmax.f32 %v1248, %v1249
    %v1251 = vrot.slane %v1250, 1
    %v1252 = vmax.f32 %v1250, %v1251
    %v1253 = vsel %vm831, %v168, -inf
    %v1254 = vrot.slane %v1253, 4
    %v1255 = vmax.f32 %v1253, %v1254
    %v1256 = vrot.slane %v1255, 2
    %v1257 = vmax.f32 %v1255, %v1256
    %v1258 = vrot.slane %v1257, 1
    %v1259 = vmax.f32 %v1257, %v1258
    %v1260 = vsel %vm839, %v168, -inf
    %v1261 = vrot.slane %v1260, 4
    %v1262 = vmax.f32 %v1260, %v1261
    %v1263 = vrot.slane %v1262, 2
    %v1264 = vmax.f32 %v1262, %v1263
    %v1265 = vrot.slane %v1264, 1
    %v1266 = vmax.f32 %v1264, %v1265
    %v1267 = vsel %vm831, %v169, -inf
    %v1268 = vrot.slane %v1267, 4
    %v1269 = vmax.f32 %v1267, %v1268
    %v1270 = vrot.slane %v1269, 2
    %v1271 = vmax.f32 %v1269, %v1270
    %v1272 = vrot.slane %v1271, 1
    %v1273 = vmax.f32 %v1271, %v1272
    %v1274 = vsel %vm839, %v169, -inf
    %v1275 = vrot.slane %v1274, 4
    %v1276 = vmax.f32 %v1274, %v1275
    %v1277 = vrot.slane %v1276, 2
    %v1278 = vmax.f32 %v1276, %v1277
    %v1279 = vrot.slane %v1278, 1
    %v1280 = vmax.f32 %v1278, %v1279
    %v1281 = vsel %vm290, %v829, -inf
    %v1282 = vrot.slane %v1281, 4
    %v1283 = vmax.f32 %v1281, %v1282
    %v1284 = vrot.slane %v1283, 2
    %v1285 = vmax.f32 %v1283, %v1284
    %v1286 = vrot.slane %v1285, 1
    %v1287 = vmax.f32 %v1285, %v1286
    %v1288 = vsel %vm831, %v829, -inf
    %v1289 = vrot.slane %v1288, 4
    %v1290 = vmax.f32 %v1288, %v1289
    %v1291 = vrot.slane %v1290, 2
    %v1292 = vmax.f32 %v1290, %v1291
    %v1293 = vrot.slane %v1292, 1
    %v1294 = vmax.f32 %v1292, %v1293
    %v1295 = vsel %vm323, %v829, -inf
    %v1296 = vrot.slane %v1295, 4
    %v1297 = vmax.f32 %v1295, %v1296
    %v1298 = vrot.slane %v1297, 2
    %v1299 = vmax.f32 %v1297, %v1298
    %v1300 = vrot.slane %v1299, 1
    %v1301 = vmax.f32 %v1299, %v1300
    %v1302 = vsel %vm331, %v829, -inf
    %v1303 = vrot.slane %v1302, 4
    %v1304 = vmax.f32 %v1302, %v1303
    %v1305 = vrot.slane %v1304, 2
    %v1306 = vmax.f32 %v1304, %v1305
    %v1307 = vrot.slane %v1306, 1
    %v1308 = vmax.f32 %v1306, %v1307
    %v1309 = vsel %vm839, %v829, -inf
    %v1310 = vrot.slane %v1309, 4
    %v1311 = vmax.f32 %v1309, %v1310
    %v1312 = vrot.slane %v1311, 2
    %v1313 = vmax.f32 %v1311, %v1312
    %v1314 = vrot.slane %v1313, 1
    %v1315 = vmax.f32 %v1313, %v1314
    %v1316 = vsel %vm339, %v829, -inf
    %v1317 = vrot.slane %v1316, 4
    %v1318 = vmax.f32 %v1316, %v1317
    %v1319 = vrot.slane %v1318, 2
    %v1320 = vmax.f32 %v1318, %v1319
    %v1321 = vrot.slane %v1320, 1
    %v1322 = vmax.f32 %v1320, %v1321
    %v1323 = vsel %vm290, %v830, -inf
    %v1324 = vrot.slane %v1323, 4
    %v1325 = vmax.f32 %v1323, %v1324
    %v1326 = vrot.slane %v1325, 2
    %v1327 = vmax.f32 %v1325, %v1326
    %v1328 = vrot.slane %v1327, 1
    %v1329 = vmax.f32 %v1327, %v1328
    %v1330 = vsel %vm831, %v830, -inf
    %v1331 = vrot.slane %v1330, 4
    %v1332 = vmax.f32 %v1330, %v1331
    %v1333 = vrot.slane %v1332, 2
    %v1334 = vmax.f32 %v1332, %v1333
    %v1335 = vrot.slane %v1334, 1
    %v1336 = vmax.f32 %v1334, %v1335
    %v1337 = vsel %vm323, %v830, -inf
    %v1338 = vrot.slane %v1337, 4
    %v1339 = vmax.f32 %v1337, %v1338
    %v1340 = vrot.slane %v1339, 2
    %v1341 = vmax.f32 %v1339, %v1340
    %v1342 = vrot.slane %v1341, 1
    %v1343 = vmax.f32 %v1341, %v1342
    %v1344 = vsel %vm331, %v830, -inf
    %v1345 = vrot.slane %v1344, 4
    %v1346 = vmax.f32 %v1344, %v1345
    %v1347 = vrot.slane %v1346, 2
    %v1348 = vmax.f32 %v1346, %v1347
    %v1349 = vrot.slane %v1348, 1
    %v1350 = vmax.f32 %v1348, %v1349
    %v1351 = vsel %vm839, %v830, -inf
    %v1352 = vrot.slane %v1351, 4
    %v1353 = vmax.f32 %v1351, %v1352
    %v1354 = vrot.slane %v1353, 2
    %v1355 = vmax.f32 %v1353, %v1354
    %v1356 = vrot.slane %v1355, 1
    %v1357 = vmax.f32 %v1355, %v1356
    %v1358 = vsel %vm339, %v830, -inf
    %v1359 = vrot.slane %v1358, 4
    %v1360 = vmax.f32 %v1358, %v1359
    %v1361 = vrot.slane %v1360, 2
    %v1362 = vmax.f32 %v1360, %v1361
    %v1363 = vrot.slane %v1362, 1
    %v1364 = vmax.f32 %v1362, %v1363
    %v1365 = vsel %vm831, %v314, -inf
    %v1366 = vrot.slane %v1365, 4
    %v1367 = vmax.f32 %v1365, %v1366
    %v1368 = vrot.slane %v1367, 2
    %v1369 = vmax.f32 %v1367, %v1368
    %v1370 = vrot.slane %v1369, 1
    %v1371 = vmax.f32 %v1369, %v1370
    %v1372 = vsel %vm839, %v314, -inf
    %v1373 = vrot.slane %v1372, 4
    %v1374 = vmax.f32 %v1372, %v1373
    %v1375 = vrot.slane %v1374, 2
    %v1376 = vmax.f32 %v1374, %v1375
    %v1377 = vrot.slane %v1376, 1
    %v1378 = vmax.f32 %v1376, %v1377
    %v1379 = vsel %vm831, %v315, -inf
    %v1380 = vrot.slane %v1379, 4
    %v1381 = vmax.f32 %v1379, %v1380
    %v1382 = vrot.slane %v1381, 2
    %v1383 = vmax.f32 %v1381, %v1382
    %v1384 = vrot.slane %v1383, 1
    %v1385 = vmax.f32 %v1383, %v1384
    %v1386 = vsel %vm839, %v315, -inf
    %v1387 = vrot.slane %v1386, 4
    %v1388 = vmax.f32 %v1386, %v1387
    %v1389 = vrot.slane %v1388, 2
    %v1390 = vmax.f32 %v1388, %v1389
    %v1391 = vrot.slane %v1390, 1
    %v1392 = vmax.f32 %v1390, %v1391
    %v1393 = vsel %vm288, %v322, %v838
    %v1394 = vsel %vm290, %v1393, %v330
    %v1395 = vsel %vm292, %v1394, %v338
    %v1396 = vsel %vm174, %v1395, %v846
    %v1397 = vsel %vm295, %v1396, %v346
    %v1398 = vsel %vm297, %v1397, %v353
    %v1399 = vsel %vm299, %v1398, %v853
    %v1400 = vsel %vm288, %v360, %v367
    %v1401 = vsel %vm290, %v1400, %v860
    %v1402 = vsel %vm292, %v1401, %v374
    %v1403 = vsel %vm174, %v1402, %v867
    %v1404 = vsel %vm295, %v1403, %v874
    %v1405 = vsel %vm297, %v1404, %v881
    %v1406 = vsel %vm299, %v1405, %v888
    %v1407 = vsel %vm288, %v895, %v902
    %v1408 = vsel %vm290, %v1407, %v909
    %v1409 = vsel %vm292, %v1408, %v916
    %v1410 = vsel %vm174, %v1409, %v923
    %v1411 = vsel %vm295, %v1410, %v930
    %v1412 = vsel %vm297, %v1411, %v937
    %v1413 = vsel %vm299, %v1412, %v944
    %v1414 = vsel %vm288, %v381, %v951
    %v1415 = vsel %vm290, %v1414, %v388
    %v1416 = vsel %vm292, %v1415, %v395
    %v1417 = vsel %vm174, %v1416, %v958
    %v1418 = vsel %vm295, %v1417, %v402
    %v1419 = vsel %vm297, %v1418, %v409
    %v1420 = vsel %vm299, %v1419, %v965
    %v1421 = vsel %vm288, %v416, %v423
    %v1422 = vsel %vm290, %v1421, %v972
    %v1423 = vsel %vm292, %v1422, %v430
    %v1424 = vsel %vm174, %v1423, %v437
    %v1425 = vsel %vm295, %v1424, %v979
    %v1426 = vsel %vm297, %v1425, %v444
    %v1427 = vsel %vm299, %v1426, %v451
    %v1428 = vsel %vm288, %v986, %v458
    %v1429 = vsel %vm290, %v1428, %v465
    %v1430 = vsel %vm292, %v1429, %v993
    %v1431 = vsel %vm174, %v1430, %v472
    %v1432 = vsel %vm295, %v1431, %v479
    %v1433 = vsel %vm297, %v1432, %v1000
    %v1434 = vsel %vm299, %v1433, %v486
    %v1435 = vsel %vm288, %v1007, %v1014
    %v1436 = vsel %vm290, %v1435, %v1021
    %v1437 = vsel %vm292, %v1436, %v1028
    %v1438 = vsel %vm174, %v1437, %v1035
    %v1439 = vsel %vm295, %v1438, %v1042
    %v1440 = vsel %vm297, %v1439, %v1049
    %v1441 = vsel %vm299, %v1440, %v1056
    %v1442 = vsel %vm288, %v1063, %v1070
    %v1443 = vsel %vm290, %v1442, %v1077
    %v1444 = vsel %vm292, %v1443, %v1084
    %v1445 = vsel %vm174, %v1444, %v493
    %v1446 = vsel %vm295, %v1445, %v1091
    %v1447 = vsel %vm297, %v1446, %v500
    %v1448 = vsel %vm299, %v1447, %v507
    %v1449 = vsel %vm288, %v1098, %v514
    %v1450 = vsel %vm290, %v1449, %v521
    %v1451 = vsel %vm292, %v1450, %v1105
    %v1452 = vsel %vm174, %v1451, %v528
    %v1453 = vsel %vm295, %v1452, %v535
    %v1454 = vsel %vm297, %v1453, %v1112
    %v1455 = vsel %vm299, %v1454, %v542
    %v1456 = vsel %vm288, %v549, %v1119
    %v1457 = vsel %vm290, %v1456, %v556
    %v1458 = vsel %vm292, %v1457, %v563
    %v1459 = vsel %vm174, %v1458, %v1126
    %v1460 = vsel %vm295, %v1459, %v570
    %v1461 = vsel %vm297, %v1460, %v577
    %v1462 = vsel %vm299, %v1461, %v1133
    %v1463 = vsel %vm288, %v584, %v591
    %v1464 = vsel %vm290, %v1463, %v1140
    %v1465 = vsel %vm292, %v1464, %v598
    %v1466 = vsel %vm174, %v1465, %v1147
    %v1467 = vsel %vm295, %v1466, %v1154
    %v1468 = vsel %vm297, %v1467, %v1161
    %v1469 = vsel %vm299, %v1468, %v1168
    %v1470 = vsel %vm288, %v1175, %v1182
    %v1471 = vsel %vm290, %v1470, %v1189
    %v1472 = vsel %vm292, %v1471, %v1196
    %v1473 = vsel %vm174, %v1472, %v1203
    %v1474 = vsel %vm295, %v1473, %v1210
    %v1475 = vsel %vm297, %v1474, %v1217
    %v1476 = vsel %vm299, %v1475, %v1224
    %v1477 = vsel %vm288, %v605, %v1231
    %v1478 = vsel %vm290, %v1477, %v612
    %v1479 = vsel %vm292, %v1478, %v619
    %v1480 = vsel %vm174, %v1479, %v1238
    %v1481 = vsel %vm295, %v1480, %v626
    %v1482 = vsel %vm297, %v1481, %v633
    %v1483 = vsel %vm299, %v1482, %v1245
    %v1484 = vsel %vm288, %v640, %v647
    %v1485 = vsel %vm290, %v1484, %v1252
    %v1486 = vsel %vm292, %v1485, %v654
    %v1487 = vsel %vm174, %v1486, %v661
    %v1488 = vsel %vm295, %v1487, %v1259
    %v1489 = vsel %vm297, %v1488, %v668
    %v1490 = vsel %vm299, %v1489, %v675
    %v1491 = vsel %vm288, %v1266, %v682
    %v1492 = vsel %vm290, %v1491, %v689
    %v1493 = vsel %vm292, %v1492, %v1273
    %v1494 = vsel %vm174, %v1493, %v696
    %v1495 = vsel %vm295, %v1494, %v703
    %v1496 = vsel %vm297, %v1495, %v1280
    %v1497 = vsel %vm299, %v1496, %v710
    %v1498 = vsel %vm288, %v1287, %v1294
    %v1499 = vsel %vm290, %v1498, %v1301
    %v1500 = vsel %vm292, %v1499, %v1308
    %v1501 = vsel %vm174, %v1500, %v1315
    %v1502 = vsel %vm295, %v1501, %v1322
    %v1503 = vsel %vm297, %v1502, %v1329
    %v1504 = vsel %vm299, %v1503, %v1336
    %v1505 = vsel %vm288, %v1343, %v1350
    %v1506 = vsel %vm290, %v1505, %v1357
    %v1507 = vsel %vm292, %v1506, %v1364
    %v1508 = vsel %vm174, %v1507, %v717
    %v1509 = vsel %vm295, %v1508, %v1371
    %v1510 = vsel %vm297, %v1509, %v724
    %v1511 = vsel %vm299, %v1510, %v731
    %v1512 = vsel %vm288, %v1378, %v738
    %v1513 = vsel %vm290, %v1512, %v745
    %v1514 = vsel %vm292, %v1513, %v1385
    %v1515 = vsel %vm174, %v1514, %v752
    %v1516 = vsel %vm295, %v1515, %v759
    %v1517 = vsel %vm297, %v1516, %v1392
    %v1518 = vsel %vm299, %v1517, %v766
    %v1521 = vrot.slane %v300, 7
    %v1522 = vrot.slane %v307, 7
    %v1523 = vsel %vm288, %v1521, %v1522
    %v1535 = vrot.slane %v773, 7
    %v1536 = vrot.slane %v780, 7
    %v1537 = vsel %vm288, %v1535, %v1536
    %v1538 = vrot.slane %v787, 7
    %v1539 = vsel %vm288, %v1536, %v1538
    %v1540 = vrot.slane %v794, 7
    %v1541 = vsel %vm288, %v1538, %v1540
    %v1542 = vrot.slane %v801, 7
    %v1543 = vsel %vm288, %v1540, %v1542
    %v1544 = vrot.slane %v808, 7
    %v1545 = vsel %vm288, %v1542, %v1544
    %v1546 = vrot.slane %v815, 7
    %v1547 = vsel %vm288, %v1544, %v1546
    %v1548 = vrot.slane %v822, 7
    %v1549 = vsel %vm288, %v1546, %v1548
    %v1577 = vrot.slane %v1399, 7
    %v1578 = vrot.slane %v1406, 7
    %v1579 = vsel %vm288, %v1577, %v1578
    %v1580 = vrot.slane %v1413, 7
    %v1581 = vsel %vm288, %v1578, %v1580
    %v1582 = vrot.slane %v1420, 7
    %v1583 = vsel %vm288, %v1580, %v1582
    %v1584 = vrot.slane %v1427, 7
    %v1585 = vsel %vm288, %v1582, %v1584
    %v1586 = vrot.slane %v1434, 7
    %v1587 = vsel %vm288, %v1584, %v1586
    %v1588 = vrot.slane %v1441, 7
    %v1589 = vsel %vm288, %v1586, %v1588
    %v1590 = vrot.slane %v1448, 7
    %v1591 = vsel %vm288, %v1588, %v1590
    %v1592 = vrot.slane %v1455, 7
    %v1593 = vsel %vm288, %v1590, %v1592
    %v1594 = vrot.slane %v1462, 7
    %v1595 = vsel %vm288, %v1592, %v1594
    %v1596 = vrot.slane %v1469, 7
    %v1597 = vsel %vm288, %v1594, %v1596
    %v1598 = vrot.slane %v1476, 7
    %v1599 = vsel %vm288, %v1596, %v1598
    %v1600 = vrot.slane %v1483, 7
    %v1601 = vsel %vm288, %v1598, %v1600
    %v1602 = vrot.slane %v1490, 7
    %v1603 = vsel %vm288, %v1600, %v1602
    %v1604 = vrot.slane %v1497, 7
    %v1605 = vsel %vm288, %v1602, %v1604
    %v1606 = vrot.slane %v1504, 7
    %v1607 = vsel %vm288, %v1604, %v1606
    %v1608 = vrot.slane %v1511, 7
    %v1609 = vsel %vm288, %v1606, %v1608
    %v1610 = vrot.slane %v1518, 7
    %v1611 = vsel %vm288, %v1608, %v1610
    %v1631 = vsel %vm288, %v155, %v1521
    %v1632 = vsel %vm288, %v1522, %v1535
    %v1633 = vsel %vm288, %v1548, %v1577
    %1634 = vst [vmem:[#allocation5] sm:$0xff] %v1631
    %1635 = vst [vmem:[#allocation5 + $0x8] sm:$0xff] %v1523
    %1636 = vst [vmem:[#allocation5 + $0x10] sm:$0xff] %v1632
    %1637 = vst [vmem:[#allocation5 + $0x18] sm:$0xff] %v1537
    %1638 = vst [vmem:[#allocation5 + $0x20] sm:$0xff] %v1539
    %1639 = vst [vmem:[#allocation5 + $0x28] sm:$0xff] %v1541
    %1640 = vst [vmem:[#allocation5 + $0x30] sm:$0xff] %v1543
    %1641 = vst [vmem:[#allocation5 + $0x38] sm:$0xff] %v1545
    %1642 = vst [vmem:[#allocation5 + $0x40] sm:$0xff] %v1547
    %1643 = vst [vmem:[#allocation5 + $0x48] sm:$0xff] %v1549
    %1644 = vst [vmem:[#allocation5 + $0x50] sm:$0xff] %v1633
    %1645 = vst [vmem:[#allocation5 + $0x58] sm:$0xff] %v1579
    %1646 = vst [vmem:[#allocation5 + $0x60] sm:$0xff] %v1581
    %1647 = vst [vmem:[#allocation5 + $0x68] sm:$0xff] %v1583
    %1648 = vst [vmem:[#allocation5 + $0x70] sm:$0xff] %v1585
    %1649 = vst [vmem:[#allocation5 + $0x78] sm:$0xff] %v1587
    %1650 = vst [vmem:[#allocation5 + $0x80] sm:$0xff] %v1589
    %1651 = vst [vmem:[#allocation5 + $0x88] sm:$0xff] %v1591
    %1652 = vst [vmem:[#allocation5 + $0x90] sm:$0xff] %v1593
    %1653 = vst [vmem:[#allocation5 + $0x98] sm:$0xff] %v1595
    %1654 = vst [vmem:[#allocation5 + $0xa0] sm:$0xff] %v1597
    %1655 = vst [vmem:[#allocation5 + $0xa8] sm:$0xff] %v1599
    %1656 = vst [vmem:[#allocation5 + $0xb0] sm:$0xff] %v1601
    %1657 = vst [vmem:[#allocation5 + $0xb8] sm:$0xff] %v1603
    %1658 = vst [vmem:[#allocation5 + $0xc0] sm:$0xff] %v1605
    %1659 = vst [vmem:[#allocation5 + $0xc8] sm:$0xff] %v1607
    %1660 = vst [vmem:[#allocation5 + $0xd0] sm:$0xff] %v1609
    %1661 = vst [vmem:[#allocation5 + $0xd8] sm:$0xff] %v1611
    %1662 = vst [vmem:[#allocation5 + $0xe0] sm:$0x1] %v1610
    // Predicated region
    $region10: #{tpu_custom_call.1} parent=1 // pred_check
      _
    $region11: #{tpu_custom_call.1} parent=1 // pred_check_branch
      %1664 = sbr.rel (0) target = $region13
    $region12: #{tpu_custom_call.1} parent=1 // pred_region
      %s1666 = ssub.s32 3712, 3712
      %1667 = vsyncadd [#allocation4], %s1666
      %s1668 = sshll.u32 [#allocation5], 4
      %s1669 = int_to_ptr.vmem [resolvable:$true] %s1668
      %1674 = dma.vmem_to_hbm [thread:$0]  %s1669, 3712, %s1, [#allocation4], 128, 128, 8
    $region13: #{tpu_custom_call.1} parent=1 // pred_fallthru
      _
    // Predicated region
    $region14: #{tpu_custom_call.1} parent=1 // pred_check
      _
    $region15: #{tpu_custom_call.1} parent=1 // pred_check_branch
      %1676 = sbr.rel (0) target = $region17
    $region16: #{tpu_custom_call.1} parent=1 // pred_region
      %1677 = dma.done [#allocation4], 3712
    $region17: #{tpu_custom_call.1} parent=1 // pred_fallthru
      _
    %1678 = vsyncpa [#allocation3], 1
    %1679 = vsyncpa [#allocation4], 1

</llo_original>
